<compile_context>
chip_gen: v7x
topology: tpu7x:2x2x1
jax: 0.10.0
libtpu: 0.0.40
codegen_flags: <defaults>
</compile_context>

<pallas_src>
import functools

import jax
import jax.numpy as jnp
from jax.experimental import pallas as pl
from jax.experimental.pallas import tpu as pltpu

_LANE = 128
_SUBLANE = 8
# 8192 x 128 = 4 MiB per f32 input tile (2 MiB bf16); 2 inputs x 2 pipeline
# buffers + elementwise temporaries stay well under the 40 MiB scoped-VMEM
# limit we request below (v7x physical VMEM is only 64 MiB, so we deliberately
# do not chase even bigger bf16 tiles).
_DEFAULT_BLOCK_ROWS = 8192
# Above v5e's 16 MiB / v6e+v7x's 32 MiB defaults, comfortably below v7x's
# 64 MiB physical VMEM (v5e/v6e have 128 MiB physical).
_VMEM_LIMIT_BYTES = 40 << 20


def _rmse_partial_kernel(yhat_ref, y_ref, out_ref, *, rows, block_rows,
                         blocks_per_split, nblk, grid_blocks):
    """Accumulate sum((yhat - y)^2) for this split's row range into out_ref (8,128)."""
    s = pl.program_id(0)                 # split: "parallel" (sharded across TCs on megacore)
    i = pl.program_id(1)                 # block within split: sequential reduction axis
    blk = s * blocks_per_split + i       # global row-block index

    @pl.when(i == 0)
    def _init():
        out_ref[...] = jnp.zeros_like(out_ref)

    # Upcast on the VPU; HBM traffic stays in the input dtype.
    d = yhat_ref[...].astype(jnp.float32) - y_ref[...].astype(jnp.float32)

    def _accum(x):
        sq = x * x
        # Fold the (block_rows, 128) square into a single-vreg (8, 128) partial
        # sum: same number of VALU adds as a block-shaped accumulator, but the
        # only VMEM read-modify-write is one vreg per step.
        out_ref[...] += jnp.sum(
            sq.reshape(block_rows // _SUBLANE, _SUBLANE, _LANE), axis=0)

    tail_rows = rows - (nblk - 1) * block_rows   # valid rows in the last real block (static)
    has_tail = tail_rows != block_rows           # static python bool
    has_phantom = grid_blocks > nblk             # static python bool

    if not has_tail and not has_phantom:
        # Steady state for every block: no masks, no branches.
        _accum(d)
    elif not has_tail:
        @pl.when(blk < nblk)                     # only phantom blocks are skipped
        def _steady():
            _accum(d)
    else:
        @pl.when(blk < nblk - 1)                 # full blocks: unmasked
        def _steady():
            _accum(d)

        @pl.when(blk == nblk - 1)                # last (partial) block: row mask only here
        def _last():
            r = jax.lax.broadcasted_iota(jnp.int32, d.shape, 0)
            _accum(jnp.where(r < tail_rows, d, 0.0))
        # blk > nblk - 1 (phantom block of the last split): skipped entirely.


def rmse_loss(yhat, y, *, block_rows=_DEFAULT_BLOCK_ROWS, num_splits=2):
    """sqrt(mean((yhat - y)^2)) — matches torch.sqrt(nn.MSELoss()(yhat, y))."""
    assert yhat.shape == y.shape, "RMSELoss expects matching shapes"
    n = yhat.size

    yf = jnp.ravel(yhat)
    xf = jnp.ravel(y)

    n_main = (n // _LANE) * _LANE
    rows = n_main // _LANE

    if rows == 0:
        # Fewer than 128 elements (e.g. a (batch, 1) RUL batch): a kernel
        # launch is pure overhead, compute directly.
        d = yf.astype(jnp.float32) - xf.astype(jnp.float32)
        return jnp.sqrt(jnp.sum(d * d) / jnp.float32(n))

    # The <128-element lane tail is folded in with plain jnp so the kernel
    # never needs a column mask.
    tail_sum = jnp.float32(0.0)
    if n_main != n:
        dt = yf[n_main:].astype(jnp.float32) - xf[n_main:].astype(jnp.float32)
        tail_sum = jnp.sum(dt * dt)
        # TODO(synk): this prefix slice still materializes a copy when
        # n % 128 != 0; avoiding it entirely would need manual 1-D DMA on the
        # raw flat array (memory_space=pl.ANY). 128-aligned inputs are zero-copy.
        yf = yf[:n_main]
        xf = xf[:n_main]

    ym = yf.reshape(rows, _LANE)
    xm = xf.reshape(rows, _LANE)

    # Dtype-aware sublane packing: 8 rows/vreg f32, 16 bf16/f16, 32 int8/fp8.
    itemsize = jnp.dtype(yhat.dtype).itemsize
    pack = _SUBLANE * max(1, 4 // itemsize)
    block_rows = max(pack, (block_rows // pack) * pack)
    # Small inputs: a single (possibly partial) block spanning all rows.
    block_rows = min(block_rows, pl.cdiv(rows, pack) * pack)

    nblk = pl.cdiv(rows, block_rows)
    splits = num_splits if (num_splits > 1 and nblk >= num_splits) else 1
    bps = pl.cdiv(nblk, splits)
    grid_blocks = splits * bps

    if grid_blocks > nblk:
        def row_block(s, i):
            # Clamp the last split's phantom block onto the last real block so
            # the DMA stays in-bounds; the kernel skips accumulating it.
            return (jnp.minimum(s * bps + i, nblk - 1), 0)
    else:
        def row_block(s, i):
            return (s * bps + i, 0)

    partials = pl.pallas_call(
        functools.partial(_rmse_partial_kernel, rows=rows, block_rows=block_rows,
                          blocks_per_split=bps, nblk=nblk, grid_blocks=grid_blocks),
        out_shape=jax.ShapeDtypeStruct((splits * _SUBLANE, _LANE), jnp.float32),
        grid_spec=pltpu.PrefetchScalarGridSpec(
            num_scalar_prefetch=0,
            grid=(splits, bps),
            in_specs=[
                pl.BlockSpec((block_rows, _LANE), row_block),
                pl.BlockSpec((block_rows, _LANE), row_block),
            ],
            # Lane-dense (8, 128) per-split partial sums; the output block IS
            # the accumulator (index_map independent of the reduction axis i).
            out_specs=pl.BlockSpec((_SUBLANE, _LANE), lambda s, i: (s, 0)),
        ),
        compiler_params=pltpu.CompilerParams(
            dimension_semantics=("parallel", "arbitrary"),
            vmem_limit_bytes=_VMEM_LIMIT_BYTES,
        ),
    )(ym, xm)

    total = jnp.sum(partials) + tail_sum
    return jnp.sqrt(total / jnp.float32(n))


if __name__ == "__main__":
    key = jax.random.PRNGKey(0)

    def _ref(yhat, y):
        d = yhat.astype(jnp.float32) - y.astype(jnp.float32)
        return jnp.sqrt(jnp.mean(d * d))

    def _check(shape, dtype, k, **kw):
        k1, k2 = jax.random.split(k)
        yhat = (jax.random.normal(k1, shape, dtype=jnp.float32) * 10.0 + 100.0).astype(dtype)
        y = (jax.random.normal(k2, shape, dtype=jnp.float32) * 10.0 + 100.0).astype(dtype)
        loss = rmse_loss(yhat, y, **kw)
        jax.block_until_ready(loss)
        ref = _ref(yhat, y)
        assert jnp.allclose(loss, ref, rtol=1e-4, atol=1e-4), (shape, dtype, float(loss), float(ref))

    ks = jax.random.split(key, 5)
    # Typical RUL-prediction usage: (batch, 1) predictions vs targets (tiny -> direct path).
    _check((50, 1), jnp.float32, ks[0])
    # Unaligned f32: kernel on the 128-aligned prefix (partial last block), tail in wrapper.
    _check((600, 513), jnp.float32, ks[1])
    # bf16 inputs: in-kernel upcast, 16-row sublane packing.
    _check((37, 200), jnp.bfloat16, ks[2])
    # Multi-block + 2-way split path (small forced block to exercise the parallel axis).
    _check((256, 512), jnp.float32, ks[3], block_rows=128)
    # Odd block count -> one phantom block on the second split (clamped + skipped)
    # plus a partial last block (row mask under pl.when).
    _check((257, 512), jnp.float32, ks[4], block_rows=128)

    print("KERNEL_OK")
</pallas_src>

<mosaic_0001>
module attributes {stable_mosaic.version = 11 : i64} {
  func.func @_rmse_partial_kernel(%arg0: i32, %arg1: i32, %arg2: memref<2408x128xf32, #tpu.memory_space<vmem>>, %arg3: memref<2408x128xf32, #tpu.memory_space<vmem>>, %arg4: memref<8x128xf32, #tpu.memory_space<vmem>>) attributes {dimension_semantics = [#tpu.dimension_semantics<parallel>, #tpu.dimension_semantics<arbitrary>], iteration_bounds = array<i64: 1, 1>, scalar_prefetch = 0 : i64, scratch_operands = 0 : i64, tpu.core_type = #tpu.core_type<tc>, window_params = [{transform_indices = @transform_0, window_bounds = array<i64: 2408, 128>}, {transform_indices = @transform_1, window_bounds = array<i64: 2408, 128>}, {transform_indices = @transform_2, window_bounds = array<i64: 8, 128>}]} {
    %c1_i32 = arith.constant 1 : i32
    %0 = arith.muli %arg0, %c1_i32 : i32
    %1 = arith.addi %0, %arg1 : i32
    %c0_i32 = arith.constant 0 : i32
    %2 = arith.cmpi eq, %arg1, %c0_i32 : i32
    %3 = arith.extui %2 : i1 to i32
    %c0_i32_0 = arith.constant 0 : i32
    %4 = arith.cmpi ne, %3, %c0_i32_0 : i32
    scf.if %4 {
      %cst = arith.constant 0.000000e+00 : f32
      %14 = vector.broadcast %cst : f32 to vector<8x128xf32>
      %c0_8 = arith.constant 0 : index
      %c0_9 = arith.constant 0 : index
      %15 = vector.load %arg4[%c0_8, %c0_9] : memref<8x128xf32, #tpu.memory_space<vmem>>, vector<8x128xf32>
      tpu.vector_store %arg4[%c0_8, %c0_9], %14 {strides = array<i32>} : memref<8x128xf32, #tpu.memory_space<vmem>>, vector<8x128xf32>,
    } else {
    }
    %c0 = arith.constant 0 : index
    %c0_1 = arith.constant 0 : index
    %5 = vector.load %arg2[%c0, %c0_1] : memref<2408x128xf32, #tpu.memory_space<vmem>>, vector<2408x128xf32>
    %c0_2 = arith.constant 0 : index
    %c0_3 = arith.constant 0 : index
    %6 = vector.load %arg3[%c0_2, %c0_3] : memref<2408x128xf32, #tpu.memory_space<vmem>>, vector<2408x128xf32>
    %7 = arith.subf %5, %6 : vector<2408x128xf32>
    %c0_i32_4 = arith.constant 0 : i32
    %8 = arith.cmpi slt, %1, %c0_i32_4 : i32
    %9 = arith.extui %8 : i1 to i32
    %c0_i32_5 = arith.constant 0 : i32
    %10 = arith.cmpi ne, %9, %c0_i32_5 : i32
    scf.if %10 {
      %14 = arith.mulf %7, %7 : vector<2408x128xf32>
      %c0_8 = arith.constant 0 : index
      %c0_9 = arith.constant 0 : index
      %15 = vector.load %arg4[%c0_8, %c0_9] : memref<8x128xf32, #tpu.memory_space<vmem>>, vector<8x128xf32>
      %16 = vector.shape_cast %14 : vector<2408x128xf32> to vector<301x8x128xf32>
      %cst = arith.constant dense<0.000000e+00> : vector<8x128xf32>
      %17 = vector.multi_reduction <add>, %16, %cst [0] : vector<301x8x128xf32> to vector<8x128xf32>
      %18 = arith.addf %15, %17 : vector<8x128xf32>
      %c0_10 = arith.constant 0 : index
      %c0_11 = arith.constant 0 : index
      %19 = vector.load %arg4[%c0_10, %c0_11] : memref<8x128xf32, #tpu.memory_space<vmem>>, vector<8x128xf32>
      tpu.vector_store %arg4[%c0_10, %c0_11], %18 {strides = array<i32>} : memref<8x128xf32, #tpu.memory_space<vmem>>, vector<8x128xf32>,
    } else {
    }
    %c0_i32_6 = arith.constant 0 : i32
    %11 = arith.cmpi eq, %1, %c0_i32_6 : i32
    %12 = arith.extui %11 : i1 to i32
    %c0_i32_7 = arith.constant 0 : i32
    %13 = arith.cmpi ne, %12, %c0_i32_7 : i32
    scf.if %13 {
      %14 = tpu.iota {dimensions = array<i32: 0>} : vector<2408x128xi32>
      %c2404_i32 = arith.constant 2404 : i32
      %15 = vector.broadcast %c2404_i32 : i32 to vector<2408x128xi32>
      %16 = arith.cmpi slt, %14, %15 : vector<2408x128xi32>
      %cst = arith.constant 0.000000e+00 : f32
      %17 = vector.broadcast %cst : f32 to vector<2408x128xf32>
      %18 = arith.select %16, %7, %17 : vector<2408x128xi1>, vector<2408x128xf32>
      %19 = arith.mulf %18, %18 : vector<2408x128xf32>
      %c0_8 = arith.constant 0 : index
      %c0_9 = arith.constant 0 : index
      %20 = vector.load %arg4[%c0_8, %c0_9] : memref<8x128xf32, #tpu.memory_space<vmem>>, vector<8x128xf32>
      %21 = vector.shape_cast %19 : vector<2408x128xf32> to vector<301x8x128xf32>
      %cst_10 = arith.constant dense<0.000000e+00> : vector<8x128xf32>
      %22 = vector.multi_reduction <add>, %21, %cst_10 [0] : vector<301x8x128xf32> to vector<8x128xf32>
      %23 = arith.addf %20, %22 : vector<8x128xf32>
      %c0_11 = arith.constant 0 : index
      %c0_12 = arith.constant 0 : index
      %24 = vector.load %arg4[%c0_11, %c0_12] : memref<8x128xf32, #tpu.memory_space<vmem>>, vector<8x128xf32>
      tpu.vector_store %arg4[%c0_11, %c0_12], %23 {strides = array<i32>} : memref<8x128xf32, #tpu.memory_space<vmem>>, vector<8x128xf32>,
    } else {
    }
    return
  }
  func.func @transform_0(%arg0: i32, %arg1: i32) -> (i32, i32) {
    %c1_i32 = arith.constant 1 : i32
    %0 = arith.muli %arg0, %c1_i32 : i32
    %1 = arith.addi %0, %arg1 : i32
    %c0_i32 = arith.constant 0 : i32
    %c0_i32_0 = arith.constant 0 : i32
    return %1, %c0_i32 : i32, i32
  }
  func.func @transform_1(%arg0: i32, %arg1: i32) -> (i32, i32) {
    %c1_i32 = arith.constant 1 : i32
    %0 = arith.muli %arg0, %c1_i32 : i32
    %1 = arith.addi %0, %arg1 : i32
    %c0_i32 = arith.constant 0 : i32
    %c0_i32_0 = arith.constant 0 : i32
    return %1, %c0_i32 : i32, i32
  }
  func.func @transform_2(%arg0: i32, %arg1: i32) -> (i32, i32) {
    %c0_i32 = arith.constant 0 : i32
    %c0_i32_0 = arith.constant 0 : i32
    return %arg0, %c0_i32 : i32, i32
  }
}

</mosaic_0001>

<llo_original>
// kernel: tpu_custom_call.1
$region0: #{tpu_custom_call.1}
  #allocation0 [shape = 'u32[]', space=smem, size = 0x4, offset = 0x4, fixed_abs, tag = 'smem constant byte address 0x4 - core index']
  #allocation1 [shape = 'u32[144,128]{1,0:T(1,128)}', space=vmem, size = 0x12000, scoped, tag = 'internal scratch']
  %s0 = inlined_call_operand.hbm [shape: f32[2404,128], index: 0, kind: input, shape index: {}]
  %s1 = inlined_call_operand.hbm [shape: f32[2404,128], index: 1, kind: input, shape index: {}]
  %s2 = inlined_call_operand.hbm [shape: f32[8,128], index: 2, kind: output, shape index: {}]
  %s3 = sld [smem:[#allocation0]]
  $region38: #{tpu_custom_call.1} parent=0
    _
  %s5 = ssub.s32 1, %s3
  %s6 = scalar_select 0, %s5, %s3
  $region1: #{tpu_custom_call.1} parent=0
    #allocation2 [shape = 'u8[1232896]{0}', space=vmem, size = 0x12d000, scoped, tag = 'input window, operand 0, single buffered']
    #allocation3 [shape = 's32[1]{0}', space=sflag, size = 0x4, scoped, tag = 'scoped memory for tpu_custom_call.1']
    #allocation4 [shape = 's32[1]{0}', space=sflag, size = 0x4, scoped, tag = 'scoped memory for tpu_custom_call.1']
    #allocation5 [shape = 'u8[1232896]{0}', space=vmem, size = 0x12d000, scoped, tag = 'input window, operand 1, single buffered']
    #allocation6 [shape = 's32[1]{0}', space=sflag, size = 0x4, scoped, tag = 'scoped memory for tpu_custom_call.1']
    #allocation7 [shape = 'u8[4096]{0}', space=vmem, size = 0x1000, scoped, tag = 'output window, operand 0, single buffered']
    %7 = vsyncpa [#allocation3], 0
    %8 = vsyncpa [#allocation6], 0
    %9 = vsyncpa [#allocation4], 0
    // Predicated region
    $region2: #{tpu_custom_call.1} parent=1 // pred_check
      _
    $region3: #{tpu_custom_call.1} parent=1 // pred_check_branch
      %11 = sbr.rel (0) target = $region5
    $region4: #{tpu_custom_call.1} parent=1 // pred_region
      %s12 = sadd.s32 0, 0
      %s13 = smul.u32 301, %s12
      %s15 = ssub.s32 38528, 38528
      %16 = vsyncadd [#allocation3], %s15
      %s17 = smul.addr %s13, 128
      %s18 = scalar_lea.hbm %s0, %s17
      %s19 = sshll.u32 [#allocation2], 4
      %s20 = int_to_ptr.vmem [resolvable:$true] %s19
      %25 = dma.hbm_to_vmem [thread:$0]  %s18, 38528, %s20, [#allocation3], 128, 128, 8
    $region5: #{tpu_custom_call.1} parent=1 // pred_fallthru
      _
    // Predicated region
    $region6: #{tpu_custom_call.1} parent=1 // pred_check
      _
    $region7: #{tpu_custom_call.1} parent=1 // pred_check_branch
      %27 = sbr.rel (0) target = $region9
    $region8: #{tpu_custom_call.1} parent=1 // pred_region
      %s28 = sadd.s32 0, 0
      %s29 = smul.u32 301, %s28
      %s31 = ssub.s32 38528, 38528
      %32 = vsyncadd [#allocation6], %s31
      %s33 = smul.addr %s29, 128
      %s34 = scalar_lea.hbm %s1, %s33
      %s35 = sshll.u32 [#allocation5], 4
      %s36 = int_to_ptr.vmem [resolvable:$true] %s35
      %41 = dma.hbm_to_vmem [thread:$0]  %s34, 38528, %s36, [#allocation6], 128, 128, 8
    $region9: #{tpu_custom_call.1} parent=1 // pred_fallthru
      _
    // Predicated region
    $region10: #{tpu_custom_call.1} parent=1 // pred_check
      _
    $region11: #{tpu_custom_call.1} parent=1 // pred_check_branch
      %43 = sbr.rel (0) target = $region13
    $region12: #{tpu_custom_call.1} parent=1 // pred_region
      %44 = dma.done [#allocation3], 38528
    $region13: #{tpu_custom_call.1} parent=1 // pred_fallthru
      _
    // Predicated region
    $region14: #{tpu_custom_call.1} parent=1 // pred_check
      _
    $region15: #{tpu_custom_call.1} parent=1 // pred_check_branch
      %46 = sbr.rel (0) target = $region17
    $region16: #{tpu_custom_call.1} parent=1 // pred_region
      %47 = dma.done [#allocation6], 38528
    $region17: #{tpu_custom_call.1} parent=1 // pred_fallthru
      _
    %s48 = sadd.s32 0, 0
    %s49 = smul.u32 301, %s48
    %s50 = sadd.s32 0, 0
    %s51 = smul.u32 301, %s50
    %s52 = sadd.s32 0, 0
    %p53 = scmp.eq.s32.totalorder 0, 0
    // Predicated region
    $region18: #{tpu_custom_call.1} parent=1 // pred_check
      %p54 = pneg %p53
    $region19: #{tpu_custom_call.1} parent=1 // pred_check_branch
      %56 = sbr.rel (%p54) target = $region21
    $region20: #{tpu_custom_call.1} parent=1 // pred_region
      %57 = vst [vmem:[#allocation7] sm:$0xff] 0.0
    $region21: #{tpu_custom_call.1} parent=1 // pred_fallthru
      _
    %v58 = vld [vmem:[#allocation2] sm:$0xff]
    %v59 = vld [vmem:[#allocation2 + $0x8] sm:$0xff]
    %v60 = vld [vmem:[#allocation2 + $0x10] sm:$0xff]
    %v61 = vld [vmem:[#allocation2 + $0x18] sm:$0xff]
    %v62 = vld [vmem:[#allocation2 + $0x20] sm:$0xff]
    %v63 = vld [vmem:[#allocation2 + $0x28] sm:$0xff]
    %v64 = vld [vmem:[#allocation2 + $0x30] sm:$0xff]
    %v65 = vld [vmem:[#allocation2 + $0x38] sm:$0xff]
    %v66 = vld [vmem:[#allocation2 + $0x40] sm:$0xff]
    %v67 = vld [vmem:[#allocation2 + $0x48] sm:$0xff]
    %v68 = vld [vmem:[#allocation2 + $0x50] sm:$0xff]
    %v69 = vld [vmem:[#allocation2 + $0x58] sm:$0xff]
    %v70 = vld [vmem:[#allocation2 + $0x60] sm:$0xff]
    %v71 = vld [vmem:[#allocation2 + $0x68] sm:$0xff]
    %v72 = vld [vmem:[#allocation2 + $0x70] sm:$0xff]
    %v73 = vld [vmem:[#allocation2 + $0x78] sm:$0xff]
    %v74 = vld [vmem:[#allocation2 + $0x80] sm:$0xff]
    %v75 = vld [vmem:[#allocation2 + $0x88] sm:$0xff]
    %v76 = vld [vmem:[#allocation2 + $0x90] sm:$0xff]
    %v77 = vld [vmem:[#allocation2 + $0x98] sm:$0xff]
    %v78 = vld [vmem:[#allocation2 + $0xa0] sm:$0xff]
    %v79 = vld [vmem:[#allocation2 + $0xa8] sm:$0xff]
    %v80 = vld [vmem:[#allocation2 + $0xb0] sm:$0xff]
    %v81 = vld [vmem:[#allocation2 + $0xb8] sm:$0xff]
    %v82 = vld [vmem:[#allocation2 + $0xc0] sm:$0xff]
    %v83 = vld [vmem:[#allocation2 + $0xc8] sm:$0xff]
    %v84 = vld [vmem:[#allocation2 + $0xd0] sm:$0xff]
    %v85 = vld [vmem:[#allocation2 + $0xd8] sm:$0xff]
    %v86 = vld [vmem:[#allocation2 + $0xe0] sm:$0xff]
    %v87 = vld [vmem:[#allocation2 + $0xe8] sm:$0xff]
    %v88 = vld [vmem:[#allocation2 + $0xf0] sm:$0xff]
    %v89 = vld [vmem:[#allocation2 + $0xf8] sm:$0xff]
    %v90 = vld [vmem:[#allocation2 + $0x100] sm:$0xff]
    %v91 = vld [vmem:[#allocation2 + $0x108] sm:$0xff]
    %v92 = vld [vmem:[#allocation2 + $0x110] sm:$0xff]
    %v93 = vld [vmem:[#allocation2 + $0x118] sm:$0xff]
    %v94 = vld [vmem:[#allocation2 + $0x120] sm:$0xff]
    %v95 = vld [vmem:[#allocation2 + $0x128] sm:$0xff]
    %v96 = vld [vmem:[#allocation2 + $0x130] sm:$0xff]
    %v97 = vld [vmem:[#allocation2 + $0x138] sm:$0xff]
    %v98 = vld [vmem:[#allocation2 + $0x140] sm:$0xff]
    %v99 = vld [vmem:[#allocation2 + $0x148] sm:$0xff]
    %v100 = vld [vmem:[#allocation2 + $0x150] sm:$0xff]
    %v101 = vld [vmem:[#allocation2 + $0x158] sm:$0xff]
    %v102 = vld [vmem:[#allocation2 + $0x160] sm:$0xff]
    %v103 = vld [vmem:[#allocation2 + $0x168] sm:$0xff]
    %v104 = vld [vmem:[#allocation2 + $0x170] sm:$0xff]
    %v105 = vld [vmem:[#allocation2 + $0x178] sm:$0xff]
    %v106 = vld [vmem:[#allocation2 + $0x180] sm:$0xff]
    %v107 = vld [vmem:[#allocation2 + $0x188] sm:$0xff]
    %v108 = vld [vmem:[#allocation2 + $0x190] sm:$0xff]
    %v109 = vld [vmem:[#allocation2 + $0x198] sm:$0xff]
    %v110 = vld [vmem:[#allocation2 + $0x1a0] sm:$0xff]
    %v111 = vld [vmem:[#allocation2 + $0x1a8] sm:$0xff]
    %v112 = vld [vmem:[#allocation2 + $0x1b0] sm:$0xff]
    %v113 = vld [vmem:[#allocation2 + $0x1b8] sm:$0xff]
    %v114 = vld [vmem:[#allocation2 + $0x1c0] sm:$0xff]
    %v115 = vld [vmem:[#allocation2 + $0x1c8] sm:$0xff]
    %v116 = vld [vmem:[#allocation2 + $0x1d0] sm:$0xff]
    %v117 = vld [vmem:[#allocation2 + $0x1d8] sm:$0xff]
    %v118 = vld [vmem:[#allocation2 + $0x1e0] sm:$0xff]
    %v119 = vld [vmem:[#allocation2 + $0x1e8] sm:$0xff]
    %v120 = vld [vmem:[#allocation2 + $0x1f0] sm:$0xff]
    %v121 = vld [vmem:[#allocation2 + $0x1f8] sm:$0xff]
    %v122 = vld [vmem:[#allocation2 + $0x200] sm:$0xff]
    %v123 = vld [vmem:[#allocation2 + $0x208] sm:$0xff]
    %v124 = vld [vmem:[#allocation2 + $0x210] sm:$0xff]
    %v125 = vld [vmem:[#allocation2 + $0x218] sm:$0xff]
    %v126 = vld [vmem:[#allocation2 + $0x220] sm:$0xff]
    %v127 = vld [vmem:[#allocation2 + $0x228] sm:$0xff]
    %v128 = vld [vmem:[#allocation2 + $0x230] sm:$0xff]
    %v129 = vld [vmem:[#allocation2 + $0x238] sm:$0xff]
    %v130 = vld [vmem:[#allocation2 + $0x240] sm:$0xff]
    %v131 = vld [vmem:[#allocation2 + $0x248] sm:$0xff]
    %v132 = vld [vmem:[#allocation2 + $0x250] sm:$0xff]
    %v133 = vld [vmem:[#allocation2 + $0x258] sm:$0xff]
    %v134 = vld [vmem:[#allocation2 + $0x260] sm:$0xff]
    %v135 = vld [vmem:[#allocation2 + $0x268] sm:$0xff]
    %v136 = vld [vmem:[#allocation2 + $0x270] sm:$0xff]
    %v137 = vld [vmem:[#allocation2 + $0x278] sm:$0xff]
    %v138 = vld [vmem:[#allocation2 + $0x280] sm:$0xff]
    %v139 = vld [vmem:[#allocation2 + $0x288] sm:$0xff]
    %v140 = vld [vmem:[#allocation2 + $0x290] sm:$0xff]
    %v141 = vld [vmem:[#allocation2 + $0x298] sm:$0xff]
    %v142 = vld [vmem:[#allocation2 + $0x2a0] sm:$0xff]
    %v143 = vld [vmem:[#allocation2 + $0x2a8] sm:$0xff]
    %v144 = vld [vmem:[#allocation2 + $0x2b0] sm:$0xff]
    %v145 = vld [vmem:[#allocation2 + $0x2b8] sm:$0xff]
    %v146 = vld [vmem:[#allocation2 + $0x2c0] sm:$0xff]
    %v147 = vld [vmem:[#allocation2 + $0x2c8] sm:$0xff]
    %v148 = vld [vmem:[#allocation2 + $0x2d0] sm:$0xff]
    %v149 = vld [vmem:[#allocation2 + $0x2d8] sm:$0xff]
    %v150 = vld [vmem:[#allocation2 + $0x2e0] sm:$0xff]
    %v151 = vld [vmem:[#allocation2 + $0x2e8] sm:$0xff]
    %v152 = vld [vmem:[#allocation2 + $0x2f0] sm:$0xff]
    %v153 = vld [vmem:[#allocation2 + $0x2f8] sm:$0xff]
    %v154 = vld [vmem:[#allocation2 + $0x300] sm:$0xff]
    %v155 = vld [vmem:[#allocation2 + $0x308] sm:$0xff]
    %v156 = vld [vmem:[#allocation2 + $0x310] sm:$0xff]
    %v157 = vld [vmem:[#allocation2 + $0x318] sm:$0xff]
    %v158 = vld [vmem:[#allocation2 + $0x320] sm:$0xff]
    %v159 = vld [vmem:[#allocation2 + $0x328] sm:$0xff]
    %v160 = vld [vmem:[#allocation2 + $0x330] sm:$0xff]
    %v161 = vld [vmem:[#allocation2 + $0x338] sm:$0xff]
    %v162 = vld [vmem:[#allocation2 + $0x340] sm:$0xff]
    %v163 = vld [vmem:[#allocation2 + $0x348] sm:$0xff]
    %v164 = vld [vmem:[#allocation2 + $0x350] sm:$0xff]
    %v165 = vld [vmem:[#allocation2 + $0x358] sm:$0xff]
    %v166 = vld [vmem:[#allocation2 + $0x360] sm:$0xff]
    %v167 = vld [vmem:[#allocation2 + $0x368] sm:$0xff]
    %v168 = vld [vmem:[#allocation2 + $0x370] sm:$0xff]
    %v169 = vld [vmem:[#allocation2 + $0x378] sm:$0xff]
    %v170 = vld [vmem:[#allocation2 + $0x380] sm:$0xff]
    %v171 = vld [vmem:[#allocation2 + $0x388] sm:$0xff]
    %v172 = vld [vmem:[#allocation2 + $0x390] sm:$0xff]
    %v173 = vld [vmem:[#allocation2 + $0x398] sm:$0xff]
    %v174 = vld [vmem:[#allocation2 + $0x3a0] sm:$0xff]
    %v175 = vld [vmem:[#allocation2 + $0x3a8] sm:$0xff]
    %v176 = vld [vmem:[#allocation2 + $0x3b0] sm:$0xff]
    %v177 = vld [vmem:[#allocation2 + $0x3b8] sm:$0xff]
    %v178 = vld [vmem:[#allocation2 + $0x3c0] sm:$0xff]
    %v179 = vld [vmem:[#allocation2 + $0x3c8] sm:$0xff]
    %v180 = vld [vmem:[#allocation2 + $0x3d0] sm:$0xff]
    %v181 = vld [vmem:[#allocation2 + $0x3d8] sm:$0xff]
    %v182 = vld [vmem:[#allocation2 + $0x3e0] sm:$0xff]
    %v183 = vld [vmem:[#allocation2 + $0x3e8] sm:$0xff]
    %v184 = vld [vmem:[#allocation2 + $0x3f0] sm:$0xff]
    %v185 = vld [vmem:[#allocation2 + $0x3f8] sm:$0xff]
    %v186 = vld [vmem:[#allocation2 + $0x400] sm:$0xff]
    %v187 = vld [vmem:[#allocation2 + $0x408] sm:$0xff]
    %v188 = vld [vmem:[#allocation2 + $0x410] sm:$0xff]
    %v189 = vld [vmem:[#allocation2 + $0x418] sm:$0xff]
    %v190 = vld [vmem:[#allocation2 + $0x420] sm:$0xff]
    %v191 = vld [vmem:[#allocation2 + $0x428] sm:$0xff]
    %v192 = vld [vmem:[#allocation2 + $0x430] sm:$0xff]
    %v193 = vld [vmem:[#allocation2 + $0x438] sm:$0xff]
    %v194 = vld [vmem:[#allocation2 + $0x440] sm:$0xff]
    %v195 = vld [vmem:[#allocation2 + $0x448] sm:$0xff]
    %v196 = vld [vmem:[#allocation2 + $0x450] sm:$0xff]
    %v197 = vld [vmem:[#allocation2 + $0x458] sm:$0xff]
    %v198 = vld [vmem:[#allocation2 + $0x460] sm:$0xff]
    %v199 = vld [vmem:[#allocation2 + $0x468] sm:$0xff]
    %v200 = vld [vmem:[#allocation2 + $0x470] sm:$0xff]
    %v201 = vld [vmem:[#allocation2 + $0x478] sm:$0xff]
    %v202 = vld [vmem:[#allocation2 + $0x480] sm:$0xff]
    %v203 = vld [vmem:[#allocation2 + $0x488] sm:$0xff]
    %v204 = vld [vmem:[#allocation2 + $0x490] sm:$0xff]
    %v205 = vld [vmem:[#allocation2 + $0x498] sm:$0xff]
    %v206 = vld [vmem:[#allocation2 + $0x4a0] sm:$0xff]
    %v207 = vld [vmem:[#allocation2 + $0x4a8] sm:$0xff]
    %v208 = vld [vmem:[#allocation2 + $0x4b0] sm:$0xff]
    %v209 = vld [vmem:[#allocation2 + $0x4b8] sm:$0xff]
    %v210 = vld [vmem:[#allocation2 + $0x4c0] sm:$0xff]
    %v211 = vld [vmem:[#allocation2 + $0x4c8] sm:$0xff]
    %v212 = vld [vmem:[#allocation2 + $0x4d0] sm:$0xff]
    %v213 = vld [vmem:[#allocation2 + $0x4d8] sm:$0xff]
    %v214 = vld [vmem:[#allocation2 + $0x4e0] sm:$0xff]
    %v215 = vld [vmem:[#allocation2 + $0x4e8] sm:$0xff]
    %v216 = vld [vmem:[#allocation2 + $0x4f0] sm:$0xff]
    %v217 = vld [vmem:[#allocation2 + $0x4f8] sm:$0xff]
    %v218 = vld [vmem:[#allocation2 + $0x500] sm:$0xff]
    %v219 = vld [vmem:[#allocation2 + $0x508] sm:$0xff]
    %v220 = vld [vmem:[#allocation2 + $0x510] sm:$0xff]
    %v221 = vld [vmem:[#allocation2 + $0x518] sm:$0xff]
    %v222 = vld [vmem:[#allocation2 + $0x520] sm:$0xff]
    %v223 = vld [vmem:[#allocation2 + $0x528] sm:$0xff]
    %v224 = vld [vmem:[#allocation2 + $0x530] sm:$0xff]
    %v225 = vld [vmem:[#allocation2 + $0x538] sm:$0xff]
    %v226 = vld [vmem:[#allocation2 + $0x540] sm:$0xff]
    %v227 = vld [vmem:[#allocation2 + $0x548] sm:$0xff]
    %v228 = vld [vmem:[#allocation2 + $0x550] sm:$0xff]
    %v229 = vld [vmem:[#allocation2 + $0x558] sm:$0xff]
    %v230 = vld [vmem:[#allocation2 + $0x560] sm:$0xff]
    %v231 = vld [vmem:[#allocation2 + $0x568] sm:$0xff]
    %v232 = vld [vmem:[#allocation2 + $0x570] sm:$0xff]
    %v233 = vld [vmem:[#allocation2 + $0x578] sm:$0xff]
    %v234 = vld [vmem:[#allocation2 + $0x580] sm:$0xff]
    %v235 = vld [vmem:[#allocation2 + $0x588] sm:$0xff]
    %v236 = vld [vmem:[#allocation2 + $0x590] sm:$0xff]
    %v237 = vld [vmem:[#allocation2 + $0x598] sm:$0xff]
    %v238 = vld [vmem:[#allocation2 + $0x5a0] sm:$0xff]
    %v239 = vld [vmem:[#allocation2 + $0x5a8] sm:$0xff]
    %v240 = vld [vmem:[#allocation2 + $0x5b0] sm:$0xff]
    %v241 = vld [vmem:[#allocation2 + $0x5b8] sm:$0xff]
    %v242 = vld [vmem:[#allocation2 + $0x5c0] sm:$0xff]
    %v243 = vld [vmem:[#allocation2 + $0x5c8] sm:$0xff]
    %v244 = vld [vmem:[#allocation2 + $0x5d0] sm:$0xff]
    %v245 = vld [vmem:[#allocation2 + $0x5d8] sm:$0xff]
    %v246 = vld [vmem:[#allocation2 + $0x5e0] sm:$0xff]
    %v247 = vld [vmem:[#allocation2 + $0x5e8] sm:$0xff]
    %v248 = vld [vmem:[#allocation2 + $0x5f0] sm:$0xff]
    %v249 = vld [vmem:[#allocation2 + $0x5f8] sm:$0xff]
    %v250 = vld [vmem:[#allocation2 + $0x600] sm:$0xff]
    %v251 = vld [vmem:[#allocation2 + $0x608] sm:$0xff]
    %v252 = vld [vmem:[#allocation2 + $0x610] sm:$0xff]
    %v253 = vld [vmem:[#allocation2 + $0x618] sm:$0xff]
    %v254 = vld [vmem:[#allocation2 + $0x620] sm:$0xff]
    %v255 = vld [vmem:[#allocation2 + $0x628] sm:$0xff]
    %v256 = vld [vmem:[#allocation2 + $0x630] sm:$0xff]
    %v257 = vld [vmem:[#allocation2 + $0x638] sm:$0xff]
    %v258 = vld [vmem:[#allocation2 + $0x640] sm:$0xff]
    %v259 = vld [vmem:[#allocation2 + $0x648] sm:$0xff]
    %v260 = vld [vmem:[#allocation2 + $0x650] sm:$0xff]
    %v261 = vld [vmem:[#allocation2 + $0x658] sm:$0xff]
    %v262 = vld [vmem:[#allocation2 + $0x660] sm:$0xff]
    %v263 = vld [vmem:[#allocation2 + $0x668] sm:$0xff]
    %v264 = vld [vmem:[#allocation2 + $0x670] sm:$0xff]
    %v265 = vld [vmem:[#allocation2 + $0x678] sm:$0xff]
    %v266 = vld [vmem:[#allocation2 + $0x680] sm:$0xff]
    %v267 = vld [vmem:[#allocation2 + $0x688] sm:$0xff]
    %v268 = vld [vmem:[#allocation2 + $0x690] sm:$0xff]
    %v269 = vld [vmem:[#allocation2 + $0x698] sm:$0xff]
    %v270 = vld [vmem:[#allocation2 + $0x6a0] sm:$0xff]
    %v271 = vld [vmem:[#allocation2 + $0x6a8] sm:$0xff]
    %v272 = vld [vmem:[#allocation2 + $0x6b0] sm:$0xff]
    %v273 = vld [vmem:[#allocation2 + $0x6b8] sm:$0xff]
    %v274 = vld [vmem:[#allocation2 + $0x6c0] sm:$0xff]
    %v275 = vld [vmem:[#allocation2 + $0x6c8] sm:$0xff]
    %v276 = vld [vmem:[#allocation2 + $0x6d0] sm:$0xff]
    %v277 = vld [vmem:[#allocation2 + $0x6d8] sm:$0xff]
    %v278 = vld [vmem:[#allocation2 + $0x6e0] sm:$0xff]
    %v279 = vld [vmem:[#allocation2 + $0x6e8] sm:$0xff]
    %v280 = vld [vmem:[#allocation2 + $0x6f0] sm:$0xff]
    %v281 = vld [vmem:[#allocation2 + $0x6f8] sm:$0xff]
    %v282 = vld [vmem:[#allocation2 + $0x700] sm:$0xff]
    %v283 = vld [vmem:[#allocation2 + $0x708] sm:$0xff]
    %v284 = vld [vmem:[#allocation2 + $0x710] sm:$0xff]
    %v285 = vld [vmem:[#allocation2 + $0x718] sm:$0xff]
    %v286 = vld [vmem:[#allocation2 + $0x720] sm:$0xff]
    %v287 = vld [vmem:[#allocation2 + $0x728] sm:$0xff]
    %v288 = vld [vmem:[#allocation2 + $0x730] sm:$0xff]
    %v289 = vld [vmem:[#allocation2 + $0x738] sm:$0xff]
    %v290 = vld [vmem:[#allocation2 + $0x740] sm:$0xff]
    %v291 = vld [vmem:[#allocation2 + $0x748] sm:$0xff]
    %v292 = vld [vmem:[#allocation2 + $0x750] sm:$0xff]
    %v293 = vld [vmem:[#allocation2 + $0x758] sm:$0xff]
    %v294 = vld [vmem:[#allocation2 + $0x760] sm:$0xff]
    %v295 = vld [vmem:[#allocation2 + $0x768] sm:$0xff]
    %v296 = vld [vmem:[#allocation2 + $0x770] sm:$0xff]
    %v297 = vld [vmem:[#allocation2 + $0x778] sm:$0xff]
    %v298 = vld [vmem:[#allocation2 + $0x780] sm:$0xff]
    %v299 = vld [vmem:[#allocation2 + $0x788] sm:$0xff]
    %v300 = vld [vmem:[#allocation2 + $0x790] sm:$0xff]
    %v301 = vld [vmem:[#allocation2 + $0x798] sm:$0xff]
    %v302 = vld [vmem:[#allocation2 + $0x7a0] sm:$0xff]
    %v303 = vld [vmem:[#allocation2 + $0x7a8] sm:$0xff]
    %v304 = vld [vmem:[#allocation2 + $0x7b0] sm:$0xff]
    %v305 = vld [vmem:[#allocation2 + $0x7b8] sm:$0xff]
    %v306 = vld [vmem:[#allocation2 + $0x7c0] sm:$0xff]
    %v307 = vld [vmem:[#allocation2 + $0x7c8] sm:$0xff]
    %v308 = vld [vmem:[#allocation2 + $0x7d0] sm:$0xff]
    %v309 = vld [vmem:[#allocation2 + $0x7d8] sm:$0xff]
    %v310 = vld [vmem:[#allocation2 + $0x7e0] sm:$0xff]
    %v311 = vld [vmem:[#allocation2 + $0x7e8] sm:$0xff]
    %v312 = vld [vmem:[#allocation2 + $0x7f0] sm:$0xff]
    %v313 = vld [vmem:[#allocation2 + $0x7f8] sm:$0xff]
    %v314 = vld [vmem:[#allocation2 + $0x800] sm:$0xff]
    %v315 = vld [vmem:[#allocation2 + $0x808] sm:$0xff]
    %v316 = vld [vmem:[#allocation2 + $0x810] sm:$0xff]
    %v317 = vld [vmem:[#allocation2 + $0x818] sm:$0xff]
    %v318 = vld [vmem:[#allocation2 + $0x820] sm:$0xff]
    %v319 = vld [vmem:[#allocation2 + $0x828] sm:$0xff]
    %v320 = vld [vmem:[#allocation2 + $0x830] sm:$0xff]
    %v321 = vld [vmem:[#allocation2 + $0x838] sm:$0xff]
    %v322 = vld [vmem:[#allocation2 + $0x840] sm:$0xff]
    %v323 = vld [vmem:[#allocation2 + $0x848] sm:$0xff]
    %v324 = vld [vmem:[#allocation2 + $0x850] sm:$0xff]
    %v325 = vld [vmem:[#allocation2 + $0x858] sm:$0xff]
    %v326 = vld [vmem:[#allocation2 + $0x860] sm:$0xff]
    %v327 = vld [vmem:[#allocation2 + $0x868] sm:$0xff]
    %v328 = vld [vmem:[#allocation2 + $0x870] sm:$0xff]
    %v329 = vld [vmem:[#allocation2 + $0x878] sm:$0xff]
    %v330 = vld [vmem:[#allocation2 + $0x880] sm:$0xff]
    %v331 = vld [vmem:[#allocation2 + $0x888] sm:$0xff]
    %v332 = vld [vmem:[#allocation2 + $0x890] sm:$0xff]
    %v333 = vld [vmem:[#allocation2 + $0x898] sm:$0xff]
    %v334 = vld [vmem:[#allocation2 + $0x8a0] sm:$0xff]
    %v335 = vld [vmem:[#allocation2 + $0x8a8] sm:$0xff]
    %v336 = vld [vmem:[#allocation2 + $0x8b0] sm:$0xff]
    %v337 = vld [vmem:[#allocation2 + $0x8b8] sm:$0xff]
    %v338 = vld [vmem:[#allocation2 + $0x8c0] sm:$0xff]
    %v339 = vld [vmem:[#allocation2 + $0x8c8] sm:$0xff]
    %v340 = vld [vmem:[#allocation2 + $0x8d0] sm:$0xff]
    %v341 = vld [vmem:[#allocation2 + $0x8d8] sm:$0xff]
    %v342 = vld [vmem:[#allocation2 + $0x8e0] sm:$0xff]
    %v343 = vld [vmem:[#allocation2 + $0x8e8] sm:$0xff]
    %v344 = vld [vmem:[#allocation2 + $0x8f0] sm:$0xff]
    %v345 = vld [vmem:[#allocation2 + $0x8f8] sm:$0xff]
    %v346 = vld [vmem:[#allocation2 + $0x900] sm:$0xff]
    %v347 = vld [vmem:[#allocation2 + $0x908] sm:$0xff]
    %v348 = vld [vmem:[#allocation2 + $0x910] sm:$0xff]
    %v349 = vld [vmem:[#allocation2 + $0x918] sm:$0xff]
    %v350 = vld [vmem:[#allocation2 + $0x920] sm:$0xff]
    %v351 = vld [vmem:[#allocation2 + $0x928] sm:$0xff]
    %v352 = vld [vmem:[#allocation2 + $0x930] sm:$0xff]
    %v353 = vld [vmem:[#allocation2 + $0x938] sm:$0xff]
    %v354 = vld [vmem:[#allocation2 + $0x940] sm:$0xff]
    %v355 = vld [vmem:[#allocation2 + $0x948] sm:$0xff]
    %v356 = vld [vmem:[#allocation2 + $0x950] sm:$0xff]
    %v357 = vld [vmem:[#allocation2 + $0x958] sm:$0xff]
    %v358 = vld [vmem:[#allocation2 + $0x960] sm:$0xff]
    %v359 = vld [vmem:[#allocation5] sm:$0xff]
    %v360 = vld [vmem:[#allocation5 + $0x8] sm:$0xff]
    %v361 = vld [vmem:[#allocation5 + $0x10] sm:$0xff]
    %v362 = vld [vmem:[#allocation5 + $0x18] sm:$0xff]
    %v363 = vld [vmem:[#allocation5 + $0x20] sm:$0xff]
    %v364 = vld [vmem:[#allocation5 + $0x28] sm:$0xff]
    %v365 = vld [vmem:[#allocation5 + $0x30] sm:$0xff]
    %v366 = vld [vmem:[#allocation5 + $0x38] sm:$0xff]
    %v367 = vld [vmem:[#allocation5 + $0x40] sm:$0xff]
    %v368 = vld [vmem:[#allocation5 + $0x48] sm:$0xff]
    %v369 = vld [vmem:[#allocation5 + $0x50] sm:$0xff]
    %v370 = vld [vmem:[#allocation5 + $0x58] sm:$0xff]
    %v371 = vld [vmem:[#allocation5 + $0x60] sm:$0xff]
    %v372 = vld [vmem:[#allocation5 + $0x68] sm:$0xff]
    %v373 = vld [vmem:[#allocation5 + $0x70] sm:$0xff]
    %v374 = vld [vmem:[#allocation5 + $0x78] sm:$0xff]
    %v375 = vld [vmem:[#allocation5 + $0x80] sm:$0xff]
    %v376 = vld [vmem:[#allocation5 + $0x88] sm:$0xff]
    %v377 = vld [vmem:[#allocation5 + $0x90] sm:$0xff]
    %v378 = vld [vmem:[#allocation5 + $0x98] sm:$0xff]
    %v379 = vld [vmem:[#allocation5 + $0xa0] sm:$0xff]
    %v380 = vld [vmem:[#allocation5 + $0xa8] sm:$0xff]
    %v381 = vld [vmem:[#allocation5 + $0xb0] sm:$0xff]
    %v382 = vld [vmem:[#allocation5 + $0xb8] sm:$0xff]
    %v383 = vld [vmem:[#allocation5 + $0xc0] sm:$0xff]
    %v384 = vld [vmem:[#allocation5 + $0xc8] sm:$0xff]
    %v385 = vld [vmem:[#allocation5 + $0xd0] sm:$0xff]
    %v386 = vld [vmem:[#allocation5 + $0xd8] sm:$0xff]
    %v387 = vld [vmem:[#allocation5 + $0xe0] sm:$0xff]
    %v388 = vld [vmem:[#allocation5 + $0xe8] sm:$0xff]
    %v389 = vld [vmem:[#allocation5 + $0xf0] sm:$0xff]
    %v390 = vld [vmem:[#allocation5 + $0xf8] sm:$0xff]
    %v391 = vld [vmem:[#allocation5 + $0x100] sm:$0xff]
    %v392 = vld [vmem:[#allocation5 + $0x108] sm:$0xff]
    %v393 = vld [vmem:[#allocation5 + $0x110] sm:$0xff]
    %v394 = vld [vmem:[#allocation5 + $0x118] sm:$0xff]
    %v395 = vld [vmem:[#allocation5 + $0x120] sm:$0xff]
    %v396 = vld [vmem:[#allocation5 + $0x128] sm:$0xff]
    %v397 = vld [vmem:[#allocation5 + $0x130] sm:$0xff]
    %v398 = vld [vmem:[#allocation5 + $0x138] sm:$0xff]
    %v399 = vld [vmem:[#allocation5 + $0x140] sm:$0xff]
    %v400 = vld [vmem:[#allocation5 + $0x148] sm:$0xff]
    %v401 = vld [vmem:[#allocation5 + $0x150] sm:$0xff]
    %v402 = vld [vmem:[#allocation5 + $0x158] sm:$0xff]
    %v403 = vld [vmem:[#allocation5 + $0x160] sm:$0xff]
    %v404 = vld [vmem:[#allocation5 + $0x168] sm:$0xff]
    %v405 = vld [vmem:[#allocation5 + $0x170] sm:$0xff]
    %v406 = vld [vmem:[#allocation5 + $0x178] sm:$0xff]
    %v407 = vld [vmem:[#allocation5 + $0x180] sm:$0xff]
    %v408 = vld [vmem:[#allocation5 + $0x188] sm:$0xff]
    %v409 = vld [vmem:[#allocation5 + $0x190] sm:$0xff]
    %v410 = vld [vmem:[#allocation5 + $0x198] sm:$0xff]
    %v411 = vld [vmem:[#allocation5 + $0x1a0] sm:$0xff]
    %v412 = vld [vmem:[#allocation5 + $0x1a8] sm:$0xff]
    %v413 = vld [vmem:[#allocation5 + $0x1b0] sm:$0xff]
    %v414 = vld [vmem:[#allocation5 + $0x1b8] sm:$0xff]
    %v415 = vld [vmem:[#allocation5 + $0x1c0] sm:$0xff]
    %v416 = vld [vmem:[#allocation5 + $0x1c8] sm:$0xff]
    %v417 = vld [vmem:[#allocation5 + $0x1d0] sm:$0xff]
    %v418 = vld [vmem:[#allocation5 + $0x1d8] sm:$0xff]
    %v419 = vld [vmem:[#allocation5 + $0x1e0] sm:$0xff]
    %v420 = vld [vmem:[#allocation5 + $0x1e8] sm:$0xff]
    %v421 = vld [vmem:[#allocation5 + $0x1f0] sm:$0xff]
    %v422 = vld [vmem:[#allocation5 + $0x1f8] sm:$0xff]
    %v423 = vld [vmem:[#allocation5 + $0x200] sm:$0xff]
    %v424 = vld [vmem:[#allocation5 + $0x208] sm:$0xff]
    %v425 = vld [vmem:[#allocation5 + $0x210] sm:$0xff]
    %v426 = vld [vmem:[#allocation5 + $0x218] sm:$0xff]
    %v427 = vld [vmem:[#allocation5 + $0x220] sm:$0xff]
    %v428 = vld [vmem:[#allocation5 + $0x228] sm:$0xff]
    %v429 = vld [vmem:[#allocation5 + $0x230] sm:$0xff]
    %v430 = vld [vmem:[#allocation5 + $0x238] sm:$0xff]
    %v431 = vld [vmem:[#allocation5 + $0x240] sm:$0xff]
    %v432 = vld [vmem:[#allocation5 + $0x248] sm:$0xff]
    %v433 = vld [vmem:[#allocation5 + $0x250] sm:$0xff]
    %v434 = vld [vmem:[#allocation5 + $0x258] sm:$0xff]
    %v435 = vld [vmem:[#allocation5 + $0x260] sm:$0xff]
    %v436 = vld [vmem:[#allocation5 + $0x268] sm:$0xff]
    %v437 = vld [vmem:[#allocation5 + $0x270] sm:$0xff]
    %v438 = vld [vmem:[#allocation5 + $0x278] sm:$0xff]
    %v439 = vld [vmem:[#allocation5 + $0x280] sm:$0xff]
    %v440 = vld [vmem:[#allocation5 + $0x288] sm:$0xff]
    %v441 = vld [vmem:[#allocation5 + $0x290] sm:$0xff]
    %v442 = vld [vmem:[#allocation5 + $0x298] sm:$0xff]
    %v443 = vld [vmem:[#allocation5 + $0x2a0] sm:$0xff]
    %v444 = vld [vmem:[#allocation5 + $0x2a8] sm:$0xff]
    %v445 = vld [vmem:[#allocation5 + $0x2b0] sm:$0xff]
    %v446 = vld [vmem:[#allocation5 + $0x2b8] sm:$0xff]
    %v447 = vld [vmem:[#allocation5 + $0x2c0] sm:$0xff]
    %v448 = vld [vmem:[#allocation5 + $0x2c8] sm:$0xff]
    %v449 = vld [vmem:[#allocation5 + $0x2d0] sm:$0xff]
    %v450 = vld [vmem:[#allocation5 + $0x2d8] sm:$0xff]
    %v451 = vld [vmem:[#allocation5 + $0x2e0] sm:$0xff]
    %v452 = vld [vmem:[#allocation5 + $0x2e8] sm:$0xff]
    %v453 = vld [vmem:[#allocation5 + $0x2f0] sm:$0xff]
    %v454 = vld [vmem:[#allocation5 + $0x2f8] sm:$0xff]
    %v455 = vld [vmem:[#allocation5 + $0x300] sm:$0xff]
    %v456 = vld [vmem:[#allocation5 + $0x308] sm:$0xff]
    %v457 = vld [vmem:[#allocation5 + $0x310] sm:$0xff]
    %v458 = vld [vmem:[#allocation5 + $0x318] sm:$0xff]
    %v459 = vld [vmem:[#allocation5 + $0x320] sm:$0xff]
    %v460 = vld [vmem:[#allocation5 + $0x328] sm:$0xff]
    %v461 = vld [vmem:[#allocation5 + $0x330] sm:$0xff]
    %v462 = vld [vmem:[#allocation5 + $0x338] sm:$0xff]
    %v463 = vld [vmem:[#allocation5 + $0x340] sm:$0xff]
    %v464 = vld [vmem:[#allocation5 + $0x348] sm:$0xff]
    %v465 = vld [vmem:[#allocation5 + $0x350] sm:$0xff]
    %v466 = vld [vmem:[#allocation5 + $0x358] sm:$0xff]
    %v467 = vld [vmem:[#allocation5 + $0x360] sm:$0xff]
    %v468 = vld [vmem:[#allocation5 + $0x368] sm:$0xff]
    %v469 = vld [vmem:[#allocation5 + $0x370] sm:$0xff]
    %v470 = vld [vmem:[#allocation5 + $0x378] sm:$0xff]
    %v471 = vld [vmem:[#allocation5 + $0x380] sm:$0xff]
    %v472 = vld [vmem:[#allocation5 + $0x388] sm:$0xff]
    %v473 = vld [vmem:[#allocation5 + $0x390] sm:$0xff]
    %v474 = vld [vmem:[#allocation5 + $0x398] sm:$0xff]
    %v475 = vld [vmem:[#allocation5 + $0x3a0] sm:$0xff]
    %v476 = vld [vmem:[#allocation5 + $0x3a8] sm:$0xff]
    %v477 = vld [vmem:[#allocation5 + $0x3b0] sm:$0xff]
    %v478 = vld [vmem:[#allocation5 + $0x3b8] sm:$0xff]
    %v479 = vld [vmem:[#allocation5 + $0x3c0] sm:$0xff]
    %v480 = vld [vmem:[#allocation5 + $0x3c8] sm:$0xff]
    %v481 = vld [vmem:[#allocation5 + $0x3d0] sm:$0xff]
    %v482 = vld [vmem:[#allocation5 + $0x3d8] sm:$0xff]
    %v483 = vld [vmem:[#allocation5 + $0x3e0] sm:$0xff]
    %v484 = vld [vmem:[#allocation5 + $0x3e8] sm:$0xff]
    %v485 = vld [vmem:[#allocation5 + $0x3f0] sm:$0xff]
    %v486 = vld [vmem:[#allocation5 + $0x3f8] sm:$0xff]
    %v487 = vld [vmem:[#allocation5 + $0x400] sm:$0xff]
    %v488 = vld [vmem:[#allocation5 + $0x408] sm:$0xff]
    %v489 = vld [vmem:[#allocation5 + $0x410] sm:$0xff]
    %v490 = vld [vmem:[#allocation5 + $0x418] sm:$0xff]
    %v491 = vld [vmem:[#allocation5 + $0x420] sm:$0xff]
    %v492 = vld [vmem:[#allocation5 + $0x428] sm:$0xff]
    %v493 = vld [vmem:[#allocation5 + $0x430] sm:$0xff]
    %v494 = vld [vmem:[#allocation5 + $0x438] sm:$0xff]
    %v495 = vld [vmem:[#allocation5 + $0x440] sm:$0xff]
    %v496 = vld [vmem:[#allocation5 + $0x448] sm:$0xff]
    %v497 = vld [vmem:[#allocation5 + $0x450] sm:$0xff]
    %v498 = vld [vmem:[#allocation5 + $0x458] sm:$0xff]
    %v499 = vld [vmem:[#allocation5 + $0x460] sm:$0xff]
    %v500 = vld [vmem:[#allocation5 + $0x468] sm:$0xff]
    %v501 = vld [vmem:[#allocation5 + $0x470] sm:$0xff]
    %v502 = vld [vmem:[#allocation5 + $0x478] sm:$0xff]
    %v503 = vld [vmem:[#allocation5 + $0x480] sm:$0xff]
    %v504 = vld [vmem:[#allocation5 + $0x488] sm:$0xff]
    %v505 = vld [vmem:[#allocation5 + $0x490] sm:$0xff]
    %v506 = vld [vmem:[#allocation5 + $0x498] sm:$0xff]
    %v507 = vld [vmem:[#allocation5 + $0x4a0] sm:$0xff]
    %v508 = vld [vmem:[#allocation5 + $0x4a8] sm:$0xff]
    %v509 = vld [vmem:[#allocation5 + $0x4b0] sm:$0xff]
    %v510 = vld [vmem:[#allocation5 + $0x4b8] sm:$0xff]
    %v511 = vld [vmem:[#allocation5 + $0x4c0] sm:$0xff]
    %v512 = vld [vmem:[#allocation5 + $0x4c8] sm:$0xff]
    %v513 = vld [vmem:[#allocation5 + $0x4d0] sm:$0xff]
    %v514 = vld [vmem:[#allocation5 + $0x4d8] sm:$0xff]
    %v515 = vld [vmem:[#allocation5 + $0x4e0] sm:$0xff]
    %v516 = vld [vmem:[#allocation5 + $0x4e8] sm:$0xff]
    %v517 = vld [vmem:[#allocation5 + $0x4f0] sm:$0xff]
    %v518 = vld [vmem:[#allocation5 + $0x4f8] sm:$0xff]
    %v519 = vld [vmem:[#allocation5 + $0x500] sm:$0xff]
    %v520 = vld [vmem:[#allocation5 + $0x508] sm:$0xff]
    %v521 = vld [vmem:[#allocation5 + $0x510] sm:$0xff]
    %v522 = vld [vmem:[#allocation5 + $0x518] sm:$0xff]
    %v523 = vld [vmem:[#allocation5 + $0x520] sm:$0xff]
    %v524 = vld [vmem:[#allocation5 + $0x528] sm:$0xff]
    %v525 = vld [vmem:[#allocation5 + $0x530] sm:$0xff]
    %v526 = vld [vmem:[#allocation5 + $0x538] sm:$0xff]
    %v527 = vld [vmem:[#allocation5 + $0x540] sm:$0xff]
    %v528 = vld [vmem:[#allocation5 + $0x548] sm:$0xff]
    %v529 = vld [vmem:[#allocation5 + $0x550] sm:$0xff]
    %v530 = vld [vmem:[#allocation5 + $0x558] sm:$0xff]
    %v531 = vld [vmem:[#allocation5 + $0x560] sm:$0xff]
    %v532 = vld [vmem:[#allocation5 + $0x568] sm:$0xff]
    %v533 = vld [vmem:[#allocation5 + $0x570] sm:$0xff]
    %v534 = vld [vmem:[#allocation5 + $0x578] sm:$0xff]
    %v535 = vld [vmem:[#allocation5 + $0x580] sm:$0xff]
    %v536 = vld [vmem:[#allocation5 + $0x588] sm:$0xff]
    %v537 = vld [vmem:[#allocation5 + $0x590] sm:$0xff]
    %v538 = vld [vmem:[#allocation5 + $0x598] sm:$0xff]
    %v539 = vld [vmem:[#allocation5 + $0x5a0] sm:$0xff]
    %v540 = vld [vmem:[#allocation5 + $0x5a8] sm:$0xff]
    %v541 = vld [vmem:[#allocation5 + $0x5b0] sm:$0xff]
    %v542 = vld [vmem:[#allocation5 + $0x5b8] sm:$0xff]
    %v543 = vld [vmem:[#allocation5 + $0x5c0] sm:$0xff]
    %v544 = vld [vmem:[#allocation5 + $0x5c8] sm:$0xff]
    %v545 = vld [vmem:[#allocation5 + $0x5d0] sm:$0xff]
    %v546 = vld [vmem:[#allocation5 + $0x5d8] sm:$0xff]
    %v547 = vld [vmem:[#allocation5 + $0x5e0] sm:$0xff]
    %v548 = vld [vmem:[#allocation5 + $0x5e8] sm:$0xff]
    %v549 = vld [vmem:[#allocation5 + $0x5f0] sm:$0xff]
    %v550 = vld [vmem:[#allocation5 + $0x5f8] sm:$0xff]
    %v551 = vld [vmem:[#allocation5 + $0x600] sm:$0xff]
    %v552 = vld [vmem:[#allocation5 + $0x608] sm:$0xff]
    %v553 = vld [vmem:[#allocation5 + $0x610] sm:$0xff]
    %v554 = vld [vmem:[#allocation5 + $0x618] sm:$0xff]
    %v555 = vld [vmem:[#allocation5 + $0x620] sm:$0xff]
    %v556 = vld [vmem:[#allocation5 + $0x628] sm:$0xff]
    %v557 = vld [vmem:[#allocation5 + $0x630] sm:$0xff]
    %v558 = vld [vmem:[#allocation5 + $0x638] sm:$0xff]
    %v559 = vld [vmem:[#allocation5 + $0x640] sm:$0xff]
    %v560 = vld [vmem:[#allocation5 + $0x648] sm:$0xff]
    %v561 = vld [vmem:[#allocation5 + $0x650] sm:$0xff]
    %v562 = vld [vmem:[#allocation5 + $0x658] sm:$0xff]
    %v563 = vld [vmem:[#allocation5 + $0x660] sm:$0xff]
    %v564 = vld [vmem:[#allocation5 + $0x668] sm:$0xff]
    %v565 = vld [vmem:[#allocation5 + $0x670] sm:$0xff]
    %v566 = vld [vmem:[#allocation5 + $0x678] sm:$0xff]
    %v567 = vld [vmem:[#allocation5 + $0x680] sm:$0xff]
    %v568 = vld [vmem:[#allocation5 + $0x688] sm:$0xff]
    %v569 = vld [vmem:[#allocation5 + $0x690] sm:$0xff]
    %v570 = vld [vmem:[#allocation5 + $0x698] sm:$0xff]
    %v571 = vld [vmem:[#allocation5 + $0x6a0] sm:$0xff]
    %v572 = vld [vmem:[#allocation5 + $0x6a8] sm:$0xff]
    %v573 = vld [vmem:[#allocation5 + $0x6b0] sm:$0xff]
    %v574 = vld [vmem:[#allocation5 + $0x6b8] sm:$0xff]
    %v575 = vld [vmem:[#allocation5 + $0x6c0] sm:$0xff]
    %v576 = vld [vmem:[#allocation5 + $0x6c8] sm:$0xff]
    %v577 = vld [vmem:[#allocation5 + $0x6d0] sm:$0xff]
    %v578 = vld [vmem:[#allocation5 + $0x6d8] sm:$0xff]
    %v579 = vld [vmem:[#allocation5 + $0x6e0] sm:$0xff]
    %v580 = vld [vmem:[#allocation5 + $0x6e8] sm:$0xff]
    %v581 = vld [vmem:[#allocation5 + $0x6f0] sm:$0xff]
    %v582 = vld [vmem:[#allocation5 + $0x6f8] sm:$0xff]
    %v583 = vld [vmem:[#allocation5 + $0x700] sm:$0xff]
    %v584 = vld [vmem:[#allocation5 + $0x708] sm:$0xff]
    %v585 = vld [vmem:[#allocation5 + $0x710] sm:$0xff]
    %v586 = vld [vmem:[#allocation5 + $0x718] sm:$0xff]
    %v587 = vld [vmem:[#allocation5 + $0x720] sm:$0xff]
    %v588 = vld [vmem:[#allocation5 + $0x728] sm:$0xff]
    %v589 = vld [vmem:[#allocation5 + $0x730] sm:$0xff]
    %v590 = vld [vmem:[#allocation5 + $0x738] sm:$0xff]
    %v591 = vld [vmem:[#allocation5 + $0x740] sm:$0xff]
    %v592 = vld [vmem:[#allocation5 + $0x748] sm:$0xff]
    %v593 = vld [vmem:[#allocation5 + $0x750] sm:$0xff]
    %v594 = vld [vmem:[#allocation5 + $0x758] sm:$0xff]
    %v595 = vld [vmem:[#allocation5 + $0x760] sm:$0xff]
    %v596 = vld [vmem:[#allocation5 + $0x768] sm:$0xff]
    %v597 = vld [vmem:[#allocation5 + $0x770] sm:$0xff]
    %v598 = vld [vmem:[#allocation5 + $0x778] sm:$0xff]
    %v599 = vld [vmem:[#allocation5 + $0x780] sm:$0xff]
    %v600 = vld [vmem:[#allocation5 + $0x788] sm:$0xff]
    %v601 = vld [vmem:[#allocation5 + $0x790] sm:$0xff]
    %v602 = vld [vmem:[#allocation5 + $0x798] sm:$0xff]
    %v603 = vld [vmem:[#allocation5 + $0x7a0] sm:$0xff]
    %v604 = vld [vmem:[#allocation5 + $0x7a8] sm:$0xff]
    %v605 = vld [vmem:[#allocation5 + $0x7b0] sm:$0xff]
    %v606 = vld [vmem:[#allocation5 + $0x7b8] sm:$0xff]
    %v607 = vld [vmem:[#allocation5 + $0x7c0] sm:$0xff]
    %v608 = vld [vmem:[#allocation5 + $0x7c8] sm:$0xff]
    %v609 = vld [vmem:[#allocation5 + $0x7d0] sm:$0xff]
    %v610 = vld [vmem:[#allocation5 + $0x7d8] sm:$0xff]
    %v611 = vld [vmem:[#allocation5 + $0x7e0] sm:$0xff]
    %v612 = vld [vmem:[#allocation5 + $0x7e8] sm:$0xff]
    %v613 = vld [vmem:[#allocation5 + $0x7f0] sm:$0xff]
    %v614 = vld [vmem:[#allocation5 + $0x7f8] sm:$0xff]
    %v615 = vld [vmem:[#allocation5 + $0x800] sm:$0xff]
    %v616 = vld [vmem:[#allocation5 + $0x808] sm:$0xff]
    %v617 = vld [vmem:[#allocation5 + $0x810] sm:$0xff]
    %v618 = vld [vmem:[#allocation5 + $0x818] sm:$0xff]
    %v619 = vld [vmem:[#allocation5 + $0x820] sm:$0xff]
    %v620 = vld [vmem:[#allocation5 + $0x828] sm:$0xff]
    %v621 = vld [vmem:[#allocation5 + $0x830] sm:$0xff]
    %v622 = vld [vmem:[#allocation5 + $0x838] sm:$0xff]
    %v623 = vld [vmem:[#allocation5 + $0x840] sm:$0xff]
    %v624 = vld [vmem:[#allocation5 + $0x848] sm:$0xff]
    %v625 = vld [vmem:[#allocation5 + $0x850] sm:$0xff]
    %v626 = vld [vmem:[#allocation5 + $0x858] sm:$0xff]
    %v627 = vld [vmem:[#allocation5 + $0x860] sm:$0xff]
    %v628 = vld [vmem:[#allocation5 + $0x868] sm:$0xff]
    %v629 = vld [vmem:[#allocation5 + $0x870] sm:$0xff]
    %v630 = vld [vmem:[#allocation5 + $0x878] sm:$0xff]
    %v631 = vld [vmem:[#allocation5 + $0x880] sm:$0xff]
    %v632 = vld [vmem:[#allocation5 + $0x888] sm:$0xff]
    %v633 = vld [vmem:[#allocation5 + $0x890] sm:$0xff]
    %v634 = vld [vmem:[#allocation5 + $0x898] sm:$0xff]
    %v635 = vld [vmem:[#allocation5 + $0x8a0] sm:$0xff]
    %v636 = vld [vmem:[#allocation5 + $0x8a8] sm:$0xff]
    %v637 = vld [vmem:[#allocation5 + $0x8b0] sm:$0xff]
    %v638 = vld [vmem:[#allocation5 + $0x8b8] sm:$0xff]
    %v639 = vld [vmem:[#allocation5 + $0x8c0] sm:$0xff]
    %v640 = vld [vmem:[#allocation5 + $0x8c8] sm:$0xff]
    %v641 = vld [vmem:[#allocation5 + $0x8d0] sm:$0xff]
    %v642 = vld [vmem:[#allocation5 + $0x8d8] sm:$0xff]
    %v643 = vld [vmem:[#allocation5 + $0x8e0] sm:$0xff]
    %v644 = vld [vmem:[#allocation5 + $0x8e8] sm:$0xff]
    %v645 = vld [vmem:[#allocation5 + $0x8f0] sm:$0xff]
    %v646 = vld [vmem:[#allocation5 + $0x8f8] sm:$0xff]
    %v647 = vld [vmem:[#allocation5 + $0x900] sm:$0xff]
    %v648 = vld [vmem:[#allocation5 + $0x908] sm:$0xff]
    %v649 = vld [vmem:[#allocation5 + $0x910] sm:$0xff]
    %v650 = vld [vmem:[#allocation5 + $0x918] sm:$0xff]
    %v651 = vld [vmem:[#allocation5 + $0x920] sm:$0xff]
    %v652 = vld [vmem:[#allocation5 + $0x928] sm:$0xff]
    %v653 = vld [vmem:[#allocation5 + $0x930] sm:$0xff]
    %v654 = vld [vmem:[#allocation5 + $0x938] sm:$0xff]
    %v655 = vld [vmem:[#allocation5 + $0x940] sm:$0xff]
    %v656 = vld [vmem:[#allocation5 + $0x948] sm:$0xff]
    %v657 = vld [vmem:[#allocation5 + $0x950] sm:$0xff]
    %v658 = vld [vmem:[#allocation5 + $0x958] sm:$0xff]
    %v659 = vld [vmem:[#allocation5 + $0x960] sm:$0xff]
    %v660 = vsub.f32 %v58, %v359
    %v661 = vsub.f32 %v59, %v360
    %v662 = vsub.f32 %v60, %v361
    %v663 = vsub.f32 %v61, %v362
    %v664 = vsub.f32 %v62, %v363
    %v665 = vsub.f32 %v63, %v364
    %v666 = vsub.f32 %v64, %v365
    %v667 = vsub.f32 %v65, %v366
    %v668 = vsub.f32 %v66, %v367
    %v669 = vsub.f32 %v67, %v368
    %v670 = vsub.f32 %v68, %v369
    %v671 = vsub.f32 %v69, %v370
    %v672 = vsub.f32 %v70, %v371
    %v673 = vsub.f32 %v71, %v372
    %v674 = vsub.f32 %v72, %v373
    %v675 = vsub.f32 %v73, %v374
    %v676 = vsub.f32 %v74, %v375
    %v677 = vsub.f32 %v75, %v376
    %v678 = vsub.f32 %v76, %v377
    %v679 = vsub.f32 %v77, %v378
    %v680 = vsub.f32 %v78, %v379
    %v681 = vsub.f32 %v79, %v380
    %v682 = vsub.f32 %v80, %v381
    %v683 = vsub.f32 %v81, %v382
    %v684 = vsub.f32 %v82, %v383
    %v685 = vsub.f32 %v83, %v384
    %v686 = vsub.f32 %v84, %v385
    %v687 = vsub.f32 %v85, %v386
    %v688 = vsub.f32 %v86, %v387
    %v689 = vsub.f32 %v87, %v388
    %v690 = vsub.f32 %v88, %v389
    %v691 = vsub.f32 %v89, %v390
    %v692 = vsub.f32 %v90, %v391
    %v693 = vsub.f32 %v91, %v392
    %v694 = vsub.f32 %v92, %v393
    %v695 = vsub.f32 %v93, %v394
    %v696 = vsub.f32 %v94, %v395
    %v697 = vsub.f32 %v95, %v396
    %v698 = vsub.f32 %v96, %v397
    %v699 = vsub.f32 %v97, %v398
    %v700 = vsub.f32 %v98, %v399
    %v701 = vsub.f32 %v99, %v400
    %v702 = vsub.f32 %v100, %v401
    %v703 = vsub.f32 %v101, %v402
    %v704 = vsub.f32 %v102, %v403
    %v705 = vsub.f32 %v103, %v404
    %v706 = vsub.f32 %v104, %v405
    %v707 = vsub.f32 %v105, %v406
    %v708 = vsub.f32 %v106, %v407
    %v709 = vsub.f32 %v107, %v408
    %v710 = vsub.f32 %v108, %v409
    %v711 = vsub.f32 %v109, %v410
    %v712 = vsub.f32 %v110, %v411
    %v713 = vsub.f32 %v111, %v412
    %v714 = vsub.f32 %v112, %v413
    %v715 = vsub.f32 %v113, %v414
    %v716 = vsub.f32 %v114, %v415
    %v717 = vsub.f32 %v115, %v416
    %v718 = vsub.f32 %v116, %v417
    %v719 = vsub.f32 %v117, %v418
    %v720 = vsub.f32 %v118, %v419
    %v721 = vsub.f32 %v119, %v420
    %v722 = vsub.f32 %v120, %v421
    %v723 = vsub.f32 %v121, %v422
    %v724 = vsub.f32 %v122, %v423
    %v725 = vsub.f32 %v123, %v424
    %v726 = vsub.f32 %v124, %v425
    %v727 = vsub.f32 %v125, %v426
    %v728 = vsub.f32 %v126, %v427
    %v729 = vsub.f32 %v127, %v428
    %v730 = vsub.f32 %v128, %v429
    %v731 = vsub.f32 %v129, %v430
    %v732 = vsub.f32 %v130, %v431
    %v733 = vsub.f32 %v131, %v432
    %v734 = vsub.f32 %v132, %v433
    %v735 = vsub.f32 %v133, %v434
    %v736 = vsub.f32 %v134, %v435
    %v737 = vsub.f32 %v135, %v436
    %v738 = vsub.f32 %v136, %v437
    %v739 = vsub.f32 %v137, %v438
    %v740 = vsub.f32 %v138, %v439
    %v741 = vsub.f32 %v139, %v440
    %v742 = vsub.f32 %v140, %v441
    %v743 = vsub.f32 %v141, %v442
    %v744 = vsub.f32 %v142, %v443
    %v745 = vsub.f32 %v143, %v444
    %v746 = vsub.f32 %v144, %v445
    %v747 = vsub.f32 %v145, %v446
    %v748 = vsub.f32 %v146, %v447
    %v749 = vsub.f32 %v147, %v448
    %v750 = vsub.f32 %v148, %v449
    %v751 = vsub.f32 %v149, %v450
    %v752 = vsub.f32 %v150, %v451
    %v753 = vsub.f32 %v151, %v452
    %v754 = vsub.f32 %v152, %v453
    %v755 = vsub.f32 %v153, %v454
    %v756 = vsub.f32 %v154, %v455
    %v757 = vsub.f32 %v155, %v456
    %v758 = vsub.f32 %v156, %v457
    %v759 = vsub.f32 %v157, %v458
    %v760 = vsub.f32 %v158, %v459
    %v761 = vsub.f32 %v159, %v460
    %v762 = vsub.f32 %v160, %v461
    %v763 = vsub.f32 %v161, %v462
    %v764 = vsub.f32 %v162, %v463
    %v765 = vsub.f32 %v163, %v464
    %v766 = vsub.f32 %v164, %v465
    %v767 = vsub.f32 %v165, %v466
    %v768 = vsub.f32 %v166, %v467
    %v769 = vsub.f32 %v167, %v468
    %v770 = vsub.f32 %v168, %v469
    %v771 = vsub.f32 %v169, %v470
    %v772 = vsub.f32 %v170, %v471
    %v773 = vsub.f32 %v171, %v472
    %v774 = vsub.f32 %v172, %v473
    %v775 = vsub.f32 %v173, %v474
    %v776 = vsub.f32 %v174, %v475
    %v777 = vsub.f32 %v175, %v476
    %v778 = vsub.f32 %v176, %v477
    %v779 = vsub.f32 %v177, %v478
    %v780 = vsub.f32 %v178, %v479
    %v781 = vsub.f32 %v179, %v480
    %v782 = vsub.f32 %v180, %v481
    %v783 = vsub.f32 %v181, %v482
    %v784 = vsub.f32 %v182, %v483
    %v785 = vsub.f32 %v183, %v484
    %v786 = vsub.f32 %v184, %v485
    %v787 = vsub.f32 %v185, %v486
    %v788 = vsub.f32 %v186, %v487
    %v789 = vsub.f32 %v187, %v488
    %v790 = vsub.f32 %v188, %v489
    %v791 = vsub.f32 %v189, %v490
    %v792 = vsub.f32 %v190, %v491
    %v793 = vsub.f32 %v191, %v492
    %v794 = vsub.f32 %v192, %v493
    %v795 = vsub.f32 %v193, %v494
    %v796 = vsub.f32 %v194, %v495
    %v797 = vsub.f32 %v195, %v496
    %v798 = vsub.f32 %v196, %v497
    %v799 = vsub.f32 %v197, %v498
    %v800 = vsub.f32 %v198, %v499
    %v801 = vsub.f32 %v199, %v500
    %v802 = vsub.f32 %v200, %v501
    %v803 = vsub.f32 %v201, %v502
    %v804 = vsub.f32 %v202, %v503
    %v805 = vsub.f32 %v203, %v504
    %v806 = vsub.f32 %v204, %v505
    %v807 = vsub.f32 %v205, %v506
    %v808 = vsub.f32 %v206, %v507
    %v809 = vsub.f32 %v207, %v508
    %v810 = vsub.f32 %v208, %v509
    %v811 = vsub.f32 %v209, %v510
    %v812 = vsub.f32 %v210, %v511
    %v813 = vsub.f32 %v211, %v512
    %v814 = vsub.f32 %v212, %v513
    %v815 = vsub.f32 %v213, %v514
    %v816 = vsub.f32 %v214, %v515
    %v817 = vsub.f32 %v215, %v516
    %v818 = vsub.f32 %v216, %v517
    %v819 = vsub.f32 %v217, %v518
    %v820 = vsub.f32 %v218, %v519
    %v821 = vsub.f32 %v219, %v520
    %v822 = vsub.f32 %v220, %v521
    %v823 = vsub.f32 %v221, %v522
    %v824 = vsub.f32 %v222, %v523
    %v825 = vsub.f32 %v223, %v524
    %v826 = vsub.f32 %v224, %v525
    %v827 = vsub.f32 %v225, %v526
    %v828 = vsub.f32 %v226, %v527
    %v829 = vsub.f32 %v227, %v528
    %v830 = vsub.f32 %v228, %v529
    %v831 = vsub.f32 %v229, %v530
    %v832 = vsub.f32 %v230, %v531
    %v833 = vsub.f32 %v231, %v532
    %v834 = vsub.f32 %v232, %v533
    %v835 = vsub.f32 %v233, %v534
    %v836 = vsub.f32 %v234, %v535
    %v837 = vsub.f32 %v235, %v536
    %v838 = vsub.f32 %v236, %v537
    %v839 = vsub.f32 %v237, %v538
    %v840 = vsub.f32 %v238, %v539
    %v841 = vsub.f32 %v239, %v540
    %v842 = vsub.f32 %v240, %v541
    %v843 = vsub.f32 %v241, %v542
    %v844 = vsub.f32 %v242, %v543
    %v845 = vsub.f32 %v243, %v544
    %v846 = vsub.f32 %v244, %v545
    %v847 = vsub.f32 %v245, %v546
    %v848 = vsub.f32 %v246, %v547
    %v849 = vsub.f32 %v247, %v548
    %v850 = vsub.f32 %v248, %v549
    %v851 = vsub.f32 %v249, %v550
    %v852 = vsub.f32 %v250, %v551
    %v853 = vsub.f32 %v251, %v552
    %v854 = vsub.f32 %v252, %v553
    %v855 = vsub.f32 %v253, %v554
    %v856 = vsub.f32 %v254, %v555
    %v857 = vsub.f32 %v255, %v556
    %v858 = vsub.f32 %v256, %v557
    %v859 = vsub.f32 %v257, %v558
    %v860 = vsub.f32 %v258, %v559
    %v861 = vsub.f32 %v259, %v560
    %v862 = vsub.f32 %v260, %v561
    %v863 = vsub.f32 %v261, %v562
    %v864 = vsub.f32 %v262, %v563
    %v865 = vsub.f32 %v263, %v564
    %v866 = vsub.f32 %v264, %v565
    %v867 = vsub.f32 %v265, %v566
    %v868 = vsub.f32 %v266, %v567
    %v869 = vsub.f32 %v267, %v568
    %v870 = vsub.f32 %v268, %v569
    %v871 = vsub.f32 %v269, %v570
    %v872 = vsub.f32 %v270, %v571
    %v873 = vsub.f32 %v271, %v572
    %v874 = vsub.f32 %v272, %v573
    %v875 = vsub.f32 %v273, %v574
    %v876 = vsub.f32 %v274, %v575
    %v877 = vsub.f32 %v275, %v576
    %v878 = vsub.f32 %v276, %v577
    %v879 = vsub.f32 %v277, %v578
    %v880 = vsub.f32 %v278, %v579
    %v881 = vsub.f32 %v279, %v580
    %v882 = vsub.f32 %v280, %v581
    %v883 = vsub.f32 %v281, %v582
    %v884 = vsub.f32 %v282, %v583
    %v885 = vsub.f32 %v283, %v584
    %v886 = vsub.f32 %v284, %v585
    %v887 = vsub.f32 %v285, %v586
    %v888 = vsub.f32 %v286, %v587
    %v889 = vsub.f32 %v287, %v588
    %v890 = vsub.f32 %v288, %v589
    %v891 = vsub.f32 %v289, %v590
    %v892 = vsub.f32 %v290, %v591
    %v893 = vsub.f32 %v291, %v592
    %v894 = vsub.f32 %v292, %v593
    %v895 = vsub.f32 %v293, %v594
    %v896 = vsub.f32 %v294, %v595
    %v897 = vsub.f32 %v295, %v596
    %v898 = vsub.f32 %v296, %v597
    %v899 = vsub.f32 %v297, %v598
    %v900 = vsub.f32 %v298, %v599
    %v901 = vsub.f32 %v299, %v600
    %v902 = vsub.f32 %v300, %v601
    %v903 = vsub.f32 %v301, %v602
    %v904 = vsub.f32 %v302, %v603
    %v905 = vsub.f32 %v303, %v604
    %v906 = vsub.f32 %v304, %v605
    %v907 = vsub.f32 %v305, %v606
    %v908 = vsub.f32 %v306, %v607
    %v909 = vsub.f32 %v307, %v608
    %v910 = vsub.f32 %v308, %v609
    %v911 = vsub.f32 %v309, %v610
    %v912 = vsub.f32 %v310, %v611
    %v913 = vsub.f32 %v311, %v612
    %v914 = vsub.f32 %v312, %v613
    %v915 = vsub.f32 %v313, %v614
    %v916 = vsub.f32 %v314, %v615
    %v917 = vsub.f32 %v315, %v616
    %v918 = vsub.f32 %v316, %v617
    %v919 = vsub.f32 %v317, %v618
    %v920 = vsub.f32 %v318, %v619
    %v921 = vsub.f32 %v319, %v620
    %v922 = vsub.f32 %v320, %v621
    %v923 = vsub.f32 %v321, %v622
    %v924 = vsub.f32 %v322, %v623
    %v925 = vsub.f32 %v323, %v624
    %v926 = vsub.f32 %v324, %v625
    %v927 = vsub.f32 %v325, %v626
    %v928 = vsub.f32 %v326, %v627
    %v929 = vsub.f32 %v327, %v628
    %v930 = vsub.f32 %v328, %v629
    %v931 = vsub.f32 %v329, %v630
    %v932 = vsub.f32 %v330, %v631
    %v933 = vsub.f32 %v331, %v632
    %v934 = vsub.f32 %v332, %v633
    %v935 = vsub.f32 %v333, %v634
    %v936 = vsub.f32 %v334, %v635
    %v937 = vsub.f32 %v335, %v636
    %v938 = vsub.f32 %v336, %v637
    %v939 = vsub.f32 %v337, %v638
    %v940 = vsub.f32 %v338, %v639
    %v941 = vsub.f32 %v339, %v640
    %v942 = vsub.f32 %v340, %v641
    %v943 = vsub.f32 %v341, %v642
    %v944 = vsub.f32 %v342, %v643
    %v945 = vsub.f32 %v343, %v644
    %v946 = vsub.f32 %v344, %v645
    %v947 = vsub.f32 %v345, %v646
    %v948 = vsub.f32 %v346, %v647
    %v949 = vsub.f32 %v347, %v648
    %v950 = vsub.f32 %v348, %v649
    %v951 = vsub.f32 %v349, %v650
    %v952 = vsub.f32 %v350, %v651
    %v953 = vsub.f32 %v351, %v652
    %v954 = vsub.f32 %v352, %v653
    %v955 = vsub.f32 %v353, %v654
    %v956 = vsub.f32 %v354, %v655
    %v957 = vsub.f32 %v355, %v656
    %v958 = vsub.f32 %v356, %v657
    %v959 = vsub.f32 %v357, %v658
    %v960 = vsub.f32 %v358, %v659
    %p961 = scmp.lt.s32.totalorder %s52, 0
    // Predicated region
    $region22: #{tpu_custom_call.1} parent=1 // pred_check
      %p962 = pneg %p961
    $region23: #{tpu_custom_call.1} parent=1 // pred_check_branch
      %964 = sbr.rel (%p962) target = $region25
    $region24: #{tpu_custom_call.1} parent=1 // pred_region
      %v965 = vmul.f32 %v660, %v660
      %v966 = vmul.f32 %v661, %v661
      %v967 = vmul.f32 %v662, %v662
      %v968 = vmul.f32 %v663, %v663
      %v969 = vmul.f32 %v664, %v664
      %v970 = vmul.f32 %v665, %v665
      %v971 = vmul.f32 %v666, %v666
      %v972 = vmul.f32 %v667, %v667
      %v973 = vmul.f32 %v668, %v668
      %v974 = vmul.f32 %v669, %v669
      %v975 = vmul.f32 %v670, %v670
      %v976 = vmul.f32 %v671, %v671
      %v977 = vmul.f32 %v672, %v672
      %v978 = vmul.f32 %v673, %v673
      %v979 = vmul.f32 %v674, %v674
      %v980 = vmul.f32 %v675, %v675
      %v981 = vmul.f32 %v676, %v676
      %v982 = vmul.f32 %v677, %v677
      %v983 = vmul.f32 %v678, %v678
      %v984 = vmul.f32 %v679, %v679
      %v985 = vmul.f32 %v680, %v680
      %v986 = vmul.f32 %v681, %v681
      %v987 = vmul.f32 %v682, %v682
      %v988 = vmul.f32 %v683, %v683
      %v989 = vmul.f32 %v684, %v684
      %v990 = vmul.f32 %v685, %v685
      %v991 = vmul.f32 %v686, %v686
      %v992 = vmul.f32 %v687, %v687
      %v993 = vmul.f32 %v688, %v688
      %v994 = vmul.f32 %v689, %v689
      %v995 = vmul.f32 %v690, %v690
      %v996 = vmul.f32 %v691, %v691
      %v997 = vmul.f32 %v692, %v692
      %v998 = vmul.f32 %v693, %v693
      %v999 = vmul.f32 %v694, %v694
      %v1000 = vmul.f32 %v695, %v695
      %v1001 = vmul.f32 %v696, %v696
      %v1002 = vmul.f32 %v697, %v697
      %v1003 = vmul.f32 %v698, %v698
      %v1004 = vmul.f32 %v699, %v699
      %v1005 = vmul.f32 %v700, %v700
      %v1006 = vmul.f32 %v701, %v701
      %v1007 = vmul.f32 %v702, %v702
      %v1008 = vmul.f32 %v703, %v703
      %v1009 = vmul.f32 %v704, %v704
      %v1010 = vmul.f32 %v705, %v705
      %v1011 = vmul.f32 %v706, %v706
      %v1012 = vmul.f32 %v707, %v707
      %v1013 = vmul.f32 %v708, %v708
      %v1014 = vmul.f32 %v709, %v709
      %v1015 = vmul.f32 %v710, %v710
      %v1016 = vmul.f32 %v711, %v711
      %v1017 = vmul.f32 %v712, %v712
      %v1018 = vmul.f32 %v713, %v713
      %v1019 = vmul.f32 %v714, %v714
      %v1020 = vmul.f32 %v715, %v715
      %v1021 = vmul.f32 %v716, %v716
      %v1022 = vmul.f32 %v717, %v717
      %v1023 = vmul.f32 %v718, %v718
      %v1024 = vmul.f32 %v719, %v719
      %v1025 = vmul.f32 %v720, %v720
      %v1026 = vmul.f32 %v721, %v721
      %v1027 = vmul.f32 %v722, %v722
      %v1028 = vmul.f32 %v723, %v723
      %v1029 = vmul.f32 %v724, %v724
      %v1030 = vmul.f32 %v725, %v725
      %v1031 = vmul.f32 %v726, %v726
      %v1032 = vmul.f32 %v727, %v727
      %v1033 = vmul.f32 %v728, %v728
      %v1034 = vmul.f32 %v729, %v729
      %v1035 = vmul.f32 %v730, %v730
      %v1036 = vmul.f32 %v731, %v731
      %v1037 = vmul.f32 %v732, %v732
      %v1038 = vmul.f32 %v733, %v733
      %v1039 = vmul.f32 %v734, %v734
      %v1040 = vmul.f32 %v735, %v735
      %v1041 = vmul.f32 %v736, %v736
      %v1042 = vmul.f32 %v737, %v737
      %v1043 = vmul.f32 %v738, %v738
      %v1044 = vmul.f32 %v739, %v739
      %v1045 = vmul.f32 %v740, %v740
      %v1046 = vmul.f32 %v741, %v741
      %v1047 = vmul.f32 %v742, %v742
      %v1048 = vmul.f32 %v743, %v743
      %v1049 = vmul.f32 %v744, %v744
      %v1050 = vmul.f32 %v745, %v745
      %v1051 = vmul.f32 %v746, %v746
      %v1052 = vmul.f32 %v747, %v747
      %v1053 = vmul.f32 %v748, %v748
      %v1054 = vmul.f32 %v749, %v749
      %v1055 = vmul.f32 %v750, %v750
      %v1056 = vmul.f32 %v751, %v751
      %v1057 = vmul.f32 %v752, %v752
      %v1058 = vmul.f32 %v753, %v753
      %v1059 = vmul.f32 %v754, %v754
      %v1060 = vmul.f32 %v755, %v755
      %v1061 = vmul.f32 %v756, %v756
      %v1062 = vmul.f32 %v757, %v757
      %v1063 = vmul.f32 %v758, %v758
      %v1064 = vmul.f32 %v759, %v759
      %v1065 = vmul.f32 %v760, %v760
      %v1066 = vmul.f32 %v761, %v761
      %v1067 = vmul.f32 %v762, %v762
      %v1068 = vmul.f32 %v763, %v763
      %v1069 = vmul.f32 %v764, %v764
      %v1070 = vmul.f32 %v765, %v765
      %v1071 = vmul.f32 %v766, %v766
      %v1072 = vmul.f32 %v767, %v767
      %v1073 = vmul.f32 %v768, %v768
      %v1074 = vmul.f32 %v769, %v769
      %v1075 = vmul.f32 %v770, %v770
      %v1076 = vmul.f32 %v771, %v771
      %v1077 = vmul.f32 %v772, %v772
      %v1078 = vmul.f32 %v773, %v773
      %v1079 = vmul.f32 %v774, %v774
      %v1080 = vmul.f32 %v775, %v775
      %v1081 = vmul.f32 %v776, %v776
      %v1082 = vmul.f32 %v777, %v777
      %v1083 = vmul.f32 %v778, %v778
      %v1084 = vmul.f32 %v779, %v779
      %v1085 = vmul.f32 %v780, %v780
      %v1086 = vmul.f32 %v781, %v781
      %v1087 = vmul.f32 %v782, %v782
      %v1088 = vmul.f32 %v783, %v783
      %v1089 = vmul.f32 %v784, %v784
      %v1090 = vmul.f32 %v785, %v785
      %v1091 = vmul.f32 %v786, %v786
      %v1092 = vmul.f32 %v787, %v787
      %v1093 = vmul.f32 %v788, %v788
      %v1094 = vmul.f32 %v789, %v789
      %v1095 = vmul.f32 %v790, %v790
      %v1096 = vmul.f32 %v791, %v791
      %v1097 = vmul.f32 %v792, %v792
      %v1098 = vmul.f32 %v793, %v793
      %v1099 = vmul.f32 %v794, %v794
      %v1100 = vmul.f32 %v795, %v795
      %v1101 = vmul.f32 %v796, %v796
      %v1102 = vmul.f32 %v797, %v797
      %v1103 = vmul.f32 %v798, %v798
      %v1104 = vmul.f32 %v799, %v799
      %v1105 = vmul.f32 %v800, %v800
      %v1106 = vmul.f32 %v801, %v801
      %v1107 = vmul.f32 %v802, %v802
      %v1108 = vmul.f32 %v803, %v803
      %v1109 = vmul.f32 %v804, %v804
      %v1110 = vmul.f32 %v805, %v805
      %v1111 = vmul.f32 %v806, %v806
      %v1112 = vmul.f32 %v807, %v807
      %v1113 = vmul.f32 %v808, %v808
      %v1114 = vmul.f32 %v809, %v809
      %v1115 = vmul.f32 %v810, %v810
      %v1116 = vmul.f32 %v811, %v811
      %v1117 = vmul.f32 %v812, %v812
      %v1118 = vmul.f32 %v813, %v813
      %v1119 = vmul.f32 %v814, %v814
      %v1120 = vmul.f32 %v815, %v815
      %v1121 = vmul.f32 %v816, %v816
      %v1122 = vmul.f32 %v817, %v817
      %v1123 = vmul.f32 %v818, %v818
      %v1124 = vmul.f32 %v819, %v819
      %v1125 = vmul.f32 %v820, %v820
      %v1126 = vmul.f32 %v821, %v821
      %v1127 = vmul.f32 %v822, %v822
      %v1128 = vmul.f32 %v823, %v823
      %v1129 = vmul.f32 %v824, %v824
      %v1130 = vmul.f32 %v825, %v825
      %v1131 = vmul.f32 %v826, %v826
      %v1132 = vmul.f32 %v827, %v827
      %v1133 = vmul.f32 %v828, %v828
      %v1134 = vmul.f32 %v829, %v829
      %v1135 = vmul.f32 %v830, %v830
      %v1136 = vmul.f32 %v831, %v831
      %v1137 = vmul.f32 %v832, %v832
      %v1138 = vmul.f32 %v833, %v833
      %v1139 = vmul.f32 %v834, %v834
      %v1140 = vmul.f32 %v835, %v835
      %v1141 = vmul.f32 %v836, %v836
      %v1142 = vmul.f32 %v837, %v837
      %v1143 = vmul.f32 %v838, %v838
      %v1144 = vmul.f32 %v839, %v839
      %v1145 = vmul.f32 %v840, %v840
      %v1146 = vmul.f32 %v841, %v841
      %v1147 = vmul.f32 %v842, %v842
      %v1148 = vmul.f32 %v843, %v843
      %v1149 = vmul.f32 %v844, %v844
      %v1150 = vmul.f32 %v845, %v845
      %v1151 = vmul.f32 %v846, %v846
      %v1152 = vmul.f32 %v847, %v847
      %v1153 = vmul.f32 %v848, %v848
      %v1154 = vmul.f32 %v849, %v849
      %v1155 = vmul.f32 %v850, %v850
      %v1156 = vmul.f32 %v851, %v851
      %v1157 = vmul.f32 %v852, %v852
      %v1158 = vmul.f32 %v853, %v853
      %v1159 = vmul.f32 %v854, %v854
      %v1160 = vmul.f32 %v855, %v855
      %v1161 = vmul.f32 %v856, %v856
      %v1162 = vmul.f32 %v857, %v857
      %v1163 = vmul.f32 %v858, %v858
      %v1164 = vmul.f32 %v859, %v859
      %v1165 = vmul.f32 %v860, %v860
      %v1166 = vmul.f32 %v861, %v861
      %v1167 = vmul.f32 %v862, %v862
      %v1168 = vmul.f32 %v863, %v863
      %v1169 = vmul.f32 %v864, %v864
      %v1170 = vmul.f32 %v865, %v865
      %v1171 = vmul.f32 %v866, %v866
      %v1172 = vmul.f32 %v867, %v867
      %v1173 = vmul.f32 %v868, %v868
      %v1174 = vmul.f32 %v869, %v869
      %v1175 = vmul.f32 %v870, %v870
      %v1176 = vmul.f32 %v871, %v871
      %v1177 = vmul.f32 %v872, %v872
      %v1178 = vmul.f32 %v873, %v873
      %v1179 = vmul.f32 %v874, %v874
      %v1180 = vmul.f32 %v875, %v875
      %v1181 = vmul.f32 %v876, %v876
      %v1182 = vmul.f32 %v877, %v877
      %v1183 = vmul.f32 %v878, %v878
      %v1184 = vmul.f32 %v879, %v879
      %v1185 = vmul.f32 %v880, %v880
      %v1186 = vmul.f32 %v881, %v881
      %v1187 = vmul.f32 %v882, %v882
      %v1188 = vmul.f32 %v883, %v883
      %v1189 = vmul.f32 %v884, %v884
      %v1190 = vmul.f32 %v885, %v885
      %v1191 = vmul.f32 %v886, %v886
      %v1192 = vmul.f32 %v887, %v887
      %v1193 = vmul.f32 %v888, %v888
      %v1194 = vmul.f32 %v889, %v889
      %v1195 = vmul.f32 %v890, %v890
      %v1196 = vmul.f32 %v891, %v891
      %v1197 = vmul.f32 %v892, %v892
      %v1198 = vmul.f32 %v893, %v893
      %v1199 = vmul.f32 %v894, %v894
      %v1200 = vmul.f32 %v895, %v895
      %v1201 = vmul.f32 %v896, %v896
      %v1202 = vmul.f32 %v897, %v897
      %v1203 = vmul.f32 %v898, %v898
      %v1204 = vmul.f32 %v899, %v899
      %v1205 = vmul.f32 %v900, %v900
      %v1206 = vmul.f32 %v901, %v901
      %v1207 = vmul.f32 %v902, %v902
      %v1208 = vmul.f32 %v903, %v903
      %v1209 = vmul.f32 %v904, %v904
      %v1210 = vmul.f32 %v905, %v905
      %v1211 = vmul.f32 %v906, %v906
      %v1212 = vmul.f32 %v907, %v907
      %v1213 = vmul.f32 %v908, %v908
      %v1214 = vmul.f32 %v909, %v909
      %v1215 = vmul.f32 %v910, %v910
      %v1216 = vmul.f32 %v911, %v911
      %v1217 = vmul.f32 %v912, %v912
      %v1218 = vmul.f32 %v913, %v913
      %v1219 = vmul.f32 %v914, %v914
      %v1220 = vmul.f32 %v915, %v915
      %v1221 = vmul.f32 %v916, %v916
      %v1222 = vmul.f32 %v917, %v917
      %v1223 = vmul.f32 %v918, %v918
      %v1224 = vmul.f32 %v919, %v919
      %v1225 = vmul.f32 %v920, %v920
      %v1226 = vmul.f32 %v921, %v921
      %v1227 = vmul.f32 %v922, %v922
      %v1228 = vmul.f32 %v923, %v923
      %v1229 = vmul.f32 %v924, %v924
      %v1230 = vmul.f32 %v925, %v925
      %v1231 = vmul.f32 %v926, %v926
      %v1232 = vmul.f32 %v927, %v927
      %v1233 = vmul.f32 %v928, %v928
      %v1234 = vmul.f32 %v929, %v929
      %v1235 = vmul.f32 %v930, %v930
      %v1236 = vmul.f32 %v931, %v931
      %v1237 = vmul.f32 %v932, %v932
      %v1238 = vmul.f32 %v933, %v933
      %v1239 = vmul.f32 %v934, %v934
      %v1240 = vmul.f32 %v935, %v935
      %v1241 = vmul.f32 %v936, %v936
      %v1242 = vmul.f32 %v937, %v937
      %v1243 = vmul.f32 %v938, %v938
      %v1244 = vmul.f32 %v939, %v939
      %v1245 = vmul.f32 %v940, %v940
      %v1246 = vmul.f32 %v941, %v941
      %v1247 = vmul.f32 %v942, %v942
      %v1248 = vmul.f32 %v943, %v943
      %v1249 = vmul.f32 %v944, %v944
      %v1250 = vmul.f32 %v945, %v945
      %v1251 = vmul.f32 %v946, %v946
      %v1252 = vmul.f32 %v947, %v947
      %v1253 = vmul.f32 %v948, %v948
      %v1254 = vmul.f32 %v949, %v949
      %v1255 = vmul.f32 %v950, %v950
      %v1256 = vmul.f32 %v951, %v951
      %v1257 = vmul.f32 %v952, %v952
      %v1258 = vmul.f32 %v953, %v953
      %v1259 = vmul.f32 %v954, %v954
      %v1260 = vmul.f32 %v955, %v955
      %v1261 = vmul.f32 %v956, %v956
      %v1262 = vmul.f32 %v957, %v957
      %v1263 = vmul.f32 %v958, %v958
      %v1264 = vmul.f32 %v959, %v959
      %v1265 = vmul.f32 %v960, %v960
      %v1266 = vld [vmem:[#allocation7] sm:$0xff]
      %v1267 = vadd.f32 %v965, %v966
      %v1268 = vadd.f32 %v1267, %v967
      %v1269 = vadd.f32 %v1268, %v968
      %v1270 = vadd.f32 %v1269, %v969
      %v1271 = vadd.f32 %v1270, %v970
      %v1272 = vadd.f32 %v1271, %v971
      %v1273 = vadd.f32 %v1272, %v972
      %v1274 = vadd.f32 %v1273, %v973
      %v1275 = vadd.f32 %v1274, %v974
      %v1276 = vadd.f32 %v1275, %v975
      %v1277 = vadd.f32 %v1276, %v976
      %v1278 = vadd.f32 %v1277, %v977
      %v1279 = vadd.f32 %v1278, %v978
      %v1280 = vadd.f32 %v1279, %v979
      %v1281 = vadd.f32 %v1280, %v980
      %v1282 = vadd.f32 %v1281, %v981
      %v1283 = vadd.f32 %v1282, %v982
      %v1284 = vadd.f32 %v1283, %v983
      %v1285 = vadd.f32 %v1284, %v984
      %v1286 = vadd.f32 %v1285, %v985
      %v1287 = vadd.f32 %v1286, %v986
      %v1288 = vadd.f32 %v1287, %v987
      %v1289 = vadd.f32 %v1288, %v988
      %v1290 = vadd.f32 %v1289, %v989
      %v1291 = vadd.f32 %v1290, %v990
      %v1292 = vadd.f32 %v1291, %v991
      %v1293 = vadd.f32 %v1292, %v992
      %v1294 = vadd.f32 %v1293, %v993
      %v1295 = vadd.f32 %v1294, %v994
      %v1296 = vadd.f32 %v1295, %v995
      %v1297 = vadd.f32 %v1296, %v996
      %v1298 = vadd.f32 %v1297, %v997
      %v1299 = vadd.f32 %v1298, %v998
      %v1300 = vadd.f32 %v1299, %v999
      %v1301 = vadd.f32 %v1300, %v1000
      %v1302 = vadd.f32 %v1301, %v1001
      %v1303 = vadd.f32 %v1302, %v1002
      %v1304 = vadd.f32 %v1303, %v1003
      %v1305 = vadd.f32 %v1304, %v1004
      %v1306 = vadd.f32 %v1305, %v1005
      %v1307 = vadd.f32 %v1306, %v1006
      %v1308 = vadd.f32 %v1307, %v1007
      %v1309 = vadd.f32 %v1308, %v1008
      %v1310 = vadd.f32 %v1309, %v1009
      %v1311 = vadd.f32 %v1310, %v1010
      %v1312 = vadd.f32 %v1311, %v1011
      %v1313 = vadd.f32 %v1312, %v1012
      %v1314 = vadd.f32 %v1313, %v1013
      %v1315 = vadd.f32 %v1314, %v1014
      %v1316 = vadd.f32 %v1315, %v1015
      %v1317 = vadd.f32 %v1316, %v1016
      %v1318 = vadd.f32 %v1317, %v1017
      %v1319 = vadd.f32 %v1318, %v1018
      %v1320 = vadd.f32 %v1319, %v1019
      %v1321 = vadd.f32 %v1320, %v1020
      %v1322 = vadd.f32 %v1321, %v1021
      %v1323 = vadd.f32 %v1322, %v1022
      %v1324 = vadd.f32 %v1323, %v1023
      %v1325 = vadd.f32 %v1324, %v1024
      %v1326 = vadd.f32 %v1325, %v1025
      %v1327 = vadd.f32 %v1326, %v1026
      %v1328 = vadd.f32 %v1327, %v1027
      %v1329 = vadd.f32 %v1328, %v1028
      %v1330 = vadd.f32 %v1329, %v1029
      %v1331 = vadd.f32 %v1330, %v1030
      %v1332 = vadd.f32 %v1331, %v1031
      %v1333 = vadd.f32 %v1332, %v1032
      %v1334 = vadd.f32 %v1333, %v1033
      %v1335 = vadd.f32 %v1334, %v1034
      %v1336 = vadd.f32 %v1335, %v1035
      %v1337 = vadd.f32 %v1336, %v1036
      %v1338 = vadd.f32 %v1337, %v1037
      %v1339 = vadd.f32 %v1338, %v1038
      %v1340 = vadd.f32 %v1339, %v1039
      %v1341 = vadd.f32 %v1340, %v1040
      %v1342 = vadd.f32 %v1341, %v1041
      %v1343 = vadd.f32 %v1342, %v1042
      %v1344 = vadd.f32 %v1343, %v1043
      %v1345 = vadd.f32 %v1344, %v1044
      %v1346 = vadd.f32 %v1345, %v1045
      %v1347 = vadd.f32 %v1346, %v1046
      %v1348 = vadd.f32 %v1347, %v1047
      %v1349 = vadd.f32 %v1348, %v1048
      %v1350 = vadd.f32 %v1349, %v1049
      %v1351 = vadd.f32 %v1350, %v1050
      %v1352 = vadd.f32 %v1351, %v1051
      %v1353 = vadd.f32 %v1352, %v1052
      %v1354 = vadd.f32 %v1353, %v1053
      %v1355 = vadd.f32 %v1354, %v1054
      %v1356 = vadd.f32 %v1355, %v1055
      %v1357 = vadd.f32 %v1356, %v1056
      %v1358 = vadd.f32 %v1357, %v1057
      %v1359 = vadd.f32 %v1358, %v1058
      %v1360 = vadd.f32 %v1359, %v1059
      %v1361 = vadd.f32 %v1360, %v1060
      %v1362 = vadd.f32 %v1361, %v1061
      %v1363 = vadd.f32 %v1362, %v1062
      %v1364 = vadd.f32 %v1363, %v1063
      %v1365 = vadd.f32 %v1364, %v1064
      %v1366 = vadd.f32 %v1365, %v1065
      %v1367 = vadd.f32 %v1366, %v1066
      %v1368 = vadd.f32 %v1367, %v1067
      %v1369 = vadd.f32 %v1368, %v1068
      %v1370 = vadd.f32 %v1369, %v1069
      %v1371 = vadd.f32 %v1370, %v1070
      %v1372 = vadd.f32 %v1371, %v1071
      %v1373 = vadd.f32 %v1372, %v1072
      %v1374 = vadd.f32 %v1373, %v1073
      %v1375 = vadd.f32 %v1374, %v1074
      %v1376 = vadd.f32 %v1375, %v1075
      %v1377 = vadd.f32 %v1376, %v1076
      %v1378 = vadd.f32 %v1377, %v1077
      %v1379 = vadd.f32 %v1378, %v1078
      %v1380 = vadd.f32 %v1379, %v1079
      %v1381 = vadd.f32 %v1380, %v1080
      %v1382 = vadd.f32 %v1381, %v1081
      %v1383 = vadd.f32 %v1382, %v1082
      %v1384 = vadd.f32 %v1383, %v1083
      %v1385 = vadd.f32 %v1384, %v1084
      %v1386 = vadd.f32 %v1385, %v1085
      %v1387 = vadd.f32 %v1386, %v1086
      %v1388 = vadd.f32 %v1387, %v1087
      %v1389 = vadd.f32 %v1388, %v1088
      %v1390 = vadd.f32 %v1389, %v1089
      %v1391 = vadd.f32 %v1390, %v1090
      %v1392 = vadd.f32 %v1391, %v1091
      %v1393 = vadd.f32 %v1392, %v1092
      %v1394 = vadd.f32 %v1393, %v1093
      %v1395 = vadd.f32 %v1394, %v1094
      %v1396 = vadd.f32 %v1395, %v1095
      %v1397 = vadd.f32 %v1396, %v1096
      %v1398 = vadd.f32 %v1397, %v1097
      %v1399 = vadd.f32 %v1398, %v1098
      %v1400 = vadd.f32 %v1399, %v1099
      %v1401 = vadd.f32 %v1400, %v1100
      %v1402 = vadd.f32 %v1401, %v1101
      %v1403 = vadd.f32 %v1402, %v1102
      %v1404 = vadd.f32 %v1403, %v1103
      %v1405 = vadd.f32 %v1404, %v1104
      %v1406 = vadd.f32 %v1405, %v1105
      %v1407 = vadd.f32 %v1406, %v1106
      %v1408 = vadd.f32 %v1407, %v1107
      %v1409 = vadd.f32 %v1408, %v1108
      %v1410 = vadd.f32 %v1409, %v1109
      %v1411 = vadd.f32 %v1410, %v1110
      %v1412 = vadd.f32 %v1411, %v1111
      %v1413 = vadd.f32 %v1412, %v1112
      %v1414 = vadd.f32 %v1413, %v1113
      %v1415 = vadd.f32 %v1414, %v1114
      %v1416 = vadd.f32 %v1415, %v1115
      %v1417 = vadd.f32 %v1416, %v1116
      %v1418 = vadd.f32 %v1417, %v1117
      %v1419 = vadd.f32 %v1418, %v1118
      %v1420 = vadd.f32 %v1419, %v1119
      %v1421 = vadd.f32 %v1420, %v1120
      %v1422 = vadd.f32 %v1421, %v1121
      %v1423 = vadd.f32 %v1422, %v1122
      %v1424 = vadd.f32 %v1423, %v1123
      %v1425 = vadd.f32 %v1424, %v1124
      %v1426 = vadd.f32 %v1425, %v1125
      %v1427 = vadd.f32 %v1426, %v1126
      %v1428 = vadd.f32 %v1427, %v1127
      %v1429 = vadd.f32 %v1428, %v1128
      %v1430 = vadd.f32 %v1429, %v1129
      %v1431 = vadd.f32 %v1430, %v1130
      %v1432 = vadd.f32 %v1431, %v1131
      %v1433 = vadd.f32 %v1432, %v1132
      %v1434 = vadd.f32 %v1433, %v1133
      %v1435 = vadd.f32 %v1434, %v1134
      %v1436 = vadd.f32 %v1435, %v1135
      %v1437 = vadd.f32 %v1436, %v1136
      %v1438 = vadd.f32 %v1437, %v1137
      %v1439 = vadd.f32 %v1438, %v1138
      %v1440 = vadd.f32 %v1439, %v1139
      %v1441 = vadd.f32 %v1440, %v1140
      %v1442 = vadd.f32 %v1441, %v1141
      %v1443 = vadd.f32 %v1442, %v1142
      %v1444 = vadd.f32 %v1443, %v1143
      %v1445 = vadd.f32 %v1444, %v1144
      %v1446 = vadd.f32 %v1445, %v1145
      %v1447 = vadd.f32 %v1446, %v1146
      %v1448 = vadd.f32 %v1447, %v1147
      %v1449 = vadd.f32 %v1448, %v1148
      %v1450 = vadd.f32 %v1449, %v1149
      %v1451 = vadd.f32 %v1450, %v1150
      %v1452 = vadd.f32 %v1451, %v1151
      %v1453 = vadd.f32 %v1452, %v1152
      %v1454 = vadd.f32 %v1453, %v1153
      %v1455 = vadd.f32 %v1454, %v1154
      %v1456 = vadd.f32 %v1455, %v1155
      %v1457 = vadd.f32 %v1456, %v1156
      %v1458 = vadd.f32 %v1457, %v1157
      %v1459 = vadd.f32 %v1458, %v1158
      %v1460 = vadd.f32 %v1459, %v1159
      %v1461 = vadd.f32 %v1460, %v1160
      %v1462 = vadd.f32 %v1461, %v1161
      %v1463 = vadd.f32 %v1462, %v1162
      %v1464 = vadd.f32 %v1463, %v1163
      %v1465 = vadd.f32 %v1464, %v1164
      %v1466 = vadd.f32 %v1465, %v1165
      %v1467 = vadd.f32 %v1466, %v1166
      %v1468 = vadd.f32 %v1467, %v1167
      %v1469 = vadd.f32 %v1468, %v1168
      %v1470 = vadd.f32 %v1469, %v1169
      %v1471 = vadd.f32 %v1470, %v1170
      %v1472 = vadd.f32 %v1471, %v1171
      %v1473 = vadd.f32 %v1472, %v1172
      %v1474 = vadd.f32 %v1473, %v1173
      %v1475 = vadd.f32 %v1474, %v1174
      %v1476 = vadd.f32 %v1475, %v1175
      %v1477 = vadd.f32 %v1476, %v1176
      %v1478 = vadd.f32 %v1477, %v1177
      %v1479 = vadd.f32 %v1478, %v1178
      %v1480 = vadd.f32 %v1479, %v1179
      %v1481 = vadd.f32 %v1480, %v1180
      %v1482 = vadd.f32 %v1481, %v1181
      %v1483 = vadd.f32 %v1482, %v1182
      %v1484 = vadd.f32 %v1483, %v1183
      %v1485 = vadd.f32 %v1484, %v1184
      %v1486 = vadd.f32 %v1485, %v1185
      %v1487 = vadd.f32 %v1486, %v1186
      %v1488 = vadd.f32 %v1487, %v1187
      %v1489 = vadd.f32 %v1488, %v1188
      %v1490 = vadd.f32 %v1489, %v1189
      %v1491 = vadd.f32 %v1490, %v1190
      %v1492 = vadd.f32 %v1491, %v1191
      %v1493 = vadd.f32 %v1492, %v1192
      %v1494 = vadd.f32 %v1493, %v1193
      %v1495 = vadd.f32 %v1494, %v1194
      %v1496 = vadd.f32 %v1495, %v1195
      %v1497 = vadd.f32 %v1496, %v1196
      %v1498 = vadd.f32 %v1497, %v1197
      %v1499 = vadd.f32 %v1498, %v1198
      %v1500 = vadd.f32 %v1499, %v1199
      %v1501 = vadd.f32 %v1500, %v1200
      %v1502 = vadd.f32 %v1501, %v1201
      %v1503 = vadd.f32 %v1502, %v1202
      %v1504 = vadd.f32 %v1503, %v1203
      %v1505 = vadd.f32 %v1504, %v1204
      %v1506 = vadd.f32 %v1505, %v1205
      %v1507 = vadd.f32 %v1506, %v1206
      %v1508 = vadd.f32 %v1507, %v1207
      %v1509 = vadd.f32 %v1508, %v1208
      %v1510 = vadd.f32 %v1509, %v1209
      %v1511 = vadd.f32 %v1510, %v1210
      %v1512 = vadd.f32 %v1511, %v1211
      %v1513 = vadd.f32 %v1512, %v1212
      %v1514 = vadd.f32 %v1513, %v1213
      %v1515 = vadd.f32 %v1514, %v1214
      %v1516 = vadd.f32 %v1515, %v1215
      %v1517 = vadd.f32 %v1516, %v1216
      %v1518 = vadd.f32 %v1517, %v1217
      %v1519 = vadd.f32 %v1518, %v1218
      %v1520 = vadd.f32 %v1519, %v1219
      %v1521 = vadd.f32 %v1520, %v1220
      %v1522 = vadd.f32 %v1521, %v1221
      %v1523 = vadd.f32 %v1522, %v1222
      %v1524 = vadd.f32 %v1523, %v1223
      %v1525 = vadd.f32 %v1524, %v1224
      %v1526 = vadd.f32 %v1525, %v1225
      %v1527 = vadd.f32 %v1526, %v1226
      %v1528 = vadd.f32 %v1527, %v1227
      %v1529 = vadd.f32 %v1528, %v1228
      %v1530 = vadd.f32 %v1529, %v1229
      %v1531 = vadd.f32 %v1530, %v1230
      %v1532 = vadd.f32 %v1531, %v1231
      %v1533 = vadd.f32 %v1532, %v1232
      %v1534 = vadd.f32 %v1533, %v1233
      %v1535 = vadd.f32 %v1534, %v1234
      %v1536 = vadd.f32 %v1535, %v1235
      %v1537 = vadd.f32 %v1536, %v1236
      %v1538 = vadd.f32 %v1537, %v1237
      %v1539 = vadd.f32 %v1538, %v1238
      %v1540 = vadd.f32 %v1539, %v1239
      %v1541 = vadd.f32 %v1540, %v1240
      %v1542 = vadd.f32 %v1541, %v1241
      %v1543 = vadd.f32 %v1542, %v1242
      %v1544 = vadd.f32 %v1543, %v1243
      %v1545 = vadd.f32 %v1544, %v1244
      %v1546 = vadd.f32 %v1545, %v1245
      %v1547 = vadd.f32 %v1546, %v1246
      %v1548 = vadd.f32 %v1547, %v1247
      %v1549 = vadd.f32 %v1548, %v1248
      %v1550 = vadd.f32 %v1549, %v1249
      %v1551 = vadd.f32 %v1550, %v1250
      %v1552 = vadd.f32 %v1551, %v1251
      %v1553 = vadd.f32 %v1552, %v1252
      %v1554 = vadd.f32 %v1553, %v1253
      %v1555 = vadd.f32 %v1554, %v1254
      %v1556 = vadd.f32 %v1555, %v1255
      %v1557 = vadd.f32 %v1556, %v1256
      %v1558 = vadd.f32 %v1557, %v1257
      %v1559 = vadd.f32 %v1558, %v1258
      %v1560 = vadd.f32 %v1559, %v1259
      %v1561 = vadd.f32 %v1560, %v1260
      %v1562 = vadd.f32 %v1561, %v1261
      %v1563 = vadd.f32 %v1562, %v1262
      %v1564 = vadd.f32 %v1563, %v1263
      %v1565 = vadd.f32 %v1564, %v1264
      %v1566 = vadd.f32 %v1565, %v1265
      %v1567 = vadd.f32 %v1266, %v1566
      %1568 = vst [vmem:[#allocation7] sm:$0xff] %v1567
    $region25: #{tpu_custom_call.1} parent=1 // pred_fallthru
      _
    %p1569 = scmp.eq.s32.totalorder %s52, 0
    // Predicated region
    $region26: #{tpu_custom_call.1} parent=1 // pred_check
      %p1570 = pneg %p1569
    $region27: #{tpu_custom_call.1} parent=1 // pred_check_branch
      %1572 = sbr.rel (%p1570) target = $region29
    $region28: #{tpu_custom_call.1} parent=1 // pred_region
      %v1573 = vlaneseq
      %v1574 = vshrl.u32 %v1573, 7
      %v1575 = vadd.s32 %v1574, 8
      %v1576 = vadd.s32 %v1574, 16
      %v1577 = vadd.s32 %v1574, 24
      %v1578 = vadd.s32 %v1574, 32
      %v1579 = vadd.s32 %v1574, 40
      %v1580 = vadd.s32 %v1574, 48
      %v1581 = vadd.s32 %v1574, 56
      %v1582 = vadd.s32 %v1574, 64
      %v1583 = vadd.s32 %v1574, 72
      %v1584 = vadd.s32 %v1574, 80
      %v1585 = vadd.s32 %v1574, 88
      %v1586 = vadd.s32 %v1574, 96
      %v1587 = vadd.s32 %v1574, 104
      %v1588 = vadd.s32 %v1574, 112
      %v1589 = vadd.s32 %v1574, 120
      %v1590 = vadd.s32 %v1574, 128
      %v1591 = vadd.s32 %v1574, 136
      %v1592 = vadd.s32 %v1574, 144
      %v1593 = vadd.s32 %v1574, 152
      %v1594 = vadd.s32 %v1574, 160
      %v1595 = vadd.s32 %v1574, 168
      %v1596 = vadd.s32 %v1574, 176
      %v1597 = vadd.s32 %v1574, 184
      %v1598 = vadd.s32 %v1574, 192
      %v1599 = vadd.s32 %v1574, 200
      %v1600 = vadd.s32 %v1574, 208
      %v1601 = vadd.s32 %v1574, 216
      %v1602 = vadd.s32 %v1574, 224
      %v1603 = vadd.s32 %v1574, 232
      %v1604 = vadd.s32 %v1574, 240
      %v1605 = vadd.s32 %v1574, 248
      %v1606 = vadd.s32 %v1574, 256
      %v1607 = vadd.s32 %v1574, 264
      %v1608 = vadd.s32 %v1574, 272
      %v1609 = vadd.s32 %v1574, 280
      %v1610 = vadd.s32 %v1574, 288
      %v1611 = vadd.s32 %v1574, 296
      %v1612 = vadd.s32 %v1574, 304
      %v1613 = vadd.s32 %v1574, 312
      %v1614 = vadd.s32 %v1574, 320
      %v1615 = vadd.s32 %v1574, 328
      %v1616 = vadd.s32 %v1574, 336
      %v1617 = vadd.s32 %v1574, 344
      %v1618 = vadd.s32 %v1574, 352
      %v1619 = vadd.s32 %v1574, 360
      %v1620 = vadd.s32 %v1574, 368
      %v1621 = vadd.s32 %v1574, 376
      %v1622 = vadd.s32 %v1574, 384
      %v1623 = vadd.s32 %v1574, 392
      %v1624 = vadd.s32 %v1574, 400
      %v1625 = vadd.s32 %v1574, 408
      %v1626 = vadd.s32 %v1574, 416
      %v1627 = vadd.s32 %v1574, 424
      %v1628 = vadd.s32 %v1574, 432
      %v1629 = vadd.s32 %v1574, 440
      %v1630 = vadd.s32 %v1574, 448
      %v1631 = vadd.s32 %v1574, 456
      %v1632 = vadd.s32 %v1574, 464
      %v1633 = vadd.s32 %v1574, 472
      %v1634 = vadd.s32 %v1574, 480
      %v1635 = vadd.s32 %v1574, 488
      %v1636 = vadd.s32 %v1574, 496
      %v1637 = vadd.s32 %v1574, 504
      %v1638 = vadd.s32 %v1574, 512
      %v1639 = vadd.s32 %v1574, 520
      %v1640 = vadd.s32 %v1574, 528
      %v1641 = vadd.s32 %v1574, 536
      %v1642 = vadd.s32 %v1574, 544
      %v1643 = vadd.s32 %v1574, 552
      %v1644 = vadd.s32 %v1574, 560
      %v1645 = vadd.s32 %v1574, 568
      %v1646 = vadd.s32 %v1574, 576
      %v1647 = vadd.s32 %v1574, 584
      %v1648 = vadd.s32 %v1574, 592
      %v1649 = vadd.s32 %v1574, 600
      %v1650 = vadd.s32 %v1574, 608
      %v1651 = vadd.s32 %v1574, 616
      %v1652 = vadd.s32 %v1574, 624
      %v1653 = vadd.s32 %v1574, 632
      %v1654 = vadd.s32 %v1574, 640
      %v1655 = vadd.s32 %v1574, 648
      %v1656 = vadd.s32 %v1574, 656
      %v1657 = vadd.s32 %v1574, 664
      %v1658 = vadd.s32 %v1574, 672
      %v1659 = vadd.s32 %v1574, 680
      %v1660 = vadd.s32 %v1574, 688
      %v1661 = vadd.s32 %v1574, 696
      %v1662 = vadd.s32 %v1574, 704
      %v1663 = vadd.s32 %v1574, 712
      %v1664 = vadd.s32 %v1574, 720
      %v1665 = vadd.s32 %v1574, 728
      %v1666 = vadd.s32 %v1574, 736
      %v1667 = vadd.s32 %v1574, 744
      %v1668 = vadd.s32 %v1574, 752
      %v1669 = vadd.s32 %v1574, 760
      %v1670 = vadd.s32 %v1574, 768
      %v1671 = vadd.s32 %v1574, 776
      %v1672 = vadd.s32 %v1574, 784
      %v1673 = vadd.s32 %v1574, 792
      %v1674 = vadd.s32 %v1574, 800
      %v1675 = vadd.s32 %v1574, 808
      %v1676 = vadd.s32 %v1574, 816
      %v1677 = vadd.s32 %v1574, 824
      %v1678 = vadd.s32 %v1574, 832
      %v1679 = vadd.s32 %v1574, 840
      %v1680 = vadd.s32 %v1574, 848
      %v1681 = vadd.s32 %v1574, 856
      %v1682 = vadd.s32 %v1574, 864
      %v1683 = vadd.s32 %v1574, 872
      %v1684 = vadd.s32 %v1574, 880
      %v1685 = vadd.s32 %v1574, 888
      %v1686 = vadd.s32 %v1574, 896
      %v1687 = vadd.s32 %v1574, 904
      %v1688 = vadd.s32 %v1574, 912
      %v1689 = vadd.s32 %v1574, 920
      %v1690 = vadd.s32 %v1574, 928
      %v1691 = vadd.s32 %v1574, 936
      %v1692 = vadd.s32 %v1574, 944
      %v1693 = vadd.s32 %v1574, 952
      %v1694 = vadd.s32 %v1574, 960
      %v1695 = vadd.s32 %v1574, 968
      %v1696 = vadd.s32 %v1574, 976
      %v1697 = vadd.s32 %v1574, 984
      %v1698 = vadd.s32 %v1574, 992
      %v1699 = vadd.s32 %v1574, 1000
      %v1700 = vadd.s32 %v1574, 1008
      %v1701 = vadd.s32 %v1574, 1016
      %v1702 = vadd.s32 %v1574, 1024
      %v1703 = vadd.s32 %v1574, 1032
      %v1704 = vadd.s32 %v1574, 1040
      %v1705 = vadd.s32 %v1574, 1048
      %v1706 = vadd.s32 %v1574, 1056
      %v1707 = vadd.s32 %v1574, 1064
      %v1708 = vadd.s32 %v1574, 1072
      %v1709 = vadd.s32 %v1574, 1080
      %v1710 = vadd.s32 %v1574, 1088
      %v1711 = vadd.s32 %v1574, 1096
      %v1712 = vadd.s32 %v1574, 1104
      %v1713 = vadd.s32 %v1574, 1112
      %v1714 = vadd.s32 %v1574, 1120
      %v1715 = vadd.s32 %v1574, 1128
      %v1716 = vadd.s32 %v1574, 1136
      %v1717 = vadd.s32 %v1574, 1144
      %v1718 = vadd.s32 %v1574, 1152
      %v1719 = vadd.s32 %v1574, 1160
      %v1720 = vadd.s32 %v1574, 1168
      %v1721 = vadd.s32 %v1574, 1176
      %v1722 = vadd.s32 %v1574, 1184
      %v1723 = vadd.s32 %v1574, 1192
      %v1724 = vadd.s32 %v1574, 1200
      %v1725 = vadd.s32 %v1574, 1208
      %v1726 = vadd.s32 %v1574, 1216
      %v1727 = vadd.s32 %v1574, 1224
      %v1728 = vadd.s32 %v1574, 1232
      %v1729 = vadd.s32 %v1574, 1240
      %v1730 = vadd.s32 %v1574, 1248
      %v1731 = vadd.s32 %v1574, 1256
      %v1732 = vadd.s32 %v1574, 1264
      %v1733 = vadd.s32 %v1574, 1272
      %v1734 = vadd.s32 %v1574, 1280
      %v1735 = vadd.s32 %v1574, 1288
      %v1736 = vadd.s32 %v1574, 1296
      %v1737 = vadd.s32 %v1574, 1304
      %v1738 = vadd.s32 %v1574, 1312
      %v1739 = vadd.s32 %v1574, 1320
      %v1740 = vadd.s32 %v1574, 1328
      %v1741 = vadd.s32 %v1574, 1336
      %v1742 = vadd.s32 %v1574, 1344
      %v1743 = vadd.s32 %v1574, 1352
      %v1744 = vadd.s32 %v1574, 1360
      %v1745 = vadd.s32 %v1574, 1368
      %v1746 = vadd.s32 %v1574, 1376
      %v1747 = vadd.s32 %v1574, 1384
      %v1748 = vadd.s32 %v1574, 1392
      %v1749 = vadd.s32 %v1574, 1400
      %v1750 = vadd.s32 %v1574, 1408
      %v1751 = vadd.s32 %v1574, 1416
      %v1752 = vadd.s32 %v1574, 1424
      %v1753 = vadd.s32 %v1574, 1432
      %v1754 = vadd.s32 %v1574, 1440
      %v1755 = vadd.s32 %v1574, 1448
      %v1756 = vadd.s32 %v1574, 1456
      %v1757 = vadd.s32 %v1574, 1464
      %v1758 = vadd.s32 %v1574, 1472
      %v1759 = vadd.s32 %v1574, 1480
      %v1760 = vadd.s32 %v1574, 1488
      %v1761 = vadd.s32 %v1574, 1496
      %v1762 = vadd.s32 %v1574, 1504
      %v1763 = vadd.s32 %v1574, 1512
      %v1764 = vadd.s32 %v1574, 1520
      %v1765 = vadd.s32 %v1574, 1528
      %v1766 = vadd.s32 %v1574, 1536
      %v1767 = vadd.s32 %v1574, 1544
      %v1768 = vadd.s32 %v1574, 1552
      %v1769 = vadd.s32 %v1574, 1560
      %v1770 = vadd.s32 %v1574, 1568
      %v1771 = vadd.s32 %v1574, 1576
      %v1772 = vadd.s32 %v1574, 1584
      %v1773 = vadd.s32 %v1574, 1592
      %v1774 = vadd.s32 %v1574, 1600
      %v1775 = vadd.s32 %v1574, 1608
      %v1776 = vadd.s32 %v1574, 1616
      %v1777 = vadd.s32 %v1574, 1624
      %v1778 = vadd.s32 %v1574, 1632
      %v1779 = vadd.s32 %v1574, 1640
      %v1780 = vadd.s32 %v1574, 1648
      %v1781 = vadd.s32 %v1574, 1656
      %v1782 = vadd.s32 %v1574, 1664
      %v1783 = vadd.s32 %v1574, 1672
      %v1784 = vadd.s32 %v1574, 1680
      %v1785 = vadd.s32 %v1574, 1688
      %v1786 = vadd.s32 %v1574, 1696
      %v1787 = vadd.s32 %v1574, 1704
      %v1788 = vadd.s32 %v1574, 1712
      %v1789 = vadd.s32 %v1574, 1720
      %v1790 = vadd.s32 %v1574, 1728
      %v1791 = vadd.s32 %v1574, 1736
      %v1792 = vadd.s32 %v1574, 1744
      %v1793 = vadd.s32 %v1574, 1752
      %v1794 = vadd.s32 %v1574, 1760
      %v1795 = vadd.s32 %v1574, 1768
      %v1796 = vadd.s32 %v1574, 1776
      %v1797 = vadd.s32 %v1574, 1784
      %v1798 = vadd.s32 %v1574, 1792
      %v1799 = vadd.s32 %v1574, 1800
      %v1800 = vadd.s32 %v1574, 1808
      %v1801 = vadd.s32 %v1574, 1816
      %v1802 = vadd.s32 %v1574, 1824
      %v1803 = vadd.s32 %v1574, 1832
      %v1804 = vadd.s32 %v1574, 1840
      %v1805 = vadd.s32 %v1574, 1848
      %v1806 = vadd.s32 %v1574, 1856
      %v1807 = vadd.s32 %v1574, 1864
      %v1808 = vadd.s32 %v1574, 1872
      %v1809 = vadd.s32 %v1574, 1880
      %v1810 = vadd.s32 %v1574, 1888
      %v1811 = vadd.s32 %v1574, 1896
      %v1812 = vadd.s32 %v1574, 1904
      %v1813 = vadd.s32 %v1574, 1912
      %v1814 = vadd.s32 %v1574, 1920
      %v1815 = vadd.s32 %v1574, 1928
      %v1816 = vadd.s32 %v1574, 1936
      %v1817 = vadd.s32 %v1574, 1944
      %v1818 = vadd.s32 %v1574, 1952
      %v1819 = vadd.s32 %v1574, 1960
      %v1820 = vadd.s32 %v1574, 1968
      %v1821 = vadd.s32 %v1574, 1976
      %v1822 = vadd.s32 %v1574, 1984
      %v1823 = vadd.s32 %v1574, 1992
      %v1824 = vadd.s32 %v1574, 2000
      %v1825 = vadd.s32 %v1574, 2008
      %v1826 = vadd.s32 %v1574, 2016
      %v1827 = vadd.s32 %v1574, 2024
      %v1828 = vadd.s32 %v1574, 2032
      %v1829 = vadd.s32 %v1574, 2040
      %v1830 = vadd.s32 %v1574, 2048
      %v1831 = vadd.s32 %v1574, 2056
      %v1832 = vadd.s32 %v1574, 2064
      %v1833 = vadd.s32 %v1574, 2072
      %v1834 = vadd.s32 %v1574, 2080
      %v1835 = vadd.s32 %v1574, 2088
      %v1836 = vadd.s32 %v1574, 2096
      %v1837 = vadd.s32 %v1574, 2104
      %v1838 = vadd.s32 %v1574, 2112
      %v1839 = vadd.s32 %v1574, 2120
      %v1840 = vadd.s32 %v1574, 2128
      %v1841 = vadd.s32 %v1574, 2136
      %v1842 = vadd.s32 %v1574, 2144
      %v1843 = vadd.s32 %v1574, 2152
      %v1844 = vadd.s32 %v1574, 2160
      %v1845 = vadd.s32 %v1574, 2168
      %v1846 = vadd.s32 %v1574, 2176
      %v1847 = vadd.s32 %v1574, 2184
      %v1848 = vadd.s32 %v1574, 2192
      %v1849 = vadd.s32 %v1574, 2200
      %v1850 = vadd.s32 %v1574, 2208
      %v1851 = vadd.s32 %v1574, 2216
      %v1852 = vadd.s32 %v1574, 2224
      %v1853 = vadd.s32 %v1574, 2232
      %v1854 = vadd.s32 %v1574, 2240
      %v1855 = vadd.s32 %v1574, 2248
      %v1856 = vadd.s32 %v1574, 2256
      %v1857 = vadd.s32 %v1574, 2264
      %v1858 = vadd.s32 %v1574, 2272
      %v1859 = vadd.s32 %v1574, 2280
      %v1860 = vadd.s32 %v1574, 2288
      %v1861 = vadd.s32 %v1574, 2296
      %v1862 = vadd.s32 %v1574, 2304
      %v1863 = vadd.s32 %v1574, 2312
      %v1864 = vadd.s32 %v1574, 2320
      %v1865 = vadd.s32 %v1574, 2328
      %v1866 = vadd.s32 %v1574, 2336
      %v1867 = vadd.s32 %v1574, 2344
      %v1868 = vadd.s32 %v1574, 2352
      %v1869 = vadd.s32 %v1574, 2360
      %v1870 = vadd.s32 %v1574, 2368
      %v1871 = vadd.s32 %v1574, 2376
      %v1872 = vadd.s32 %v1574, 2384
      %v1873 = vadd.s32 %v1574, 2392
      %v1874 = vadd.s32 %v1574, 2400
      %vm1875 = vcmp.lt.s32.totalorder %v1574, 2404
      %vm1876 = vcmp.lt.s32.totalorder %v1575, 2404
      %vm1877 = vcmp.lt.s32.totalorder %v1576, 2404
      %vm1878 = vcmp.lt.s32.totalorder %v1577, 2404
      %vm1879 = vcmp.lt.s32.totalorder %v1578, 2404
      %vm1880 = vcmp.lt.s32.totalorder %v1579, 2404
      %vm1881 = vcmp.lt.s32.totalorder %v1580, 2404
      %vm1882 = vcmp.lt.s32.totalorder %v1581, 2404
      %vm1883 = vcmp.lt.s32.totalorder %v1582, 2404
      %vm1884 = vcmp.lt.s32.totalorder %v1583, 2404
      %vm1885 = vcmp.lt.s32.totalorder %v1584, 2404
      %vm1886 = vcmp.lt.s32.totalorder %v1585, 2404
      %vm1887 = vcmp.lt.s32.totalorder %v1586, 2404
      %vm1888 = vcmp.lt.s32.totalorder %v1587, 2404
      %vm1889 = vcmp.lt.s32.totalorder %v1588, 2404
      %vm1890 = vcmp.lt.s32.totalorder %v1589, 2404
      %vm1891 = vcmp.lt.s32.totalorder %v1590, 2404
      %vm1892 = vcmp.lt.s32.totalorder %v1591, 2404
      %vm1893 = vcmp.lt.s32.totalorder %v1592, 2404
      %vm1894 = vcmp.lt.s32.totalorder %v1593, 2404
      %vm1895 = vcmp.lt.s32.totalorder %v1594, 2404
      %vm1896 = vcmp.lt.s32.totalorder %v1595, 2404
      %vm1897 = vcmp.lt.s32.totalorder %v1596, 2404
      %vm1898 = vcmp.lt.s32.totalorder %v1597, 2404
      %vm1899 = vcmp.lt.s32.totalorder %v1598, 2404
      %vm1900 = vcmp.lt.s32.totalorder %v1599, 2404
      %vm1901 = vcmp.lt.s32.totalorder %v1600, 2404
      %vm1902 = vcmp.lt.s32.totalorder %v1601, 2404
      %vm1903 = vcmp.lt.s32.totalorder %v1602, 2404
      %vm1904 = vcmp.lt.s32.totalorder %v1603, 2404
      %vm1905 = vcmp.lt.s32.totalorder %v1604, 2404
      %vm1906 = vcmp.lt.s32.totalorder %v1605, 2404
      %vm1907 = vcmp.lt.s32.totalorder %v1606, 2404
      %vm1908 = vcmp.lt.s32.totalorder %v1607, 2404
      %vm1909 = vcmp.lt.s32.totalorder %v1608, 2404
      %vm1910 = vcmp.lt.s32.totalorder %v1609, 2404
      %vm1911 = vcmp.lt.s32.totalorder %v1610, 2404
      %vm1912 = vcmp.lt.s32.totalorder %v1611, 2404
      %vm1913 = vcmp.lt.s32.totalorder %v1612, 2404
      %vm1914 = vcmp.lt.s32.totalorder %v1613, 2404
      %vm1915 = vcmp.lt.s32.totalorder %v1614, 2404
      %vm1916 = vcmp.lt.s32.totalorder %v1615, 2404
      %vm1917 = vcmp.lt.s32.totalorder %v1616, 2404
      %vm1918 = vcmp.lt.s32.totalorder %v1617, 2404
      %vm1919 = vcmp.lt.s32.totalorder %v1618, 2404
      %vm1920 = vcmp.lt.s32.totalorder %v1619, 2404
      %vm1921 = vcmp.lt.s32.totalorder %v1620, 2404
      %vm1922 = vcmp.lt.s32.totalorder %v1621, 2404
      %vm1923 = vcmp.lt.s32.totalorder %v1622, 2404
      %vm1924 = vcmp.lt.s32.totalorder %v1623, 2404
      %vm1925 = vcmp.lt.s32.totalorder %v1624, 2404
      %vm1926 = vcmp.lt.s32.totalorder %v1625, 2404
      %vm1927 = vcmp.lt.s32.totalorder %v1626, 2404
      %vm1928 = vcmp.lt.s32.totalorder %v1627, 2404
      %vm1929 = vcmp.lt.s32.totalorder %v1628, 2404
      %vm1930 = vcmp.lt.s32.totalorder %v1629, 2404
      %vm1931 = vcmp.lt.s32.totalorder %v1630, 2404
      %vm1932 = vcmp.lt.s32.totalorder %v1631, 2404
      %vm1933 = vcmp.lt.s32.totalorder %v1632, 2404
      %vm1934 = vcmp.lt.s32.totalorder %v1633, 2404
      %vm1935 = vcmp.lt.s32.totalorder %v1634, 2404
      %vm1936 = vcmp.lt.s32.totalorder %v1635, 2404
      %vm1937 = vcmp.lt.s32.totalorder %v1636, 2404
      %vm1938 = vcmp.lt.s32.totalorder %v1637, 2404
      %vm1939 = vcmp.lt.s32.totalorder %v1638, 2404
      %vm1940 = vcmp.lt.s32.totalorder %v1639, 2404
      %vm1941 = vcmp.lt.s32.totalorder %v1640, 2404
      %vm1942 = vcmp.lt.s32.totalorder %v1641, 2404
      %vm1943 = vcmp.lt.s32.totalorder %v1642, 2404
      %vm1944 = vcmp.lt.s32.totalorder %v1643, 2404
      %vm1945 = vcmp.lt.s32.totalorder %v1644, 2404
      %vm1946 = vcmp.lt.s32.totalorder %v1645, 2404
      %vm1947 = vcmp.lt.s32.totalorder %v1646, 2404
      %vm1948 = vcmp.lt.s32.totalorder %v1647, 2404
      %vm1949 = vcmp.lt.s32.totalorder %v1648, 2404
      %vm1950 = vcmp.lt.s32.totalorder %v1649, 2404
      %vm1951 = vcmp.lt.s32.totalorder %v1650, 2404
      %vm1952 = vcmp.lt.s32.totalorder %v1651, 2404
      %vm1953 = vcmp.lt.s32.totalorder %v1652, 2404
      %vm1954 = vcmp.lt.s32.totalorder %v1653, 2404
      %vm1955 = vcmp.lt.s32.totalorder %v1654, 2404
      %vm1956 = vcmp.lt.s32.totalorder %v1655, 2404
      %vm1957 = vcmp.lt.s32.totalorder %v1656, 2404
      %vm1958 = vcmp.lt.s32.totalorder %v1657, 2404
      %vm1959 = vcmp.lt.s32.totalorder %v1658, 2404
      %vm1960 = vcmp.lt.s32.totalorder %v1659, 2404
      %vm1961 = vcmp.lt.s32.totalorder %v1660, 2404
      %vm1962 = vcmp.lt.s32.totalorder %v1661, 2404
      %vm1963 = vcmp.lt.s32.totalorder %v1662, 2404
      %vm1964 = vcmp.lt.s32.totalorder %v1663, 2404
      %vm1965 = vcmp.lt.s32.totalorder %v1664, 2404
      %vm1966 = vcmp.lt.s32.totalorder %v1665, 2404
      %vm1967 = vcmp.lt.s32.totalorder %v1666, 2404
      %vm1968 = vcmp.lt.s32.totalorder %v1667, 2404
      %vm1969 = vcmp.lt.s32.totalorder %v1668, 2404
      %vm1970 = vcmp.lt.s32.totalorder %v1669, 2404
      %vm1971 = vcmp.lt.s32.totalorder %v1670, 2404
      %vm1972 = vcmp.lt.s32.totalorder %v1671, 2404
      %vm1973 = vcmp.lt.s32.totalorder %v1672, 2404
      %vm1974 = vcmp.lt.s32.totalorder %v1673, 2404
      %vm1975 = vcmp.lt.s32.totalorder %v1674, 2404
      %vm1976 = vcmp.lt.s32.totalorder %v1675, 2404
      %vm1977 = vcmp.lt.s32.totalorder %v1676, 2404
      %vm1978 = vcmp.lt.s32.totalorder %v1677, 2404
      %vm1979 = vcmp.lt.s32.totalorder %v1678, 2404
      %vm1980 = vcmp.lt.s32.totalorder %v1679, 2404
      %vm1981 = vcmp.lt.s32.totalorder %v1680, 2404
      %vm1982 = vcmp.lt.s32.totalorder %v1681, 2404
      %vm1983 = vcmp.lt.s32.totalorder %v1682, 2404
      %vm1984 = vcmp.lt.s32.totalorder %v1683, 2404
      %vm1985 = vcmp.lt.s32.totalorder %v1684, 2404
      %vm1986 = vcmp.lt.s32.totalorder %v1685, 2404
      %vm1987 = vcmp.lt.s32.totalorder %v1686, 2404
      %vm1988 = vcmp.lt.s32.totalorder %v1687, 2404
      %vm1989 = vcmp.lt.s32.totalorder %v1688, 2404
      %vm1990 = vcmp.lt.s32.totalorder %v1689, 2404
      %vm1991 = vcmp.lt.s32.totalorder %v1690, 2404
      %vm1992 = vcmp.lt.s32.totalorder %v1691, 2404
      %vm1993 = vcmp.lt.s32.totalorder %v1692, 2404
      %vm1994 = vcmp.lt.s32.totalorder %v1693, 2404
      %vm1995 = vcmp.lt.s32.totalorder %v1694, 2404
      %vm1996 = vcmp.lt.s32.totalorder %v1695, 2404
      %vm1997 = vcmp.lt.s32.totalorder %v1696, 2404
      %vm1998 = vcmp.lt.s32.totalorder %v1697, 2404
      %vm1999 = vcmp.lt.s32.totalorder %v1698, 2404
      %vm2000 = vcmp.lt.s32.totalorder %v1699, 2404
      %vm2001 = vcmp.lt.s32.totalorder %v1700, 2404
      %vm2002 = vcmp.lt.s32.totalorder %v1701, 2404
      %vm2003 = vcmp.lt.s32.totalorder %v1702, 2404
      %vm2004 = vcmp.lt.s32.totalorder %v1703, 2404
      %vm2005 = vcmp.lt.s32.totalorder %v1704, 2404
      %vm2006 = vcmp.lt.s32.totalorder %v1705, 2404
      %vm2007 = vcmp.lt.s32.totalorder %v1706, 2404
      %vm2008 = vcmp.lt.s32.totalorder %v1707, 2404
      %vm2009 = vcmp.lt.s32.totalorder %v1708, 2404
      %vm2010 = vcmp.lt.s32.totalorder %v1709, 2404
      %vm2011 = vcmp.lt.s32.totalorder %v1710, 2404
      %vm2012 = vcmp.lt.s32.totalorder %v1711, 2404
      %vm2013 = vcmp.lt.s32.totalorder %v1712, 2404
      %vm2014 = vcmp.lt.s32.totalorder %v1713, 2404
      %vm2015 = vcmp.lt.s32.totalorder %v1714, 2404
      %vm2016 = vcmp.lt.s32.totalorder %v1715, 2404
      %vm2017 = vcmp.lt.s32.totalorder %v1716, 2404
      %vm2018 = vcmp.lt.s32.totalorder %v1717, 2404
      %vm2019 = vcmp.lt.s32.totalorder %v1718, 2404
      %vm2020 = vcmp.lt.s32.totalorder %v1719, 2404
      %vm2021 = vcmp.lt.s32.totalorder %v1720, 2404
      %vm2022 = vcmp.lt.s32.totalorder %v1721, 2404
      %vm2023 = vcmp.lt.s32.totalorder %v1722, 2404
      %vm2024 = vcmp.lt.s32.totalorder %v1723, 2404
      %vm2025 = vcmp.lt.s32.totalorder %v1724, 2404
      %vm2026 = vcmp.lt.s32.totalorder %v1725, 2404
      %vm2027 = vcmp.lt.s32.totalorder %v1726, 2404
      %vm2028 = vcmp.lt.s32.totalorder %v1727, 2404
      %vm2029 = vcmp.lt.s32.totalorder %v1728, 2404
      %vm2030 = vcmp.lt.s32.totalorder %v1729, 2404
      %vm2031 = vcmp.lt.s32.totalorder %v1730, 2404
      %vm2032 = vcmp.lt.s32.totalorder %v1731, 2404
      %vm2033 = vcmp.lt.s32.totalorder %v1732, 2404
      %vm2034 = vcmp.lt.s32.totalorder %v1733, 2404
      %vm2035 = vcmp.lt.s32.totalorder %v1734, 2404
      %vm2036 = vcmp.lt.s32.totalorder %v1735, 2404
      %vm2037 = vcmp.lt.s32.totalorder %v1736, 2404
      %vm2038 = vcmp.lt.s32.totalorder %v1737, 2404
      %vm2039 = vcmp.lt.s32.totalorder %v1738, 2404
      %vm2040 = vcmp.lt.s32.totalorder %v1739, 2404
      %vm2041 = vcmp.lt.s32.totalorder %v1740, 2404
      %vm2042 = vcmp.lt.s32.totalorder %v1741, 2404
      %vm2043 = vcmp.lt.s32.totalorder %v1742, 2404
      %vm2044 = vcmp.lt.s32.totalorder %v1743, 2404
      %vm2045 = vcmp.lt.s32.totalorder %v1744, 2404
      %vm2046 = vcmp.lt.s32.totalorder %v1745, 2404
      %vm2047 = vcmp.lt.s32.totalorder %v1746, 2404
      %vm2048 = vcmp.lt.s32.totalorder %v1747, 2404
      %vm2049 = vcmp.lt.s32.totalorder %v1748, 2404
      %vm2050 = vcmp.lt.s32.totalorder %v1749, 2404
      %vm2051 = vcmp.lt.s32.totalorder %v1750, 2404
      %vm2052 = vcmp.lt.s32.totalorder %v1751, 2404
      %vm2053 = vcmp.lt.s32.totalorder %v1752, 2404
      %vm2054 = vcmp.lt.s32.totalorder %v1753, 2404
      %vm2055 = vcmp.lt.s32.totalorder %v1754, 2404
      %vm2056 = vcmp.lt.s32.totalorder %v1755, 2404
      %vm2057 = vcmp.lt.s32.totalorder %v1756, 2404
      %vm2058 = vcmp.lt.s32.totalorder %v1757, 2404
      %vm2059 = vcmp.lt.s32.totalorder %v1758, 2404
      %vm2060 = vcmp.lt.s32.totalorder %v1759, 2404
      %vm2061 = vcmp.lt.s32.totalorder %v1760, 2404
      %vm2062 = vcmp.lt.s32.totalorder %v1761, 2404
      %vm2063 = vcmp.lt.s32.totalorder %v1762, 2404
      %vm2064 = vcmp.lt.s32.totalorder %v1763, 2404
      %vm2065 = vcmp.lt.s32.totalorder %v1764, 2404
      %vm2066 = vcmp.lt.s32.totalorder %v1765, 2404
      %vm2067 = vcmp.lt.s32.totalorder %v1766, 2404
      %vm2068 = vcmp.lt.s32.totalorder %v1767, 2404
      %vm2069 = vcmp.lt.s32.totalorder %v1768, 2404
      %vm2070 = vcmp.lt.s32.totalorder %v1769, 2404
      %vm2071 = vcmp.lt.s32.totalorder %v1770, 2404
      %vm2072 = vcmp.lt.s32.totalorder %v1771, 2404
      %vm2073 = vcmp.lt.s32.totalorder %v1772, 2404
      %vm2074 = vcmp.lt.s32.totalorder %v1773, 2404
      %vm2075 = vcmp.lt.s32.totalorder %v1774, 2404
      %vm2076 = vcmp.lt.s32.totalorder %v1775, 2404
      %vm2077 = vcmp.lt.s32.totalorder %v1776, 2404
      %vm2078 = vcmp.lt.s32.totalorder %v1777, 2404
      %vm2079 = vcmp.lt.s32.totalorder %v1778, 2404
      %vm2080 = vcmp.lt.s32.totalorder %v1779, 2404
      %vm2081 = vcmp.lt.s32.totalorder %v1780, 2404
      %vm2082 = vcmp.lt.s32.totalorder %v1781, 2404
      %vm2083 = vcmp.lt.s32.totalorder %v1782, 2404
      %vm2084 = vcmp.lt.s32.totalorder %v1783, 2404
      %vm2085 = vcmp.lt.s32.totalorder %v1784, 2404
      %vm2086 = vcmp.lt.s32.totalorder %v1785, 2404
      %vm2087 = vcmp.lt.s32.totalorder %v1786, 2404
      %vm2088 = vcmp.lt.s32.totalorder %v1787, 2404
      %vm2089 = vcmp.lt.s32.totalorder %v1788, 2404
      %vm2090 = vcmp.lt.s32.totalorder %v1789, 2404
      %vm2091 = vcmp.lt.s32.totalorder %v1790, 2404
      %vm2092 = vcmp.lt.s32.totalorder %v1791, 2404
      %vm2093 = vcmp.lt.s32.totalorder %v1792, 2404
      %vm2094 = vcmp.lt.s32.totalorder %v1793, 2404
      %vm2095 = vcmp.lt.s32.totalorder %v1794, 2404
      %vm2096 = vcmp.lt.s32.totalorder %v1795, 2404
      %vm2097 = vcmp.lt.s32.totalorder %v1796, 2404
      %vm2098 = vcmp.lt.s32.totalorder %v1797, 2404
      %vm2099 = vcmp.lt.s32.totalorder %v1798, 2404
      %vm2100 = vcmp.lt.s32.totalorder %v1799, 2404
      %vm2101 = vcmp.lt.s32.totalorder %v1800, 2404
      %vm2102 = vcmp.lt.s32.totalorder %v1801, 2404
      %vm2103 = vcmp.lt.s32.totalorder %v1802, 2404
      %vm2104 = vcmp.lt.s32.totalorder %v1803, 2404
      %vm2105 = vcmp.lt.s32.totalorder %v1804, 2404
      %vm2106 = vcmp.lt.s32.totalorder %v1805, 2404
      %vm2107 = vcmp.lt.s32.totalorder %v1806, 2404
      %vm2108 = vcmp.lt.s32.totalorder %v1807, 2404
      %vm2109 = vcmp.lt.s32.totalorder %v1808, 2404
      %vm2110 = vcmp.lt.s32.totalorder %v1809, 2404
      %vm2111 = vcmp.lt.s32.totalorder %v1810, 2404
      %vm2112 = vcmp.lt.s32.totalorder %v1811, 2404
      %vm2113 = vcmp.lt.s32.totalorder %v1812, 2404
      %vm2114 = vcmp.lt.s32.totalorder %v1813, 2404
      %vm2115 = vcmp.lt.s32.totalorder %v1814, 2404
      %vm2116 = vcmp.lt.s32.totalorder %v1815, 2404
      %vm2117 = vcmp.lt.s32.totalorder %v1816, 2404
      %vm2118 = vcmp.lt.s32.totalorder %v1817, 2404
      %vm2119 = vcmp.lt.s32.totalorder %v1818, 2404
      %vm2120 = vcmp.lt.s32.totalorder %v1819, 2404
      %vm2121 = vcmp.lt.s32.totalorder %v1820, 2404
      %vm2122 = vcmp.lt.s32.totalorder %v1821, 2404
      %vm2123 = vcmp.lt.s32.totalorder %v1822, 2404
      %vm2124 = vcmp.lt.s32.totalorder %v1823, 2404
      %vm2125 = vcmp.lt.s32.totalorder %v1824, 2404
      %vm2126 = vcmp.lt.s32.totalorder %v1825, 2404
      %vm2127 = vcmp.lt.s32.totalorder %v1826, 2404
      %vm2128 = vcmp.lt.s32.totalorder %v1827, 2404
      %vm2129 = vcmp.lt.s32.totalorder %v1828, 2404
      %vm2130 = vcmp.lt.s32.totalorder %v1829, 2404
      %vm2131 = vcmp.lt.s32.totalorder %v1830, 2404
      %vm2132 = vcmp.lt.s32.totalorder %v1831, 2404
      %vm2133 = vcmp.lt.s32.totalorder %v1832, 2404
      %vm2134 = vcmp.lt.s32.totalorder %v1833, 2404
      %vm2135 = vcmp.lt.s32.totalorder %v1834, 2404
      %vm2136 = vcmp.lt.s32.totalorder %v1835, 2404
      %vm2137 = vcmp.lt.s32.totalorder %v1836, 2404
      %vm2138 = vcmp.lt.s32.totalorder %v1837, 2404
      %vm2139 = vcmp.lt.s32.totalorder %v1838, 2404
      %vm2140 = vcmp.lt.s32.totalorder %v1839, 2404
      %vm2141 = vcmp.lt.s32.totalorder %v1840, 2404
      %vm2142 = vcmp.lt.s32.totalorder %v1841, 2404
      %vm2143 = vcmp.lt.s32.totalorder %v1842, 2404
      %vm2144 = vcmp.lt.s32.totalorder %v1843, 2404
      %vm2145 = vcmp.lt.s32.totalorder %v1844, 2404
      %vm2146 = vcmp.lt.s32.totalorder %v1845, 2404
      %vm2147 = vcmp.lt.s32.totalorder %v1846, 2404
      %vm2148 = vcmp.lt.s32.totalorder %v1847, 2404
      %vm2149 = vcmp.lt.s32.totalorder %v1848, 2404
      %vm2150 = vcmp.lt.s32.totalorder %v1849, 2404
      %vm2151 = vcmp.lt.s32.totalorder %v1850, 2404
      %vm2152 = vcmp.lt.s32.totalorder %v1851, 2404
      %vm2153 = vcmp.lt.s32.totalorder %v1852, 2404
      %vm2154 = vcmp.lt.s32.totalorder %v1853, 2404
      %vm2155 = vcmp.lt.s32.totalorder %v1854, 2404
      %vm2156 = vcmp.lt.s32.totalorder %v1855, 2404
      %vm2157 = vcmp.lt.s32.totalorder %v1856, 2404
      %vm2158 = vcmp.lt.s32.totalorder %v1857, 2404
      %vm2159 = vcmp.lt.s32.totalorder %v1858, 2404
      %vm2160 = vcmp.lt.s32.totalorder %v1859, 2404
      %vm2161 = vcmp.lt.s32.totalorder %v1860, 2404
      %vm2162 = vcmp.lt.s32.totalorder %v1861, 2404
      %vm2163 = vcmp.lt.s32.totalorder %v1862, 2404
      %vm2164 = vcmp.lt.s32.totalorder %v1863, 2404
      %vm2165 = vcmp.lt.s32.totalorder %v1864, 2404
      %vm2166 = vcmp.lt.s32.totalorder %v1865, 2404
      %vm2167 = vcmp.lt.s32.totalorder %v1866, 2404
      %vm2168 = vcmp.lt.s32.totalorder %v1867, 2404
      %vm2169 = vcmp.lt.s32.totalorder %v1868, 2404
      %vm2170 = vcmp.lt.s32.totalorder %v1869, 2404
      %vm2171 = vcmp.lt.s32.totalorder %v1870, 2404
      %vm2172 = vcmp.lt.s32.totalorder %v1871, 2404
      %vm2173 = vcmp.lt.s32.totalorder %v1872, 2404
      %vm2174 = vcmp.lt.s32.totalorder %v1873, 2404
      %vm2175 = vcmp.lt.s32.totalorder %v1874, 2404
      %v2176 = vsel %vm1875, %v660, 0.0
      %v2177 = vsel %vm1876, %v661, 0.0
      %v2178 = vsel %vm1877, %v662, 0.0
      %v2179 = vsel %vm1878, %v663, 0.0
      %v2180 = vsel %vm1879, %v664, 0.0
      %v2181 = vsel %vm1880, %v665, 0.0
      %v2182 = vsel %vm1881, %v666, 0.0
      %v2183 = vsel %vm1882, %v667, 0.0
      %v2184 = vsel %vm1883, %v668, 0.0
      %v2185 = vsel %vm1884, %v669, 0.0
      %v2186 = vsel %vm1885, %v670, 0.0
      %v2187 = vsel %vm1886, %v671, 0.0
      %v2188 = vsel %vm1887, %v672, 0.0
      %v2189 = vsel %vm1888, %v673, 0.0
      %v2190 = vsel %vm1889, %v674, 0.0
      %v2191 = vsel %vm1890, %v675, 0.0
      %v2192 = vsel %vm1891, %v676, 0.0
      %v2193 = vsel %vm1892, %v677, 0.0
      %v2194 = vsel %vm1893, %v678, 0.0
      %v2195 = vsel %vm1894, %v679, 0.0
      %v2196 = vsel %vm1895, %v680, 0.0
      %v2197 = vsel %vm1896, %v681, 0.0
      %v2198 = vsel %vm1897, %v682, 0.0
      %v2199 = vsel %vm1898, %v683, 0.0
      %v2200 = vsel %vm1899, %v684, 0.0
      %v2201 = vsel %vm1900, %v685, 0.0
      %v2202 = vsel %vm1901, %v686, 0.0
      %v2203 = vsel %vm1902, %v687, 0.0
      %v2204 = vsel %vm1903, %v688, 0.0
      %v2205 = vsel %vm1904, %v689, 0.0
      %v2206 = vsel %vm1905, %v690, 0.0
      %v2207 = vsel %vm1906, %v691, 0.0
      %v2208 = vsel %vm1907, %v692, 0.0
      %v2209 = vsel %vm1908, %v693, 0.0
      %v2210 = vsel %vm1909, %v694, 0.0
      %v2211 = vsel %vm1910, %v695, 0.0
      %v2212 = vsel %vm1911, %v696, 0.0
      %v2213 = vsel %vm1912, %v697, 0.0
      %v2214 = vsel %vm1913, %v698, 0.0
      %v2215 = vsel %vm1914, %v699, 0.0
      %v2216 = vsel %vm1915, %v700, 0.0
      %v2217 = vsel %vm1916, %v701, 0.0
      %v2218 = vsel %vm1917, %v702, 0.0
      %v2219 = vsel %vm1918, %v703, 0.0
      %v2220 = vsel %vm1919, %v704, 0.0
      %v2221 = vsel %vm1920, %v705, 0.0
      %v2222 = vsel %vm1921, %v706, 0.0
      %v2223 = vsel %vm1922, %v707, 0.0
      %v2224 = vsel %vm1923, %v708, 0.0
      %v2225 = vsel %vm1924, %v709, 0.0
      %v2226 = vsel %vm1925, %v710, 0.0
      %v2227 = vsel %vm1926, %v711, 0.0
      %v2228 = vsel %vm1927, %v712, 0.0
      %v2229 = vsel %vm1928, %v713, 0.0
      %v2230 = vsel %vm1929, %v714, 0.0
      %v2231 = vsel %vm1930, %v715, 0.0
      %v2232 = vsel %vm1931, %v716, 0.0
      %v2233 = vsel %vm1932, %v717, 0.0
      %v2234 = vsel %vm1933, %v718, 0.0
      %v2235 = vsel %vm1934, %v719, 0.0
      %v2236 = vsel %vm1935, %v720, 0.0
      %v2237 = vsel %vm1936, %v721, 0.0
      %v2238 = vsel %vm1937, %v722, 0.0
      %v2239 = vsel %vm1938, %v723, 0.0
      %v2240 = vsel %vm1939, %v724, 0.0
      %v2241 = vsel %vm1940, %v725, 0.0
      %v2242 = vsel %vm1941, %v726, 0.0
      %v2243 = vsel %vm1942, %v727, 0.0
      %v2244 = vsel %vm1943, %v728, 0.0
      %v2245 = vsel %vm1944, %v729, 0.0
      %v2246 = vsel %vm1945, %v730, 0.0
      %v2247 = vsel %vm1946, %v731, 0.0
      %v2248 = vsel %vm1947, %v732, 0.0
      %v2249 = vsel %vm1948, %v733, 0.0
      %v2250 = vsel %vm1949, %v734, 0.0
      %v2251 = vsel %vm1950, %v735, 0.0
      %v2252 = vsel %vm1951, %v736, 0.0
      %v2253 = vsel %vm1952, %v737, 0.0
      %v2254 = vsel %vm1953, %v738, 0.0
      %v2255 = vsel %vm1954, %v739, 0.0
      %v2256 = vsel %vm1955, %v740, 0.0
      %v2257 = vsel %vm1956, %v741, 0.0
      %v2258 = vsel %vm1957, %v742, 0.0
      %v2259 = vsel %vm1958, %v743, 0.0
      %v2260 = vsel %vm1959, %v744, 0.0
      %v2261 = vsel %vm1960, %v745, 0.0
      %v2262 = vsel %vm1961, %v746, 0.0
      %v2263 = vsel %vm1962, %v747, 0.0
      %v2264 = vsel %vm1963, %v748, 0.0
      %v2265 = vsel %vm1964, %v749, 0.0
      %v2266 = vsel %vm1965, %v750, 0.0
      %v2267 = vsel %vm1966, %v751, 0.0
      %v2268 = vsel %vm1967, %v752, 0.0
      %v2269 = vsel %vm1968, %v753, 0.0
      %v2270 = vsel %vm1969, %v754, 0.0
      %v2271 = vsel %vm1970, %v755, 0.0
      %v2272 = vsel %vm1971, %v756, 0.0
      %v2273 = vsel %vm1972, %v757, 0.0
      %v2274 = vsel %vm1973, %v758, 0.0
      %v2275 = vsel %vm1974, %v759, 0.0
      %v2276 = vsel %vm1975, %v760, 0.0
      %v2277 = vsel %vm1976, %v761, 0.0
      %v2278 = vsel %vm1977, %v762, 0.0
      %v2279 = vsel %vm1978, %v763, 0.0
      %v2280 = vsel %vm1979, %v764, 0.0
      %v2281 = vsel %vm1980, %v765, 0.0
      %v2282 = vsel %vm1981, %v766, 0.0
      %v2283 = vsel %vm1982, %v767, 0.0
      %v2284 = vsel %vm1983, %v768, 0.0
      %v2285 = vsel %vm1984, %v769, 0.0
      %v2286 = vsel %vm1985, %v770, 0.0
      %v2287 = vsel %vm1986, %v771, 0.0
      %v2288 = vsel %vm1987, %v772, 0.0
      %v2289 = vsel %vm1988, %v773, 0.0
      %v2290 = vsel %vm1989, %v774, 0.0
      %v2291 = vsel %vm1990, %v775, 0.0
      %v2292 = vsel %vm1991, %v776, 0.0
      %v2293 = vsel %vm1992, %v777, 0.0
      %v2294 = vsel %vm1993, %v778, 0.0
      %v2295 = vsel %vm1994, %v779, 0.0
      %v2296 = vsel %vm1995, %v780, 0.0
      %v2297 = vsel %vm1996, %v781, 0.0
      %v2298 = vsel %vm1997, %v782, 0.0
      %v2299 = vsel %vm1998, %v783, 0.0
      %v2300 = vsel %vm1999, %v784, 0.0
      %v2301 = vsel %vm2000, %v785, 0.0
      %v2302 = vsel %vm2001, %v786, 0.0
      %v2303 = vsel %vm2002, %v787, 0.0
      %v2304 = vsel %vm2003, %v788, 0.0
      %v2305 = vsel %vm2004, %v789, 0.0
      %v2306 = vsel %vm2005, %v790, 0.0
      %v2307 = vsel %vm2006, %v791, 0.0
      %v2308 = vsel %vm2007, %v792, 0.0
      %v2309 = vsel %vm2008, %v793, 0.0
      %v2310 = vsel %vm2009, %v794, 0.0
      %v2311 = vsel %vm2010, %v795, 0.0
      %v2312 = vsel %vm2011, %v796, 0.0
      %v2313 = vsel %vm2012, %v797, 0.0
      %v2314 = vsel %vm2013, %v798, 0.0
      %v2315 = vsel %vm2014, %v799, 0.0
      %v2316 = vsel %vm2015, %v800, 0.0
      %v2317 = vsel %vm2016, %v801, 0.0
      %v2318 = vsel %vm2017, %v802, 0.0
      %v2319 = vsel %vm2018, %v803, 0.0
      %v2320 = vsel %vm2019, %v804, 0.0
      %v2321 = vsel %vm2020, %v805, 0.0
      %v2322 = vsel %vm2021, %v806, 0.0
      %v2323 = vsel %vm2022, %v807, 0.0
      %v2324 = vsel %vm2023, %v808, 0.0
      %v2325 = vsel %vm2024, %v809, 0.0
      %v2326 = vsel %vm2025, %v810, 0.0
      %v2327 = vsel %vm2026, %v811, 0.0
      %v2328 = vsel %vm2027, %v812, 0.0
      %v2329 = vsel %vm2028, %v813, 0.0
      %v2330 = vsel %vm2029, %v814, 0.0
      %v2331 = vsel %vm2030, %v815, 0.0
      %v2332 = vsel %vm2031, %v816, 0.0
      %v2333 = vsel %vm2032, %v817, 0.0
      %v2334 = vsel %vm2033, %v818, 0.0
      %v2335 = vsel %vm2034, %v819, 0.0
      %v2336 = vsel %vm2035, %v820, 0.0
      %v2337 = vsel %vm2036, %v821, 0.0
      %v2338 = vsel %vm2037, %v822, 0.0
      %v2339 = vsel %vm2038, %v823, 0.0
      %v2340 = vsel %vm2039, %v824, 0.0
      %v2341 = vsel %vm2040, %v825, 0.0
      %v2342 = vsel %vm2041, %v826, 0.0
      %v2343 = vsel %vm2042, %v827, 0.0
      %v2344 = vsel %vm2043, %v828, 0.0
      %v2345 = vsel %vm2044, %v829, 0.0
      %v2346 = vsel %vm2045, %v830, 0.0
      %v2347 = vsel %vm2046, %v831, 0.0
      %v2348 = vsel %vm2047, %v832, 0.0
      %v2349 = vsel %vm2048, %v833, 0.0
      %v2350 = vsel %vm2049, %v834, 0.0
      %v2351 = vsel %vm2050, %v835, 0.0
      %v2352 = vsel %vm2051, %v836, 0.0
      %v2353 = vsel %vm2052, %v837, 0.0
      %v2354 = vsel %vm2053, %v838, 0.0
      %v2355 = vsel %vm2054, %v839, 0.0
      %v2356 = vsel %vm2055, %v840, 0.0
      %v2357 = vsel %vm2056, %v841, 0.0
      %v2358 = vsel %vm2057, %v842, 0.0
      %v2359 = vsel %vm2058, %v843, 0.0
      %v2360 = vsel %vm2059, %v844, 0.0
      %v2361 = vsel %vm2060, %v845, 0.0
      %v2362 = vsel %vm2061, %v846, 0.0
      %v2363 = vsel %vm2062, %v847, 0.0
      %v2364 = vsel %vm2063, %v848, 0.0
      %v2365 = vsel %vm2064, %v849, 0.0
      %v2366 = vsel %vm2065, %v850, 0.0
      %v2367 = vsel %vm2066, %v851, 0.0
      %v2368 = vsel %vm2067, %v852, 0.0
      %v2369 = vsel %vm2068, %v853, 0.0
      %v2370 = vsel %vm2069, %v854, 0.0
      %v2371 = vsel %vm2070, %v855, 0.0
      %v2372 = vsel %vm2071, %v856, 0.0
      %v2373 = vsel %vm2072, %v857, 0.0
      %v2374 = vsel %vm2073, %v858, 0.0
      %v2375 = vsel %vm2074, %v859, 0.0
      %v2376 = vsel %vm2075, %v860, 0.0
      %v2377 = vsel %vm2076, %v861, 0.0
      %v2378 = vsel %vm2077, %v862, 0.0
      %v2379 = vsel %vm2078, %v863, 0.0
      %v2380 = vsel %vm2079, %v864, 0.0
      %v2381 = vsel %vm2080, %v865, 0.0
      %v2382 = vsel %vm2081, %v866, 0.0
      %v2383 = vsel %vm2082, %v867, 0.0
      %v2384 = vsel %vm2083, %v868, 0.0
      %v2385 = vsel %vm2084, %v869, 0.0
      %v2386 = vsel %vm2085, %v870, 0.0
      %v2387 = vsel %vm2086, %v871, 0.0
      %v2388 = vsel %vm2087, %v872, 0.0
      %v2389 = vsel %vm2088, %v873, 0.0
      %v2390 = vsel %vm2089, %v874, 0.0
      %v2391 = vsel %vm2090, %v875, 0.0
      %v2392 = vsel %vm2091, %v876, 0.0
      %v2393 = vsel %vm2092, %v877, 0.0
      %v2394 = vsel %vm2093, %v878, 0.0
      %v2395 = vsel %vm2094, %v879, 0.0
      %v2396 = vsel %vm2095, %v880, 0.0
      %v2397 = vsel %vm2096, %v881, 0.0
      %v2398 = vsel %vm2097, %v882, 0.0
      %v2399 = vsel %vm2098, %v883, 0.0
      %v2400 = vsel %vm2099, %v884, 0.0
      %v2401 = vsel %vm2100, %v885, 0.0
      %v2402 = vsel %vm2101, %v886, 0.0
      %v2403 = vsel %vm2102, %v887, 0.0
      %v2404 = vsel %vm2103, %v888, 0.0
      %v2405 = vsel %vm2104, %v889, 0.0
      %v2406 = vsel %vm2105, %v890, 0.0
      %v2407 = vsel %vm2106, %v891, 0.0
      %v2408 = vsel %vm2107, %v892, 0.0
      %v2409 = vsel %vm2108, %v893, 0.0
      %v2410 = vsel %vm2109, %v894, 0.0
      %v2411 = vsel %vm2110, %v895, 0.0
      %v2412 = vsel %vm2111, %v896, 0.0
      %v2413 = vsel %vm2112, %v897, 0.0
      %v2414 = vsel %vm2113, %v898, 0.0
      %v2415 = vsel %vm2114, %v899, 0.0
      %v2416 = vsel %vm2115, %v900, 0.0
      %v2417 = vsel %vm2116, %v901, 0.0
      %v2418 = vsel %vm2117, %v902, 0.0
      %v2419 = vsel %vm2118, %v903, 0.0
      %v2420 = vsel %vm2119, %v904, 0.0
      %v2421 = vsel %vm2120, %v905, 0.0
      %v2422 = vsel %vm2121, %v906, 0.0
      %v2423 = vsel %vm2122, %v907, 0.0
      %v2424 = vsel %vm2123, %v908, 0.0
      %v2425 = vsel %vm2124, %v909, 0.0
      %v2426 = vsel %vm2125, %v910, 0.0
      %v2427 = vsel %vm2126, %v911, 0.0
      %v2428 = vsel %vm2127, %v912, 0.0
      %v2429 = vsel %vm2128, %v913, 0.0
      %v2430 = vsel %vm2129, %v914, 0.0
      %v2431 = vsel %vm2130, %v915, 0.0
      %v2432 = vsel %vm2131, %v916, 0.0
      %v2433 = vsel %vm2132, %v917, 0.0
      %v2434 = vsel %vm2133, %v918, 0.0
      %v2435 = vsel %vm2134, %v919, 0.0
      %v2436 = vsel %vm2135, %v920, 0.0
      %v2437 = vsel %vm2136, %v921, 0.0
      %v2438 = vsel %vm2137, %v922, 0.0
      %v2439 = vsel %vm2138, %v923, 0.0
      %v2440 = vsel %vm2139, %v924, 0.0
      %v2441 = vsel %vm2140, %v925, 0.0
      %v2442 = vsel %vm2141, %v926, 0.0
      %v2443 = vsel %vm2142, %v927, 0.0
      %v2444 = vsel %vm2143, %v928, 0.0
      %v2445 = vsel %vm2144, %v929, 0.0
      %v2446 = vsel %vm2145, %v930, 0.0
      %v2447 = vsel %vm2146, %v931, 0.0
      %v2448 = vsel %vm2147, %v932, 0.0
      %v2449 = vsel %vm2148, %v933, 0.0
      %v2450 = vsel %vm2149, %v934, 0.0
      %v2451 = vsel %vm2150, %v935, 0.0
      %v2452 = vsel %vm2151, %v936, 0.0
      %v2453 = vsel %vm2152, %v937, 0.0
      %v2454 = vsel %vm2153, %v938, 0.0
      %v2455 = vsel %vm2154, %v939, 0.0
      %v2456 = vsel %vm2155, %v940, 0.0
      %v2457 = vsel %vm2156, %v941, 0.0
      %v2458 = vsel %vm2157, %v942, 0.0
      %v2459 = vsel %vm2158, %v943, 0.0
      %v2460 = vsel %vm2159, %v944, 0.0
      %v2461 = vsel %vm2160, %v945, 0.0
      %v2462 = vsel %vm2161, %v946, 0.0
      %v2463 = vsel %vm2162, %v947, 0.0
      %v2464 = vsel %vm2163, %v948, 0.0
      %v2465 = vsel %vm2164, %v949, 0.0
      %v2466 = vsel %vm2165, %v950, 0.0
      %v2467 = vsel %vm2166, %v951, 0.0
      %v2468 = vsel %vm2167, %v952, 0.0
      %v2469 = vsel %vm2168, %v953, 0.0
      %v2470 = vsel %vm2169, %v954, 0.0
      %v2471 = vsel %vm2170, %v955, 0.0
      %v2472 = vsel %vm2171, %v956, 0.0
      %v2473 = vsel %vm2172, %v957, 0.0
      %v2474 = vsel %vm2173, %v958, 0.0
      %v2475 = vsel %vm2174, %v959, 0.0
      %v2476 = vsel %vm2175, %v960, 0.0
      %v2477 = vmul.f32 %v2176, %v2176
      %v2478 = vmul.f32 %v2177, %v2177
      %v2479 = vmul.f32 %v2178, %v2178
      %v2480 = vmul.f32 %v2179, %v2179
      %v2481 = vmul.f32 %v2180, %v2180
      %v2482 = vmul.f32 %v2181, %v2181
      %v2483 = vmul.f32 %v2182, %v2182
      %v2484 = vmul.f32 %v2183, %v2183
      %v2485 = vmul.f32 %v2184, %v2184
      %v2486 = vmul.f32 %v2185, %v2185
      %v2487 = vmul.f32 %v2186, %v2186
      %v2488 = vmul.f32 %v2187, %v2187
      %v2489 = vmul.f32 %v2188, %v2188
      %v2490 = vmul.f32 %v2189, %v2189
      %v2491 = vmul.f32 %v2190, %v2190
      %v2492 = vmul.f32 %v2191, %v2191
      %v2493 = vmul.f32 %v2192, %v2192
      %v2494 = vmul.f32 %v2193, %v2193
      %v2495 = vmul.f32 %v2194, %v2194
      %v2496 = vmul.f32 %v2195, %v2195
      %v2497 = vmul.f32 %v2196, %v2196
      %v2498 = vmul.f32 %v2197, %v2197
      %v2499 = vmul.f32 %v2198, %v2198
      %v2500 = vmul.f32 %v2199, %v2199
      %v2501 = vmul.f32 %v2200, %v2200
      %v2502 = vmul.f32 %v2201, %v2201
      %v2503 = vmul.f32 %v2202, %v2202
      %v2504 = vmul.f32 %v2203, %v2203
      %v2505 = vmul.f32 %v2204, %v2204
      %v2506 = vmul.f32 %v2205, %v2205
      %v2507 = vmul.f32 %v2206, %v2206
      %v2508 = vmul.f32 %v2207, %v2207
      %v2509 = vmul.f32 %v2208, %v2208
      %v2510 = vmul.f32 %v2209, %v2209
      %v2511 = vmul.f32 %v2210, %v2210
      %v2512 = vmul.f32 %v2211, %v2211
      %v2513 = vmul.f32 %v2212, %v2212
      %v2514 = vmul.f32 %v2213, %v2213
      %v2515 = vmul.f32 %v2214, %v2214
      %v2516 = vmul.f32 %v2215, %v2215
      %v2517 = vmul.f32 %v2216, %v2216
      %v2518 = vmul.f32 %v2217, %v2217
      %v2519 = vmul.f32 %v2218, %v2218
      %v2520 = vmul.f32 %v2219, %v2219
      %v2521 = vmul.f32 %v2220, %v2220
      %v2522 = vmul.f32 %v2221, %v2221
      %v2523 = vmul.f32 %v2222, %v2222
      %v2524 = vmul.f32 %v2223, %v2223
      %v2525 = vmul.f32 %v2224, %v2224
      %v2526 = vmul.f32 %v2225, %v2225
      %v2527 = vmul.f32 %v2226, %v2226
      %v2528 = vmul.f32 %v2227, %v2227
      %v2529 = vmul.f32 %v2228, %v2228
      %v2530 = vmul.f32 %v2229, %v2229
      %v2531 = vmul.f32 %v2230, %v2230
      %v2532 = vmul.f32 %v2231, %v2231
      %v2533 = vmul.f32 %v2232, %v2232
      %v2534 = vmul.f32 %v2233, %v2233
      %v2535 = vmul.f32 %v2234, %v2234
      %v2536 = vmul.f32 %v2235, %v2235
      %v2537 = vmul.f32 %v2236, %v2236
      %v2538 = vmul.f32 %v2237, %v2237
      %v2539 = vmul.f32 %v2238, %v2238
      %v2540 = vmul.f32 %v2239, %v2239
      %v2541 = vmul.f32 %v2240, %v2240
      %v2542 = vmul.f32 %v2241, %v2241
      %v2543 = vmul.f32 %v2242, %v2242
      %v2544 = vmul.f32 %v2243, %v2243
      %v2545 = vmul.f32 %v2244, %v2244
      %v2546 = vmul.f32 %v2245, %v2245
      %v2547 = vmul.f32 %v2246, %v2246
      %v2548 = vmul.f32 %v2247, %v2247
      %v2549 = vmul.f32 %v2248, %v2248
      %v2550 = vmul.f32 %v2249, %v2249
      %v2551 = vmul.f32 %v2250, %v2250
      %v2552 = vmul.f32 %v2251, %v2251
      %v2553 = vmul.f32 %v2252, %v2252
      %v2554 = vmul.f32 %v2253, %v2253
      %v2555 = vmul.f32 %v2254, %v2254
      %v2556 = vmul.f32 %v2255, %v2255
      %v2557 = vmul.f32 %v2256, %v2256
      %v2558 = vmul.f32 %v2257, %v2257
      %v2559 = vmul.f32 %v2258, %v2258
      %v2560 = vmul.f32 %v2259, %v2259
      %v2561 = vmul.f32 %v2260, %v2260
      %v2562 = vmul.f32 %v2261, %v2261
      %v2563 = vmul.f32 %v2262, %v2262
      %v2564 = vmul.f32 %v2263, %v2263
      %v2565 = vmul.f32 %v2264, %v2264
      %v2566 = vmul.f32 %v2265, %v2265
      %v2567 = vmul.f32 %v2266, %v2266
      %v2568 = vmul.f32 %v2267, %v2267
      %v2569 = vmul.f32 %v2268, %v2268
      %v2570 = vmul.f32 %v2269, %v2269
      %v2571 = vmul.f32 %v2270, %v2270
      %v2572 = vmul.f32 %v2271, %v2271
      %v2573 = vmul.f32 %v2272, %v2272
      %v2574 = vmul.f32 %v2273, %v2273
      %v2575 = vmul.f32 %v2274, %v2274
      %v2576 = vmul.f32 %v2275, %v2275
      %v2577 = vmul.f32 %v2276, %v2276
      %v2578 = vmul.f32 %v2277, %v2277
      %v2579 = vmul.f32 %v2278, %v2278
      %v2580 = vmul.f32 %v2279, %v2279
      %v2581 = vmul.f32 %v2280, %v2280
      %v2582 = vmul.f32 %v2281, %v2281
      %v2583 = vmul.f32 %v2282, %v2282
      %v2584 = vmul.f32 %v2283, %v2283
      %v2585 = vmul.f32 %v2284, %v2284
      %v2586 = vmul.f32 %v2285, %v2285
      %v2587 = vmul.f32 %v2286, %v2286
      %v2588 = vmul.f32 %v2287, %v2287
      %v2589 = vmul.f32 %v2288, %v2288
      %v2590 = vmul.f32 %v2289, %v2289
      %v2591 = vmul.f32 %v2290, %v2290
      %v2592 = vmul.f32 %v2291, %v2291
      %v2593 = vmul.f32 %v2292, %v2292
      %v2594 = vmul.f32 %v2293, %v2293
      %v2595 = vmul.f32 %v2294, %v2294
      %v2596 = vmul.f32 %v2295, %v2295
      %v2597 = vmul.f32 %v2296, %v2296
      %v2598 = vmul.f32 %v2297, %v2297
      %v2599 = vmul.f32 %v2298, %v2298
      %v2600 = vmul.f32 %v2299, %v2299
      %v2601 = vmul.f32 %v2300, %v2300
      %v2602 = vmul.f32 %v2301, %v2301
      %v2603 = vmul.f32 %v2302, %v2302
      %v2604 = vmul.f32 %v2303, %v2303
      %v2605 = vmul.f32 %v2304, %v2304
      %v2606 = vmul.f32 %v2305, %v2305
      %v2607 = vmul.f32 %v2306, %v2306
      %v2608 = vmul.f32 %v2307, %v2307
      %v2609 = vmul.f32 %v2308, %v2308
      %v2610 = vmul.f32 %v2309, %v2309
      %v2611 = vmul.f32 %v2310, %v2310
      %v2612 = vmul.f32 %v2311, %v2311
      %v2613 = vmul.f32 %v2312, %v2312
      %v2614 = vmul.f32 %v2313, %v2313
      %v2615 = vmul.f32 %v2314, %v2314
      %v2616 = vmul.f32 %v2315, %v2315
      %v2617 = vmul.f32 %v2316, %v2316
      %v2618 = vmul.f32 %v2317, %v2317
      %v2619 = vmul.f32 %v2318, %v2318
      %v2620 = vmul.f32 %v2319, %v2319
      %v2621 = vmul.f32 %v2320, %v2320
      %v2622 = vmul.f32 %v2321, %v2321
      %v2623 = vmul.f32 %v2322, %v2322
      %v2624 = vmul.f32 %v2323, %v2323
      %v2625 = vmul.f32 %v2324, %v2324
      %v2626 = vmul.f32 %v2325, %v2325
      %v2627 = vmul.f32 %v2326, %v2326
      %v2628 = vmul.f32 %v2327, %v2327
      %v2629 = vmul.f32 %v2328, %v2328
      %v2630 = vmul.f32 %v2329, %v2329
      %v2631 = vmul.f32 %v2330, %v2330
      %v2632 = vmul.f32 %v2331, %v2331
      %v2633 = vmul.f32 %v2332, %v2332
      %v2634 = vmul.f32 %v2333, %v2333
      %v2635 = vmul.f32 %v2334, %v2334
      %v2636 = vmul.f32 %v2335, %v2335
      %v2637 = vmul.f32 %v2336, %v2336
      %v2638 = vmul.f32 %v2337, %v2337
      %v2639 = vmul.f32 %v2338, %v2338
      %v2640 = vmul.f32 %v2339, %v2339
      %v2641 = vmul.f32 %v2340, %v2340
      %v2642 = vmul.f32 %v2341, %v2341
      %v2643 = vmul.f32 %v2342, %v2342
      %v2644 = vmul.f32 %v2343, %v2343
      %v2645 = vmul.f32 %v2344, %v2344
      %v2646 = vmul.f32 %v2345, %v2345
      %v2647 = vmul.f32 %v2346, %v2346
      %v2648 = vmul.f32 %v2347, %v2347
      %v2649 = vmul.f32 %v2348, %v2348
      %v2650 = vmul.f32 %v2349, %v2349
      %v2651 = vmul.f32 %v2350, %v2350
      %v2652 = vmul.f32 %v2351, %v2351
      %v2653 = vmul.f32 %v2352, %v2352
      %v2654 = vmul.f32 %v2353, %v2353
      %v2655 = vmul.f32 %v2354, %v2354
      %v2656 = vmul.f32 %v2355, %v2355
      %v2657 = vmul.f32 %v2356, %v2356
      %v2658 = vmul.f32 %v2357, %v2357
      %v2659 = vmul.f32 %v2358, %v2358
      %v2660 = vmul.f32 %v2359, %v2359
      %v2661 = vmul.f32 %v2360, %v2360
      %v2662 = vmul.f32 %v2361, %v2361
      %v2663 = vmul.f32 %v2362, %v2362
      %v2664 = vmul.f32 %v2363, %v2363
      %v2665 = vmul.f32 %v2364, %v2364
      %v2666 = vmul.f32 %v2365, %v2365
      %v2667 = vmul.f32 %v2366, %v2366
      %v2668 = vmul.f32 %v2367, %v2367
      %v2669 = vmul.f32 %v2368, %v2368
      %v2670 = vmul.f32 %v2369, %v2369
      %v2671 = vmul.f32 %v2370, %v2370
      %v2672 = vmul.f32 %v2371, %v2371
      %v2673 = vmul.f32 %v2372, %v2372
      %v2674 = vmul.f32 %v2373, %v2373
      %v2675 = vmul.f32 %v2374, %v2374
      %v2676 = vmul.f32 %v2375, %v2375
      %v2677 = vmul.f32 %v2376, %v2376
      %v2678 = vmul.f32 %v2377, %v2377
      %v2679 = vmul.f32 %v2378, %v2378
      %v2680 = vmul.f32 %v2379, %v2379
      %v2681 = vmul.f32 %v2380, %v2380
      %v2682 = vmul.f32 %v2381, %v2381
      %v2683 = vmul.f32 %v2382, %v2382
      %v2684 = vmul.f32 %v2383, %v2383
      %v2685 = vmul.f32 %v2384, %v2384
      %v2686 = vmul.f32 %v2385, %v2385
      %v2687 = vmul.f32 %v2386, %v2386
      %v2688 = vmul.f32 %v2387, %v2387
      %v2689 = vmul.f32 %v2388, %v2388
      %v2690 = vmul.f32 %v2389, %v2389
      %v2691 = vmul.f32 %v2390, %v2390
      %v2692 = vmul.f32 %v2391, %v2391
      %v2693 = vmul.f32 %v2392, %v2392
      %v2694 = vmul.f32 %v2393, %v2393
      %v2695 = vmul.f32 %v2394, %v2394
      %v2696 = vmul.f32 %v2395, %v2395
      %v2697 = vmul.f32 %v2396, %v2396
      %v2698 = vmul.f32 %v2397, %v2397
      %v2699 = vmul.f32 %v2398, %v2398
      %v2700 = vmul.f32 %v2399, %v2399
      %v2701 = vmul.f32 %v2400, %v2400
      %v2702 = vmul.f32 %v2401, %v2401
      %v2703 = vmul.f32 %v2402, %v2402
      %v2704 = vmul.f32 %v2403, %v2403
      %v2705 = vmul.f32 %v2404, %v2404
      %v2706 = vmul.f32 %v2405, %v2405
      %v2707 = vmul.f32 %v2406, %v2406
      %v2708 = vmul.f32 %v2407, %v2407
      %v2709 = vmul.f32 %v2408, %v2408
      %v2710 = vmul.f32 %v2409, %v2409
      %v2711 = vmul.f32 %v2410, %v2410
      %v2712 = vmul.f32 %v2411, %v2411
      %v2713 = vmul.f32 %v2412, %v2412
      %v2714 = vmul.f32 %v2413, %v2413
      %v2715 = vmul.f32 %v2414, %v2414
      %v2716 = vmul.f32 %v2415, %v2415
      %v2717 = vmul.f32 %v2416, %v2416
      %v2718 = vmul.f32 %v2417, %v2417
      %v2719 = vmul.f32 %v2418, %v2418
      %v2720 = vmul.f32 %v2419, %v2419
      %v2721 = vmul.f32 %v2420, %v2420
      %v2722 = vmul.f32 %v2421, %v2421
      %v2723 = vmul.f32 %v2422, %v2422
      %v2724 = vmul.f32 %v2423, %v2423
      %v2725 = vmul.f32 %v2424, %v2424
      %v2726 = vmul.f32 %v2425, %v2425
      %v2727 = vmul.f32 %v2426, %v2426
      %v2728 = vmul.f32 %v2427, %v2427
      %v2729 = vmul.f32 %v2428, %v2428
      %v2730 = vmul.f32 %v2429, %v2429
      %v2731 = vmul.f32 %v2430, %v2430
      %v2732 = vmul.f32 %v2431, %v2431
      %v2733 = vmul.f32 %v2432, %v2432
      %v2734 = vmul.f32 %v2433, %v2433
      %v2735 = vmul.f32 %v2434, %v2434
      %v2736 = vmul.f32 %v2435, %v2435
      %v2737 = vmul.f32 %v2436, %v2436
      %v2738 = vmul.f32 %v2437, %v2437
      %v2739 = vmul.f32 %v2438, %v2438
      %v2740 = vmul.f32 %v2439, %v2439
      %v2741 = vmul.f32 %v2440, %v2440
      %v2742 = vmul.f32 %v2441, %v2441
      %v2743 = vmul.f32 %v2442, %v2442
      %v2744 = vmul.f32 %v2443, %v2443
      %v2745 = vmul.f32 %v2444, %v2444
      %v2746 = vmul.f32 %v2445, %v2445
      %v2747 = vmul.f32 %v2446, %v2446
      %v2748 = vmul.f32 %v2447, %v2447
      %v2749 = vmul.f32 %v2448, %v2448
      %v2750 = vmul.f32 %v2449, %v2449
      %v2751 = vmul.f32 %v2450, %v2450
      %v2752 = vmul.f32 %v2451, %v2451
      %v2753 = vmul.f32 %v2452, %v2452
      %v2754 = vmul.f32 %v2453, %v2453
      %v2755 = vmul.f32 %v2454, %v2454
      %v2756 = vmul.f32 %v2455, %v2455
      %v2757 = vmul.f32 %v2456, %v2456
      %v2758 = vmul.f32 %v2457, %v2457
      %v2759 = vmul.f32 %v2458, %v2458
      %v2760 = vmul.f32 %v2459, %v2459
      %v2761 = vmul.f32 %v2460, %v2460
      %v2762 = vmul.f32 %v2461, %v2461
      %v2763 = vmul.f32 %v2462, %v2462
      %v2764 = vmul.f32 %v2463, %v2463
      %v2765 = vmul.f32 %v2464, %v2464
      %v2766 = vmul.f32 %v2465, %v2465
      %v2767 = vmul.f32 %v2466, %v2466
      %v2768 = vmul.f32 %v2467, %v2467
      %v2769 = vmul.f32 %v2468, %v2468
      %v2770 = vmul.f32 %v2469, %v2469
      %v2771 = vmul.f32 %v2470, %v2470
      %v2772 = vmul.f32 %v2471, %v2471
      %v2773 = vmul.f32 %v2472, %v2472
      %v2774 = vmul.f32 %v2473, %v2473
      %v2775 = vmul.f32 %v2474, %v2474
      %v2776 = vmul.f32 %v2475, %v2475
      %v2777 = vmul.f32 %v2476, %v2476
      %v2778 = vld [vmem:[#allocation7] sm:$0xff]
      %v2779 = vadd.f32 %v2477, %v2478
      %v2780 = vadd.f32 %v2779, %v2479
      %v2781 = vadd.f32 %v2780, %v2480
      %v2782 = vadd.f32 %v2781, %v2481
      %v2783 = vadd.f32 %v2782, %v2482
      %v2784 = vadd.f32 %v2783, %v2483
      %v2785 = vadd.f32 %v2784, %v2484
      %v2786 = vadd.f32 %v2785, %v2485
      %v2787 = vadd.f32 %v2786, %v2486
      %v2788 = vadd.f32 %v2787, %v2487
      %v2789 = vadd.f32 %v2788, %v2488
      %v2790 = vadd.f32 %v2789, %v2489
      %v2791 = vadd.f32 %v2790, %v2490
      %v2792 = vadd.f32 %v2791, %v2491
      %v2793 = vadd.f32 %v2792, %v2492
      %v2794 = vadd.f32 %v2793, %v2493
      %v2795 = vadd.f32 %v2794, %v2494
      %v2796 = vadd.f32 %v2795, %v2495
      %v2797 = vadd.f32 %v2796, %v2496
      %v2798 = vadd.f32 %v2797, %v2497
      %v2799 = vadd.f32 %v2798, %v2498
      %v2800 = vadd.f32 %v2799, %v2499
      %v2801 = vadd.f32 %v2800, %v2500
      %v2802 = vadd.f32 %v2801, %v2501
      %v2803 = vadd.f32 %v2802, %v2502
      %v2804 = vadd.f32 %v2803, %v2503
      %v2805 = vadd.f32 %v2804, %v2504
      %v2806 = vadd.f32 %v2805, %v2505
      %v2807 = vadd.f32 %v2806, %v2506
      %v2808 = vadd.f32 %v2807, %v2507
      %v2809 = vadd.f32 %v2808, %v2508
      %v2810 = vadd.f32 %v2809, %v2509
      %v2811 = vadd.f32 %v2810, %v2510
      %v2812 = vadd.f32 %v2811, %v2511
      %v2813 = vadd.f32 %v2812, %v2512
      %v2814 = vadd.f32 %v2813, %v2513
      %v2815 = vadd.f32 %v2814, %v2514
      %v2816 = vadd.f32 %v2815, %v2515
      %v2817 = vadd.f32 %v2816, %v2516
      %v2818 = vadd.f32 %v2817, %v2517
      %v2819 = vadd.f32 %v2818, %v2518
      %v2820 = vadd.f32 %v2819, %v2519
      %v2821 = vadd.f32 %v2820, %v2520
      %v2822 = vadd.f32 %v2821, %v2521
      %v2823 = vadd.f32 %v2822, %v2522
      %v2824 = vadd.f32 %v2823, %v2523
      %v2825 = vadd.f32 %v2824, %v2524
      %v2826 = vadd.f32 %v2825, %v2525
      %v2827 = vadd.f32 %v2826, %v2526
      %v2828 = vadd.f32 %v2827, %v2527
      %v2829 = vadd.f32 %v2828, %v2528
      %v2830 = vadd.f32 %v2829, %v2529
      %v2831 = vadd.f32 %v2830, %v2530
      %v2832 = vadd.f32 %v2831, %v2531
      %v2833 = vadd.f32 %v2832, %v2532
      %v2834 = vadd.f32 %v2833, %v2533
      %v2835 = vadd.f32 %v2834, %v2534
      %v2836 = vadd.f32 %v2835, %v2535
      %v2837 = vadd.f32 %v2836, %v2536
      %v2838 = vadd.f32 %v2837, %v2537
      %v2839 = vadd.f32 %v2838, %v2538
      %v2840 = vadd.f32 %v2839, %v2539
      %v2841 = vadd.f32 %v2840, %v2540
      %v2842 = vadd.f32 %v2841, %v2541
      %v2843 = vadd.f32 %v2842, %v2542
      %v2844 = vadd.f32 %v2843, %v2543
      %v2845 = vadd.f32 %v2844, %v2544
      %v2846 = vadd.f32 %v2845, %v2545
      %v2847 = vadd.f32 %v2846, %v2546
      %v2848 = vadd.f32 %v2847, %v2547
      %v2849 = vadd.f32 %v2848, %v2548
      %v2850 = vadd.f32 %v2849, %v2549
      %v2851 = vadd.f32 %v2850, %v2550
      %v2852 = vadd.f32 %v2851, %v2551
      %v2853 = vadd.f32 %v2852, %v2552
      %v2854 = vadd.f32 %v2853, %v2553
      %v2855 = vadd.f32 %v2854, %v2554
      %v2856 = vadd.f32 %v2855, %v2555
      %v2857 = vadd.f32 %v2856, %v2556
      %v2858 = vadd.f32 %v2857, %v2557
      %v2859 = vadd.f32 %v2858, %v2558
      %v2860 = vadd.f32 %v2859, %v2559
      %v2861 = vadd.f32 %v2860, %v2560
      %v2862 = vadd.f32 %v2861, %v2561
      %v2863 = vadd.f32 %v2862, %v2562
      %v2864 = vadd.f32 %v2863, %v2563
      %v2865 = vadd.f32 %v2864, %v2564
      %v2866 = vadd.f32 %v2865, %v2565
      %v2867 = vadd.f32 %v2866, %v2566
      %v2868 = vadd.f32 %v2867, %v2567
      %v2869 = vadd.f32 %v2868, %v2568
      %v2870 = vadd.f32 %v2869, %v2569
      %v2871 = vadd.f32 %v2870, %v2570
      %v2872 = vadd.f32 %v2871, %v2571
      %v2873 = vadd.f32 %v2872, %v2572
      %v2874 = vadd.f32 %v2873, %v2573
      %v2875 = vadd.f32 %v2874, %v2574
      %v2876 = vadd.f32 %v2875, %v2575
      %v2877 = vadd.f32 %v2876, %v2576
      %v2878 = vadd.f32 %v2877, %v2577
      %v2879 = vadd.f32 %v2878, %v2578
      %v2880 = vadd.f32 %v2879, %v2579
      %v2881 = vadd.f32 %v2880, %v2580
      %v2882 = vadd.f32 %v2881, %v2581
      %v2883 = vadd.f32 %v2882, %v2582
      %v2884 = vadd.f32 %v2883, %v2583
      %v2885 = vadd.f32 %v2884, %v2584
      %v2886 = vadd.f32 %v2885, %v2585
      %v2887 = vadd.f32 %v2886, %v2586
      %v2888 = vadd.f32 %v2887, %v2587
      %v2889 = vadd.f32 %v2888, %v2588
      %v2890 = vadd.f32 %v2889, %v2589
      %v2891 = vadd.f32 %v2890, %v2590
      %v2892 = vadd.f32 %v2891, %v2591
      %v2893 = vadd.f32 %v2892, %v2592
      %v2894 = vadd.f32 %v2893, %v2593
      %v2895 = vadd.f32 %v2894, %v2594
      %v2896 = vadd.f32 %v2895, %v2595
      %v2897 = vadd.f32 %v2896, %v2596
      %v2898 = vadd.f32 %v2897, %v2597
      %v2899 = vadd.f32 %v2898, %v2598
      %v2900 = vadd.f32 %v2899, %v2599
      %v2901 = vadd.f32 %v2900, %v2600
      %v2902 = vadd.f32 %v2901, %v2601
      %v2903 = vadd.f32 %v2902, %v2602
      %v2904 = vadd.f32 %v2903, %v2603
      %v2905 = vadd.f32 %v2904, %v2604
      %v2906 = vadd.f32 %v2905, %v2605
      %v2907 = vadd.f32 %v2906, %v2606
      %v2908 = vadd.f32 %v2907, %v2607
      %v2909 = vadd.f32 %v2908, %v2608
      %v2910 = vadd.f32 %v2909, %v2609
      %v2911 = vadd.f32 %v2910, %v2610
      %v2912 = vadd.f32 %v2911, %v2611
      %v2913 = vadd.f32 %v2912, %v2612
      %v2914 = vadd.f32 %v2913, %v2613
      %v2915 = vadd.f32 %v2914, %v2614
      %v2916 = vadd.f32 %v2915, %v2615
      %v2917 = vadd.f32 %v2916, %v2616
      %v2918 = vadd.f32 %v2917, %v2617
      %v2919 = vadd.f32 %v2918, %v2618
      %v2920 = vadd.f32 %v2919, %v2619
      %v2921 = vadd.f32 %v2920, %v2620
      %v2922 = vadd.f32 %v2921, %v2621
      %v2923 = vadd.f32 %v2922, %v2622
      %v2924 = vadd.f32 %v2923, %v2623
      %v2925 = vadd.f32 %v2924, %v2624
      %v2926 = vadd.f32 %v2925, %v2625
      %v2927 = vadd.f32 %v2926, %v2626
      %v2928 = vadd.f32 %v2927, %v2627
      %v2929 = vadd.f32 %v2928, %v2628
      %v2930 = vadd.f32 %v2929, %v2629
      %v2931 = vadd.f32 %v2930, %v2630
      %v2932 = vadd.f32 %v2931, %v2631
      %v2933 = vadd.f32 %v2932, %v2632
      %v2934 = vadd.f32 %v2933, %v2633
      %v2935 = vadd.f32 %v2934, %v2634
      %v2936 = vadd.f32 %v2935, %v2635
      %v2937 = vadd.f32 %v2936, %v2636
      %v2938 = vadd.f32 %v2937, %v2637
      %v2939 = vadd.f32 %v2938, %v2638
      %v2940 = vadd.f32 %v2939, %v2639
      %v2941 = vadd.f32 %v2940, %v2640
      %v2942 = vadd.f32 %v2941, %v2641
      %v2943 = vadd.f32 %v2942, %v2642
      %v2944 = vadd.f32 %v2943, %v2643
      %v2945 = vadd.f32 %v2944, %v2644
      %v2946 = vadd.f32 %v2945, %v2645
      %v2947 = vadd.f32 %v2946, %v2646
      %v2948 = vadd.f32 %v2947, %v2647
      %v2949 = vadd.f32 %v2948, %v2648
      %v2950 = vadd.f32 %v2949, %v2649
      %v2951 = vadd.f32 %v2950, %v2650
      %v2952 = vadd.f32 %v2951, %v2651
      %v2953 = vadd.f32 %v2952, %v2652
      %v2954 = vadd.f32 %v2953, %v2653
      %v2955 = vadd.f32 %v2954, %v2654
      %v2956 = vadd.f32 %v2955, %v2655
      %v2957 = vadd.f32 %v2956, %v2656
      %v2958 = vadd.f32 %v2957, %v2657
      %v2959 = vadd.f32 %v2958, %v2658
      %v2960 = vadd.f32 %v2959, %v2659
      %v2961 = vadd.f32 %v2960, %v2660
      %v2962 = vadd.f32 %v2961, %v2661
      %v2963 = vadd.f32 %v2962, %v2662
      %v2964 = vadd.f32 %v2963, %v2663
      %v2965 = vadd.f32 %v2964, %v2664
      %v2966 = vadd.f32 %v2965, %v2665
      %v2967 = vadd.f32 %v2966, %v2666
      %v2968 = vadd.f32 %v2967, %v2667
      %v2969 = vadd.f32 %v2968, %v2668
      %v2970 = vadd.f32 %v2969, %v2669
      %v2971 = vadd.f32 %v2970, %v2670
      %v2972 = vadd.f32 %v2971, %v2671
      %v2973 = vadd.f32 %v2972, %v2672
      %v2974 = vadd.f32 %v2973, %v2673
      %v2975 = vadd.f32 %v2974, %v2674
      %v2976 = vadd.f32 %v2975, %v2675
      %v2977 = vadd.f32 %v2976, %v2676
      %v2978 = vadd.f32 %v2977, %v2677
      %v2979 = vadd.f32 %v2978, %v2678
      %v2980 = vadd.f32 %v2979, %v2679
      %v2981 = vadd.f32 %v2980, %v2680
      %v2982 = vadd.f32 %v2981, %v2681
      %v2983 = vadd.f32 %v2982, %v2682
      %v2984 = vadd.f32 %v2983, %v2683
      %v2985 = vadd.f32 %v2984, %v2684
      %v2986 = vadd.f32 %v2985, %v2685
      %v2987 = vadd.f32 %v2986, %v2686
      %v2988 = vadd.f32 %v2987, %v2687
      %v2989 = vadd.f32 %v2988, %v2688
      %v2990 = vadd.f32 %v2989, %v2689
      %v2991 = vadd.f32 %v2990, %v2690
      %v2992 = vadd.f32 %v2991, %v2691
      %v2993 = vadd.f32 %v2992, %v2692
      %v2994 = vadd.f32 %v2993, %v2693
      %v2995 = vadd.f32 %v2994, %v2694
      %v2996 = vadd.f32 %v2995, %v2695
      %v2997 = vadd.f32 %v2996, %v2696
      %v2998 = vadd.f32 %v2997, %v2697
      %v2999 = vadd.f32 %v2998, %v2698
      %v3000 = vadd.f32 %v2999, %v2699
      %v3001 = vadd.f32 %v3000, %v2700
      %v3002 = vadd.f32 %v3001, %v2701
      %v3003 = vadd.f32 %v3002, %v2702
      %v3004 = vadd.f32 %v3003, %v2703
      %v3005 = vadd.f32 %v3004, %v2704
      %v3006 = vadd.f32 %v3005, %v2705
      %v3007 = vadd.f32 %v3006, %v2706
      %v3008 = vadd.f32 %v3007, %v2707
      %v3009 = vadd.f32 %v3008, %v2708
      %v3010 = vadd.f32 %v3009, %v2709
      %v3011 = vadd.f32 %v3010, %v2710
      %v3012 = vadd.f32 %v3011, %v2711
      %v3013 = vadd.f32 %v3012, %v2712
      %v3014 = vadd.f32 %v3013, %v2713
      %v3015 = vadd.f32 %v3014, %v2714
      %v3016 = vadd.f32 %v3015, %v2715
      %v3017 = vadd.f32 %v3016, %v2716
      %v3018 = vadd.f32 %v3017, %v2717
      %v3019 = vadd.f32 %v3018, %v2718
      %v3020 = vadd.f32 %v3019, %v2719
      %v3021 = vadd.f32 %v3020, %v2720
      %v3022 = vadd.f32 %v3021, %v2721
      %v3023 = vadd.f32 %v3022, %v2722
      %v3024 = vadd.f32 %v3023, %v2723
      %v3025 = vadd.f32 %v3024, %v2724
      %v3026 = vadd.f32 %v3025, %v2725
      %v3027 = vadd.f32 %v3026, %v2726
      %v3028 = vadd.f32 %v3027, %v2727
      %v3029 = vadd.f32 %v3028, %v2728
      %v3030 = vadd.f32 %v3029, %v2729
      %v3031 = vadd.f32 %v3030, %v2730
      %v3032 = vadd.f32 %v3031, %v2731
      %v3033 = vadd.f32 %v3032, %v2732
      %v3034 = vadd.f32 %v3033, %v2733
      %v3035 = vadd.f32 %v3034, %v2734
      %v3036 = vadd.f32 %v3035, %v2735
      %v3037 = vadd.f32 %v3036, %v2736
      %v3038 = vadd.f32 %v3037, %v2737
      %v3039 = vadd.f32 %v3038, %v2738
      %v3040 = vadd.f32 %v3039, %v2739
      %v3041 = vadd.f32 %v3040, %v2740
      %v3042 = vadd.f32 %v3041, %v2741
      %v3043 = vadd.f32 %v3042, %v2742
      %v3044 = vadd.f32 %v3043, %v2743
      %v3045 = vadd.f32 %v3044, %v2744
      %v3046 = vadd.f32 %v3045, %v2745
      %v3047 = vadd.f32 %v3046, %v2746
      %v3048 = vadd.f32 %v3047, %v2747
      %v3049 = vadd.f32 %v3048, %v2748
      %v3050 = vadd.f32 %v3049, %v2749
      %v3051 = vadd.f32 %v3050, %v2750
      %v3052 = vadd.f32 %v3051, %v2751
      %v3053 = vadd.f32 %v3052, %v2752
      %v3054 = vadd.f32 %v3053, %v2753
      %v3055 = vadd.f32 %v3054, %v2754
      %v3056 = vadd.f32 %v3055, %v2755
      %v3057 = vadd.f32 %v3056, %v2756
      %v3058 = vadd.f32 %v3057, %v2757
      %v3059 = vadd.f32 %v3058, %v2758
      %v3060 = vadd.f32 %v3059, %v2759
      %v3061 = vadd.f32 %v3060, %v2760
      %v3062 = vadd.f32 %v3061, %v2761
      %v3063 = vadd.f32 %v3062, %v2762
      %v3064 = vadd.f32 %v3063, %v2763
      %v3065 = vadd.f32 %v3064, %v2764
      %v3066 = vadd.f32 %v3065, %v2765
      %v3067 = vadd.f32 %v3066, %v2766
      %v3068 = vadd.f32 %v3067, %v2767
      %v3069 = vadd.f32 %v3068, %v2768
      %v3070 = vadd.f32 %v3069, %v2769
      %v3071 = vadd.f32 %v3070, %v2770
      %v3072 = vadd.f32 %v3071, %v2771
      %v3073 = vadd.f32 %v3072, %v2772
      %v3074 = vadd.f32 %v3073, %v2773
      %v3075 = vadd.f32 %v3074, %v2774
      %v3076 = vadd.f32 %v3075, %v2775
      %v3077 = vadd.f32 %v3076, %v2776
      %v3078 = vadd.f32 %v3077, %v2777
      %v3079 = vadd.f32 %v2778, %v3078
      %3080 = vst [vmem:[#allocation7] sm:$0xff] %v3079
    $region29: #{tpu_custom_call.1} parent=1 // pred_fallthru
      _
    // Predicated region
    $region30: #{tpu_custom_call.1} parent=1 // pred_check
      _
    $region31: #{tpu_custom_call.1} parent=1 // pred_check_branch
      %3082 = sbr.rel (0) target = $region33
    $region32: #{tpu_custom_call.1} parent=1 // pred_region
      %s3084 = ssub.s32 128, 128
      %3085 = vsyncadd [#allocation4], %s3084
      %s3087 = sshll.u32 [#allocation7], 4
      %s3088 = int_to_ptr.vmem [resolvable:$true] %s3087
      %3090 = dma.vmem_to_hbm [thread:$0]  %s3088, 128, %s2, [#allocation4]
    $region33: #{tpu_custom_call.1} parent=1 // pred_fallthru
      _
    // Predicated region
    $region34: #{tpu_custom_call.1} parent=1 // pred_check
      _
    $region35: #{tpu_custom_call.1} parent=1 // pred_check_branch
      %3092 = sbr.rel (0) target = $region37
    $region36: #{tpu_custom_call.1} parent=1 // pred_region
      %3093 = dma.done [#allocation4], 128
    $region37: #{tpu_custom_call.1} parent=1 // pred_fallthru
      _
    %3094 = vsyncpa [#allocation3], 1
    %3095 = vsyncpa [#allocation6], 1
    %3096 = vsyncpa [#allocation4], 1

</llo_original>
